<compile_context>
chip_gen: v5e
topology: v5e:2x2
jax: 0.10.0
libtpu: 0.0.40
codegen_flags: <defaults>
</compile_context>

<pallas_src>
import functools

import jax
import jax.numpy as jnp
from jax.experimental import pallas as pl
from jax.experimental.pallas import tpu as pltpu


# ----------------------------------------------------------------------------
# Pallas kernels
# ----------------------------------------------------------------------------
def _matmul_bias_kernel(x_ref, w_ref, b_ref, o_ref, *, relu):
    # x: [tm, K] bf16, w: [K, N] bf16, b: [1, N] f32  -> o: [tm, N] (o_ref dtype)
    y = jnp.dot(x_ref[...], w_ref[...], preferred_element_type=jnp.float32)
    y = y + b_ref[...]
    if relu:
        y = jnp.maximum(y, 0.0)
    o_ref[...] = y.astype(o_ref.dtype)


def _mlp_head_kernel(x_ref, w1_ref, b1_ref, w2_ref, b2_ref, o_ref):
    # Fused: Linear(K->H) + ReLU + Linear(H->A) + bias, all in one kernel.
    h = jnp.dot(x_ref[...], w1_ref[...], preferred_element_type=jnp.float32)
    h = jnp.maximum(h + b1_ref[...], 0.0)
    y = jnp.dot(h.astype(w2_ref.dtype), w2_ref[...],
                preferred_element_type=jnp.float32)
    o_ref[...] = (y + b2_ref[...]).astype(o_ref.dtype)


# ----------------------------------------------------------------------------
# pallas_call wrappers (bf16 inputs expected, f32 MXU accumulation)
# ----------------------------------------------------------------------------
def _choose_tm(M):
    # <= 256 rows: one full-extent block (legal even if M % 8 != 0, grid=(1,)).
    # Larger: two even blocks -> balanced megacore split on v7x, negligible
    # per-step overhead on single-TC chips (v5e/v6e).  Edge rows are masked.
    if M <= 256:
        return M
    half = (M + 1) // 2
    return ((half + 7) // 8) * 8


def pallas_matmul_bias(x, w, b, *, relu=False, out_dtype=jnp.bfloat16):
    """x: [M, K] bf16, w: [K, N] bf16, b: [1, N] f32  ->  [M, N] out_dtype."""
    M, K = x.shape
    K2, N = w.shape
    assert K == K2 and b.shape == (1, N)
    tm = _choose_tm(M)
    return pl.pallas_call(
        functools.partial(_matmul_bias_kernel, relu=relu),
        out_shape=jax.ShapeDtypeStruct((M, N), out_dtype),
        grid=(pl.cdiv(M, tm),),
        in_specs=[
            pl.BlockSpec((tm, K), lambda i: (i, 0)),
            pl.BlockSpec((K, N), lambda i: (0, 0)),
            pl.BlockSpec((1, N), lambda i: (0, 0)),
        ],
        out_specs=pl.BlockSpec((tm, N), lambda i: (i, 0)),
        compiler_params=pltpu.CompilerParams(
            dimension_semantics=("parallel",)),
    )(x, w, b)


def pallas_mlp_head(x, w1, b1, w2, b2):
    """Fused (Linear+ReLU+Linear): x [B,K] bf16 -> [B,A] f32, one Pallas kernel."""
    B, K = x.shape
    H = w1.shape[1]
    A = w2.shape[1]
    tm = _choose_tm(B)
    return pl.pallas_call(
        _mlp_head_kernel,
        out_shape=jax.ShapeDtypeStruct((B, A), jnp.float32),
        grid=(pl.cdiv(B, tm),),
        in_specs=[
            pl.BlockSpec((tm, K), lambda i: (i, 0)),
            pl.BlockSpec((K, H), lambda i: (0, 0)),
            pl.BlockSpec((1, H), lambda i: (0, 0)),
            pl.BlockSpec((H, A), lambda i: (0, 0)),
            pl.BlockSpec((1, A), lambda i: (0, 0)),
        ],
        out_specs=pl.BlockSpec((tm, A), lambda i: (i, 0)),
        compiler_params=pltpu.CompilerParams(
            dimension_semantics=("parallel",)),
    )(x, w1, b1, w2, b2)


# ----------------------------------------------------------------------------
# NHWC im2col glue (plain JAX, bf16; data movement only, compute in Pallas)
# ----------------------------------------------------------------------------
def im2col_nhwc(x, k, s):
    """x: [N, H, W, C] -> ([N*Ho*Wo, k*k*C], Ho, Wo), patch order (kh, kw, C)."""
    N, H, W, C = x.shape
    Ho = (H - k) // s + 1
    Wo = (W - k) // s + 1
    row_idx = jnp.arange(Ho)[:, None] * s + jnp.arange(k)[None, :]   # [Ho, k]
    col_idx = jnp.arange(Wo)[:, None] * s + jnp.arange(k)[None, :]   # [Wo, k]
    xr = x[:, row_idx, :, :]              # [N, Ho, k, W, C]
    patches = xr[:, :, :, col_idx, :]     # [N, Ho, k, Wo, k, C]
    patches = patches.transpose(0, 1, 3, 2, 4, 5)   # [N, Ho, Wo, kh, kw, C]
    return patches.reshape(N * Ho * Wo, k * k * C), Ho, Wo


def conv2d_nhwc_pallas(x_nhwc, w_flat, b, *, k, stride):
    """NHWC conv via bf16 im2col + Pallas matmul+bias+ReLU (bf16 output).

    w_flat: pre-flattened (kh*kw*Cin, Cout) bf16 (prepared once at init).
    """
    N = x_nhwc.shape[0]
    cout = w_flat.shape[1]
    patches, Ho, Wo = im2col_nhwc(x_nhwc, k, stride)        # [M, k*k*Cin] bf16
    y = pallas_matmul_bias(patches, w_flat, b, relu=True,
                           out_dtype=jnp.bfloat16)          # [M, Cout] bf16
    return y.reshape(N, Ho, Wo, cout)                       # stay NHWC / bf16


# ----------------------------------------------------------------------------
# Parameter init (torch-style f32 layouts) + one-time kernel-layout prep
# ----------------------------------------------------------------------------
def init_params(key, outputs):
    keys = jax.random.split(key, 8)

    def he(k, shape, fan_in):
        return jax.random.normal(k, shape, jnp.float32) * jnp.sqrt(2.0 / fan_in)

    def bias(k, n):
        return jax.random.uniform(k, (n,), jnp.float32, -0.05, 0.05)

    return {
        "conv1_w": he(keys[0], (16, 4, 8, 8), 4 * 8 * 8),        # OIHW
        "conv1_b": bias(keys[1], 16),
        "conv2_w": he(keys[2], (32, 16, 5, 5), 16 * 5 * 5),      # OIHW
        "conv2_b": bias(keys[3], 32),
        "linear_w": he(keys[4], (3328, 256), 3328),   # rows in torch (C,H,W) order
        "linear_b": bias(keys[5], 256),
        "out_w": he(keys[6], (256, outputs), 256),
        "out_b": bias(keys[7], outputs),
    }


def prepare_params(params, conv_out_hw=(8, 13)):
    """One-time (outside the jitted forward) weight layout prep + bf16 cast."""
    Ho, Wo = conv_out_hw

    def conv_flat(w_oihw):
        cout, cin, k, _ = w_oihw.shape
        # OIHW -> (kh, kw, Cin, Cout) flat rows, matching the im2col patch order.
        return (jnp.transpose(w_oihw, (2, 3, 1, 0))
                .reshape(k * k * cin, cout).astype(jnp.bfloat16))

    c2 = params["conv2_w"].shape[0]                      # conv2 out channels (32)
    # Permute fc1 rows from torch (C,H,W) order into NHWC (H,W,C) order so the
    # forward's NHWC flatten needs no activation transpose.
    fc1_w = (params["linear_w"]
             .reshape(c2, Ho, Wo, -1)
             .transpose(1, 2, 0, 3)
             .reshape(Ho * Wo * c2, -1)
             .astype(jnp.bfloat16))

    return {
        "c1_w": conv_flat(params["conv1_w"]),
        "c1_b": params["conv1_b"].reshape(1, -1).astype(jnp.float32),
        "c2_w": conv_flat(params["conv2_w"]),
        "c2_b": params["conv2_b"].reshape(1, -1).astype(jnp.float32),
        "fc1_w": fc1_w,
        "fc1_b": params["linear_b"].reshape(1, -1).astype(jnp.float32),
        "out_w": params["out_w"].astype(jnp.bfloat16),
        "out_b": params["out_b"].reshape(1, -1).astype(jnp.float32),
    }


# ----------------------------------------------------------------------------
# Forward pass (expects prepared/bf16 params)
# ----------------------------------------------------------------------------
def dqn_forward(kp, x):
    # x: [N, 4, H, W] NCHW f32 (torch layout).  One transpose + bf16 cast, then
    # everything stays NHWC / bf16 between layers.
    x = jnp.transpose(x, (0, 2, 3, 1)).astype(jnp.bfloat16)
    h = conv2d_nhwc_pallas(x, kp["c1_w"], kp["c1_b"], k=8, stride=4)
    h = conv2d_nhwc_pallas(h, kp["c2_w"], kp["c2_b"], k=5, stride=2)
    # TODO(synk): torch forward() calls self.conv3 which is never defined in
    # __init__ (AttributeError); it is intentionally omitted here.

    n = h.shape[0]
    flat = h.reshape(n, -1)   # NHWC flatten; fc1_w rows pre-permuted to match.
    # Fused Linear(3328->256)+ReLU+Linear(256->outputs) in one Pallas kernel.
    return pallas_mlp_head(flat, kp["fc1_w"], kp["fc1_b"],
                           kp["out_w"], kp["out_b"])


# ----------------------------------------------------------------------------
# Pure-JAX reference (torch-equivalent, NCHW / CHW flatten, f32 HIGHEST)
# ----------------------------------------------------------------------------
def dqn_reference(params, x):
    hp = jax.lax.Precision.HIGHEST

    def conv(h, w, b, s):
        y = jax.lax.conv_general_dilated(
            h, w, window_strides=(s, s), padding="VALID",
            dimension_numbers=("NCHW", "OIHW", "NCHW"), precision=hp)
        return jax.nn.relu(y + b[None, :, None, None])

    h = conv(x, params["conv1_w"], params["conv1_b"], 4)
    h = conv(h, params["conv2_w"], params["conv2_b"], 2)
    flat = h.reshape(h.shape[0], -1)   # torch Flatten: (C, H, W)
    h = jax.nn.relu(jnp.dot(flat, params["linear_w"], precision=hp)
                    + params["linear_b"])
    return jnp.dot(h, params["out_w"], precision=hp) + params["out_b"]


if __name__ == "__main__":
    OUTPUTS = 6
    key = jax.random.PRNGKey(0)
    k_param, k_x = jax.random.split(key)

    params = init_params(k_param, OUTPUTS)        # torch-style f32 params
    kparams = prepare_params(params)              # one-time layout prep + bf16
    # Linear(3328, 256) forces conv2 output 32*8*13  ->  84x120 input frames.
    x = jax.random.normal(k_x, (2, 4, 84, 120), jnp.float32)

    fwd = jax.jit(dqn_forward)
    out = jax.block_until_ready(fwd(kparams, x))
    assert out.shape == (2, OUTPUTS) and out.dtype == jnp.float32

    ref = dqn_reference(params, x)
    # Tolerance accounts for bf16 MXU inputs (f32 accumulation); layout bugs
    # would produce O(1) errors and still be caught.
    assert jnp.allclose(out, ref, rtol=4e-2, atol=4e-2), (
        f"max abs diff {jnp.max(jnp.abs(out - ref))}")

    print("KERNEL_OK")
</pallas_src>

<mosaic_0001>
module attributes {stable_mosaic.version = 11 : i64} {
  func.func @_matmul_bias_kernel(%arg0: i32, %arg1: memref<584x256xbf16, #tpu.memory_space<vmem>>, %arg2: memref<256x16xbf16, #tpu.memory_space<vmem>>, %arg3: memref<1x16xf32, #tpu.memory_space<vmem>>, %arg4: memref<584x16xbf16, #tpu.memory_space<vmem>>) attributes {dimension_semantics = [#tpu.dimension_semantics<parallel>], iteration_bounds = array<i64: 2>, scalar_prefetch = 0 : i64, scratch_operands = 0 : i64, tpu.core_type = #tpu.core_type<tc>, window_params = [{transform_indices = @transform_0, window_bounds = array<i64: 584, 256>}, {pipeline_mode = #tpu.pipeline_mode<synchronous>, transform_indices = @transform_1, window_bounds = array<i64: 256, 16>}, {pipeline_mode = #tpu.pipeline_mode<synchronous>, transform_indices = @transform_2, window_bounds = array<i64: 1, 16>}, {transform_indices = @transform_3, window_bounds = array<i64: 584, 16>}]} {
    %c0 = arith.constant 0 : index
    %c0_0 = arith.constant 0 : index
    %0 = vector.load %arg1[%c0, %c0_0] : memref<584x256xbf16, #tpu.memory_space<vmem>>, vector<584x256xbf16>
    %c0_1 = arith.constant 0 : index
    %c0_2 = arith.constant 0 : index
    %1 = vector.load %arg2[%c0_1, %c0_2] : memref<256x16xbf16, #tpu.memory_space<vmem>>, vector<256x16xbf16>
    %cst = arith.constant dense<0.000000e+00> : vector<584x16xf32>
    %2 = tpu.matmul %0, %1, %cst {dimension_numbers = #tpu.dot_dimension_numbers<[1], [0], [0], [1], [0, 0, 1, 1], [], []>} : vector<584x256xbf16>, vector<256x16xbf16>, vector<584x16xf32> -> vector<584x16xf32>
    %c0_3 = arith.constant 0 : index
    %c0_4 = arith.constant 0 : index
    %3 = vector.load %arg3[%c0_3, %c0_4] : memref<1x16xf32, #tpu.memory_space<vmem>>, vector<1x16xf32>
    %4 = vector.broadcast %3 : vector<1x16xf32> to vector<584x16xf32>
    %5 = arith.addf %2, %4 : vector<584x16xf32>
    %cst_5 = arith.constant 0.000000e+00 : f32
    %6 = vector.broadcast %cst_5 : f32 to vector<584x16xf32>
    %7 = arith.maximumf %5, %6 : vector<584x16xf32>
    %8 = arith.truncf %7 : vector<584x16xf32> to vector<584x16xbf16>
    %c0_6 = arith.constant 0 : index
    %c0_7 = arith.constant 0 : index
    %9 = vector.load %arg4[%c0_6, %c0_7] : memref<584x16xbf16, #tpu.memory_space<vmem>>, vector<584x16xbf16>
    tpu.vector_store %arg4[%c0_6, %c0_7], %8 {strides = array<i32>} : memref<584x16xbf16, #tpu.memory_space<vmem>>, vector<584x16xbf16>,
    return
  }
  func.func @transform_0(%arg0: i32) -> (i32, i32) {
    %c0_i32 = arith.constant 0 : i32
    %c0_i32_0 = arith.constant 0 : i32
    return %arg0, %c0_i32 : i32, i32
  }
  func.func @transform_1(%arg0: i32) -> (i32, i32) {
    %c0_i32 = arith.constant 0 : i32
    %c0_i32_0 = arith.constant 0 : i32
    %c0_i32_1 = arith.constant 0 : i32
    return %c0_i32, %c0_i32_0 : i32, i32
  }
  func.func @transform_2(%arg0: i32) -> (i32, i32) {
    %c0_i32 = arith.constant 0 : i32
    %c0_i32_0 = arith.constant 0 : i32
    %c0_i32_1 = arith.constant 0 : i32
    return %c0_i32, %c0_i32_0 : i32, i32
  }
  func.func @transform_3(%arg0: i32) -> (i32, i32) {
    %c0_i32 = arith.constant 0 : i32
    %c0_i32_0 = arith.constant 0 : i32
    return %arg0, %c0_i32 : i32, i32
  }
}

module attributes {stable_mosaic.version = 11 : i64} {
  func.func @_matmul_bias_kernel(%arg0: i32, %arg1: memref<208x400xbf16, #tpu.memory_space<vmem>>, %arg2: memref<400x32xbf16, #tpu.memory_space<vmem>>, %arg3: memref<1x32xf32, #tpu.memory_space<vmem>>, %arg4: memref<208x32xbf16, #tpu.memory_space<vmem>>) attributes {dimension_semantics = [#tpu.dimension_semantics<parallel>], iteration_bounds = array<i64: 1>, scalar_prefetch = 0 : i64, scratch_operands = 0 : i64, tpu.core_type = #tpu.core_type<tc>, window_params = [{transform_indices = @transform_0, window_bounds = array<i64: 208, 400>}, {pipeline_mode = #tpu.pipeline_mode<synchronous>, transform_indices = @transform_1, window_bounds = array<i64: 400, 32>}, {pipeline_mode = #tpu.pipeline_mode<synchronous>, transform_indices = @transform_2, window_bounds = array<i64: 1, 32>}, {transform_indices = @transform_3, window_bounds = array<i64: 208, 32>}]} {
    %c0 = arith.constant 0 : index
    %c0_0 = arith.constant 0 : index
    %0 = vector.load %arg1[%c0, %c0_0] : memref<208x400xbf16, #tpu.memory_space<vmem>>, vector<208x400xbf16>
    %c0_1 = arith.constant 0 : index
    %c0_2 = arith.constant 0 : index
    %1 = vector.load %arg2[%c0_1, %c0_2] : memref<400x32xbf16, #tpu.memory_space<vmem>>, vector<400x32xbf16>
    %cst = arith.constant dense<0.000000e+00> : vector<208x32xf32>
    %2 = tpu.matmul %0, %1, %cst {dimension_numbers = #tpu.dot_dimension_numbers<[1], [0], [0], [1], [0, 0, 1, 1], [], []>} : vector<208x400xbf16>, vector<400x32xbf16>, vector<208x32xf32> -> vector<208x32xf32>
    %c0_3 = arith.constant 0 : index
    %c0_4 = arith.constant 0 : index
    %3 = vector.load %arg3[%c0_3, %c0_4] : memref<1x32xf32, #tpu.memory_space<vmem>>, vector<1x32xf32>
    %4 = vector.broadcast %3 : vector<1x32xf32> to vector<208x32xf32>
    %5 = arith.addf %2, %4 : vector<208x32xf32>
    %cst_5 = arith.constant 0.000000e+00 : f32
    %6 = vector.broadcast %cst_5 : f32 to vector<208x32xf32>
    %7 = arith.maximumf %5, %6 : vector<208x32xf32>
    %8 = arith.truncf %7 : vector<208x32xf32> to vector<208x32xbf16>
    %c0_6 = arith.constant 0 : index
    %c0_7 = arith.constant 0 : index
    %9 = vector.load %arg4[%c0_6, %c0_7] : memref<208x32xbf16, #tpu.memory_space<vmem>>, vector<208x32xbf16>
    tpu.vector_store %arg4[%c0_6, %c0_7], %8 {strides = array<i32>} : memref<208x32xbf16, #tpu.memory_space<vmem>>, vector<208x32xbf16>,
    return
  }
  func.func @transform_0(%arg0: i32) -> (i32, i32) {
    %c0_i32 = arith.constant 0 : i32
    %c0_i32_0 = arith.constant 0 : i32
    return %arg0, %c0_i32 : i32, i32
  }
  func.func @transform_1(%arg0: i32) -> (i32, i32) {
    %c0_i32 = arith.constant 0 : i32
    %c0_i32_0 = arith.constant 0 : i32
    %c0_i32_1 = arith.constant 0 : i32
    return %c0_i32, %c0_i32_0 : i32, i32
  }
  func.func @transform_2(%arg0: i32) -> (i32, i32) {
    %c0_i32 = arith.constant 0 : i32
    %c0_i32_0 = arith.constant 0 : i32
    %c0_i32_1 = arith.constant 0 : i32
    return %c0_i32, %c0_i32_0 : i32, i32
  }
  func.func @transform_3(%arg0: i32) -> (i32, i32) {
    %c0_i32 = arith.constant 0 : i32
    %c0_i32_0 = arith.constant 0 : i32
    return %arg0, %c0_i32 : i32, i32
  }
}

module attributes {stable_mosaic.version = 11 : i64} {
  func.func @_mlp_head_kernel(%arg0: i32, %arg1: memref<2x3328xbf16, #tpu.memory_space<vmem>>, %arg2: memref<3328x256xbf16, #tpu.memory_space<vmem>>, %arg3: memref<1x256xf32, #tpu.memory_space<vmem>>, %arg4: memref<256x6xbf16, #tpu.memory_space<vmem>>, %arg5: memref<1x6xf32, #tpu.memory_space<vmem>>, %arg6: memref<2x6xf32, #tpu.memory_space<vmem>>) attributes {dimension_semantics = [#tpu.dimension_semantics<parallel>], iteration_bounds = array<i64: 1>, scalar_prefetch = 0 : i64, scratch_operands = 0 : i64, tpu.core_type = #tpu.core_type<tc>, window_params = [{transform_indices = @transform_0, window_bounds = array<i64: 2, 3328>}, {pipeline_mode = #tpu.pipeline_mode<synchronous>, transform_indices = @transform_1, window_bounds = array<i64: 3328, 256>}, {pipeline_mode = #tpu.pipeline_mode<synchronous>, transform_indices = @transform_2, window_bounds = array<i64: 1, 256>}, {pipeline_mode = #tpu.pipeline_mode<synchronous>, transform_indices = @transform_3, window_bounds = array<i64: 256, 6>}, {pipeline_mode = #tpu.pipeline_mode<synchronous>, transform_indices = @transform_4, window_bounds = array<i64: 1, 6>}, {transform_indices = @transform_5, window_bounds = array<i64: 2, 6>}]} {
    %c0 = arith.constant 0 : index
    %c0_0 = arith.constant 0 : index
    %0 = vector.load %arg1[%c0, %c0_0] : memref<2x3328xbf16, #tpu.memory_space<vmem>>, vector<2x3328xbf16>
    %c0_1 = arith.constant 0 : index
    %c0_2 = arith.constant 0 : index
    %1 = vector.load %arg2[%c0_1, %c0_2] : memref<3328x256xbf16, #tpu.memory_space<vmem>>, vector<3328x256xbf16>
    %cst = arith.constant dense<0.000000e+00> : vector<2x256xf32>
    %2 = tpu.matmul %0, %1, %cst {dimension_numbers = #tpu.dot_dimension_numbers<[1], [0], [0], [1], [0, 0, 1, 1], [], []>} : vector<2x3328xbf16>, vector<3328x256xbf16>, vector<2x256xf32> -> vector<2x256xf32>
    %c0_3 = arith.constant 0 : index
    %c0_4 = arith.constant 0 : index
    %3 = vector.load %arg3[%c0_3, %c0_4] : memref<1x256xf32, #tpu.memory_space<vmem>>, vector<1x256xf32>
    %4 = vector.broadcast %3 : vector<1x256xf32> to vector<2x256xf32>
    %5 = arith.addf %2, %4 : vector<2x256xf32>
    %cst_5 = arith.constant 0.000000e+00 : f32
    %6 = vector.broadcast %cst_5 : f32 to vector<2x256xf32>
    %7 = arith.maximumf %5, %6 : vector<2x256xf32>
    %8 = arith.truncf %7 : vector<2x256xf32> to vector<2x256xbf16>
    %c0_6 = arith.constant 0 : index
    %c0_7 = arith.constant 0 : index
    %9 = vector.load %arg4[%c0_6, %c0_7] : memref<256x6xbf16, #tpu.memory_space<vmem>>, vector<256x6xbf16>
    %cst_8 = arith.constant dense<0.000000e+00> : vector<2x6xf32>
    %10 = tpu.matmul %8, %9, %cst_8 {dimension_numbers = #tpu.dot_dimension_numbers<[1], [0], [0], [1], [0, 0, 1, 1], [], []>} : vector<2x256xbf16>, vector<256x6xbf16>, vector<2x6xf32> -> vector<2x6xf32>
    %c0_9 = arith.constant 0 : index
    %c0_10 = arith.constant 0 : index
    %11 = vector.load %arg5[%c0_9, %c0_10] : memref<1x6xf32, #tpu.memory_space<vmem>>, vector<1x6xf32>
    %12 = vector.broadcast %11 : vector<1x6xf32> to vector<2x6xf32>
    %13 = arith.addf %10, %12 : vector<2x6xf32>
    %c0_11 = arith.constant 0 : index
    %c0_12 = arith.constant 0 : index
    %14 = vector.load %arg6[%c0_11, %c0_12] : memref<2x6xf32, #tpu.memory_space<vmem>>, vector<2x6xf32>
    tpu.vector_store %arg6[%c0_11, %c0_12], %13 {strides = array<i32>} : memref<2x6xf32, #tpu.memory_space<vmem>>, vector<2x6xf32>,
    return
  }
  func.func @transform_0(%arg0: i32) -> (i32, i32) {
    %c0_i32 = arith.constant 0 : i32
    %c0_i32_0 = arith.constant 0 : i32
    return %arg0, %c0_i32 : i32, i32
  }
  func.func @transform_1(%arg0: i32) -> (i32, i32) {
    %c0_i32 = arith.constant 0 : i32
    %c0_i32_0 = arith.constant 0 : i32
    %c0_i32_1 = arith.constant 0 : i32
    return %c0_i32, %c0_i32_0 : i32, i32
  }
  func.func @transform_2(%arg0: i32) -> (i32, i32) {
    %c0_i32 = arith.constant 0 : i32
    %c0_i32_0 = arith.constant 0 : i32
    %c0_i32_1 = arith.constant 0 : i32
    return %c0_i32, %c0_i32_0 : i32, i32
  }
  func.func @transform_3(%arg0: i32) -> (i32, i32) {
    %c0_i32 = arith.constant 0 : i32
    %c0_i32_0 = arith.constant 0 : i32
    %c0_i32_1 = arith.constant 0 : i32
    return %c0_i32, %c0_i32_0 : i32, i32
  }
  func.func @transform_4(%arg0: i32) -> (i32, i32) {
    %c0_i32 = arith.constant 0 : i32
    %c0_i32_0 = arith.constant 0 : i32
    %c0_i32_1 = arith.constant 0 : i32
    return %c0_i32, %c0_i32_0 : i32, i32
  }
  func.func @transform_5(%arg0: i32) -> (i32, i32) {
    %c0_i32 = arith.constant 0 : i32
    %c0_i32_0 = arith.constant 0 : i32
    return %arg0, %c0_i32 : i32, i32
  }
}

</mosaic_0001>

<llo_original>
// kernel: dqn_forward.3
$region0: #{dqn_forward.3}
  #allocation0 [shape = 'u32[]', space=smem, size = 0x4, offset = 0x4, fixed_abs, tag = 'smem constant byte address 0x4 - core index']
  #allocation1 [shape = 'u32[72,128]{1,0:T(1,128)}', space=vmem, size = 0x9000, scoped, tag = 'internal scratch']
  %s0 = inlined_call_operand.vmem [shape: bf16[1160,256], index: 0, kind: input, shape index: {}]
  %s1 = inlined_call_operand.vmem [shape: bf16[256,16], index: 1, kind: input, shape index: {}]
  %s2 = inlined_call_operand.vmem [shape: f32[1,16], index: 2, kind: input, shape index: {}]
  %s3 = inlined_call_operand.vmem [shape: bf16[1160,16], index: 3, kind: output, shape index: {}]
  %s4 = sld [smem:[#allocation0]]
  $region89: #{dqn_forward.3} parent=0
    _
  %s6 = ssub.s32 1, %s4
  %s7 = scalar_select 0, %s6, %s4
  $region1: #{dqn_forward.3} parent=0
    #allocation2 [shape = 'u8[299008]{0}', space=vmem, size = 0x49000, scoped, tag = 'output window, operand 0']
    loop: start=0, step=1, limit=4
    $region2: #{dqn_forward.3} parent=1 // loop_pre_header
      _
    $region3: #{dqn_forward.3} parent=1 // loop_header
      %s9 = sphi 0, %s13
      %p10 = scmp.ge.s32.totalorder %s9, 4
      %s19 = sphi 0, %s21
      %s22 = sphi 0, %s19
      %s23 = sphi 0, %s22
      %s39 = sphi 0, %s23
      %s43 = sphi 0, %s43
      %s45 = sphi 0, %s43
      %s46 = sphi 0, %s45
      %s60 = sphi 0, %s46
      %s64 = sphi 0, %s64
      %s66 = sphi 0, %s64
      %s67 = sphi 0, %s66
      %s81 = sphi 0, %s67
      %s87 = sphi 0, %s89
      %s90 = sphi 0, %s87
      %s91 = sphi 0, %s90
      %s107 = sphi 0, %s91
    $region4: #{dqn_forward.3} parent=1 // loop_header_branch
      %12 = sbr.rel (%p10) target = $region8
    $region5: #{dqn_forward.3} parent=1 // loop_body
      %s14 = ssub.s32 %s9, 1
      %s15 = ssub.s32 %s9, 2
      %s16 = sadd.s32 %s9, 1
      %s17 = ssub.s32 %s9, %s16
      %p18 = scmp.eq.s32.totalorder %s17, 0
      %s20 = sadd.s32 %s19, 1
      %s21 = scalar_select %p18, %s19, %s20
      %p24 = pneg %p18
      %p25 = scmp.eq.s32.totalorder %s9, 1
      %p26 = por %p24, %p25
      %p27 = scmp.ne.s32.totalorder %s19, %s22
      %p28 = scmp.eq.s32.totalorder %s9, 0
      %p29 = por %p27, %p28
      %p30 = scmp.ne.s32.totalorder %s19, %s22
      %p31 = scmp.eq.s32.totalorder %s14, 1
      %p32 = por %p30, %p31
      %p33 = scmp.ne.s32.totalorder %s22, %s23
      %p34 = scmp.eq.s32.totalorder %s14, 0
      %p35 = por %p33, %p34
      %p36 = scmp.ne.s32.totalorder %s22, %s23
      %p37 = scmp.eq.s32.totalorder %s15, 1
      %p38 = por %p36, %p37
      %p40 = scmp.ne.s32.totalorder %s23, %s39
      %p41 = scmp.eq.s32.totalorder %s15, 0
      %p42 = por %p40, %p41
      %s44 = sadd.s32 %s43, 1
      %p47 = scmp.eq.s32.totalorder %s9, 1
      %p48 = scmp.ne.s32.totalorder %s43, %s45
      %p49 = scmp.eq.s32.totalorder %s9, 0
      %p50 = por %p48, %p49
      %p51 = scmp.ne.s32.totalorder %s43, %s45
      %p52 = scmp.eq.s32.totalorder %s14, 1
      %p53 = por %p51, %p52
      %p54 = scmp.ne.s32.totalorder %s45, %s46
      %p55 = scmp.eq.s32.totalorder %s14, 0
      %p56 = por %p54, %p55
      %p57 = scmp.ne.s32.totalorder %s45, %s46
      %p58 = scmp.eq.s32.totalorder %s15, 1
      %p59 = por %p57, %p58
      %p61 = scmp.ne.s32.totalorder %s46, %s60
      %p62 = scmp.eq.s32.totalorder %s15, 0
      %p63 = por %p61, %p62
      %s65 = sadd.s32 %s64, 1
      %p68 = scmp.eq.s32.totalorder %s9, 1
      %p69 = scmp.ne.s32.totalorder %s64, %s66
      %p70 = scmp.eq.s32.totalorder %s9, 0
      %p71 = por %p69, %p70
      %p72 = scmp.ne.s32.totalorder %s64, %s66
      %p73 = scmp.eq.s32.totalorder %s14, 1
      %p74 = por %p72, %p73
      %p75 = scmp.ne.s32.totalorder %s66, %s67
      %p76 = scmp.eq.s32.totalorder %s14, 0
      %p77 = por %p75, %p76
      %p78 = scmp.ne.s32.totalorder %s66, %s67
      %p79 = scmp.eq.s32.totalorder %s15, 1
      %p80 = por %p78, %p79
      %p82 = scmp.ne.s32.totalorder %s67, %s81
      %p83 = scmp.eq.s32.totalorder %s15, 0
      %p84 = por %p82, %p83
      %s85 = ssub.s32 %s9, %s16
      %p86 = scmp.eq.s32.totalorder %s85, 0
      %s88 = sadd.s32 %s87, 1
      %s89 = scalar_select %p86, %s87, %s88
      %p92 = pneg %p86
      %p93 = scmp.eq.s32.totalorder %s9, 1
      %p94 = por %p92, %p93
      %p95 = scmp.ne.s32.totalorder %s87, %s90
      %p96 = scmp.eq.s32.totalorder %s9, 0
      %p97 = por %p95, %p96
      %p98 = scmp.ne.s32.totalorder %s87, %s90
      %p99 = scmp.eq.s32.totalorder %s14, 1
      %p100 = por %p98, %p99
      %p101 = scmp.ne.s32.totalorder %s90, %s91
      %p102 = scmp.eq.s32.totalorder %s14, 0
      %p103 = por %p101, %p102
      %p104 = scmp.ne.s32.totalorder %s90, %s91
      %p105 = scmp.eq.s32.totalorder %s15, 1
      %p106 = por %p104, %p105
      %p108 = scmp.ne.s32.totalorder %s91, %s107
      %p109 = scmp.eq.s32.totalorder %s15, 0
      %p110 = por %p108, %p109
      %p111 = scmp.le.s32.totalorder 1, %s9
      %p112 = scmp.lt.s32.totalorder %s9, 3
      %p113 = pnand %p111, %p112
      %p114 = pneg %p113
      // Predicated region
      $region9: #{dqn_forward.3} parent=5 // pred_check
        _
      $region10: #{dqn_forward.3} parent=5 // pred_check_branch
        %116 = sbr.rel (%p113) target = $region12
      $region11: #{dqn_forward.3} parent=5 // pred_region
        %s117 = ssub.s32 %s9, 1
        // Predicated region
        $region13: #{dqn_forward.3} parent=11 // pred_check
          %p118 = pneg %p56
        $region14: #{dqn_forward.3} parent=11 // pred_check_branch
          %120 = sbr.rel (%p118) target = $region16
        $region15: #{dqn_forward.3} parent=11 // pred_region
          _
        $region16: #{dqn_forward.3} parent=11 // pred_fallthru
          _
        // Predicated region
        $region17: #{dqn_forward.3} parent=11 // pred_check
          %p121 = pneg %p77
        $region18: #{dqn_forward.3} parent=11 // pred_check_branch
          %123 = sbr.rel (%p121) target = $region20
        $region19: #{dqn_forward.3} parent=11 // pred_region
          _
        $region20: #{dqn_forward.3} parent=11 // pred_fallthru
          _
      $region12: #{dqn_forward.3} parent=5 // pred_fallthru
        _
      %p124 = scmp.lt.s32.totalorder %s9, 2
      // Predicated region
      $region21: #{dqn_forward.3} parent=5 // pred_check
        %p125 = pneg %p124
      $region22: #{dqn_forward.3} parent=5 // pred_check_branch
        %127 = sbr.rel (%p125) target = $region24
      $region23: #{dqn_forward.3} parent=5 // pred_region
        // Predicated region
        $region25: #{dqn_forward.3} parent=23 // pred_check
          %p128 = pneg %p29
        $region26: #{dqn_forward.3} parent=23 // pred_check_branch
          %130 = sbr.rel (%p128) target = $region28
        $region27: #{dqn_forward.3} parent=23 // pred_region
          %s131 = smul.u32 73, %s9
          %s132 = ssub.s32 145, %s131
          %p133 = scmp.lt.s32.totalorder %s132, 73
          %s134 = scalar_select %p133, %s132, 73
          %s135 = smul.u32 4, %s134
          %s136 = smul.u32 %s135, 2
          %p137 = scmp.lt.s32.totalorder %s131, 144
          %s138 = scalar_select %p137, %s131, 144
          %s139 = smul.addr %s138, 2
          %s140 = smul.addr %s139, 4
          %s141 = scalar_lea.vmem %s0, %s140
          %s142 = smul.u32 73, %s9
          %s143 = ssub.s32 145, %s142
          %p144 = scmp.lt.s32.totalorder %s143, 73
          %s145 = scalar_select %p144, %s143, 73
          %s146 = smul.u32 4, %s145
          %s147 = smul.u32 %s146, 2
        $region28: #{dqn_forward.3} parent=23 // pred_fallthru
          _
      $region24: #{dqn_forward.3} parent=5 // pred_fallthru
        _
      %p148 = scmp.le.s32.totalorder 1, %s9
      %p149 = scmp.lt.s32.totalorder %s9, 3
      %p150 = pnand %p148, %p149
      %p151 = pneg %p150
      // Predicated region
      $region29: #{dqn_forward.3} parent=5 // pred_check
        _
      $region30: #{dqn_forward.3} parent=5 // pred_check_branch
        %153 = sbr.rel (%p150) target = $region32
      $region31: #{dqn_forward.3} parent=5 // pred_region
        %s154 = ssub.s32 %s9, 1
        %s155 = smul.u32 73, %s14
        %s156 = ssub.s32 145, %s155
        %p157 = scmp.lt.s32.totalorder %s156, 73
        %s158 = scalar_select %p157, %s156, 73
        %s159 = smul.u32 4, %s158
        %s160 = smul.u32 %s159, 2
        %p161 = scmp.lt.s32.totalorder %s155, 144
        %s162 = scalar_select %p161, %s155, 144
        %s163 = smul.addr %s162, 2
        %s164 = smul.addr %s163, 4
        %s165 = scalar_lea.vmem %s0, %s164
        %p166 = pneg %p35
        %p167 = pneg %p32
        %p168 = pneg %p56
        %p169 = pneg %p53
        %p170 = pneg %p77
        %p171 = pneg %p74
        %p172 = pneg %p103
        %p173 = pneg %p100
        %s174 = sand.u32 %s90, 1
        %s175 = sand.u32 %s90, 1
        %s176 = smul.addr %s175, 292
        %s177 = scalar_lea.vmem [#allocation2], %s176
        %s178 = smul.u32 73, %s14
        %s179 = ssub.s32 145, %s178
        %p180 = scmp.lt.s32.totalorder %s179, 73
        %s181 = scalar_select %p180, %s179, 73
        %s182 = smul.u32 4, %s181
        %s183 = smul.u32 %s182, 2
        %p184 = scmp.lt.s32.totalorder %s178, 144
        %s185 = scalar_select %p184, %s178, 144
        %s186 = smul.addr %s185, 2
        %s187 = smul.addr %s186, 4
        %s188 = scalar_lea.vmem %s0, %s187
        %s189 = smul.u32 73, %s14
        %s190 = ssub.s32 145, %s189
        %p191 = scmp.lt.s32.totalorder %s190, 73
        %s192 = scalar_select %p191, %s190, 73
        %s193 = smul.u32 4, %s192
        %s194 = smul.u32 %s193, 2
        %s195 = smul.u32 73, %s14
        %s196 = ssub.s32 145, %s195
        %p197 = scmp.lt.s32.totalorder %s196, 73
        %s198 = scalar_select %p197, %s196, 73
        %s199 = smul.u32 4, %s198
        %v200 = vld [vmem:[%s188] sm:$0xff]
        %v201 = vld [vmem:[%s188 + $0x8] sm:$0xff]
        %v202 = vld [vmem:[%s188 + $0x10] sm:$0xff]
        %v203 = vld [vmem:[%s188 + $0x18] sm:$0xff]
        %v204 = vld [vmem:[%s188 + $0x20] sm:$0xff]
        %v205 = vld [vmem:[%s188 + $0x28] sm:$0xff]
        %v206 = vld [vmem:[%s188 + $0x30] sm:$0xff]
        %v207 = vld [vmem:[%s188 + $0x38] sm:$0xff]
        %v208 = vld [vmem:[%s188 + $0x40] sm:$0xff]
        %v209 = vld [vmem:[%s188 + $0x48] sm:$0xff]
        %v210 = vld [vmem:[%s188 + $0x50] sm:$0xff]
        %v211 = vld [vmem:[%s188 + $0x58] sm:$0xff]
        %v212 = vld [vmem:[%s188 + $0x60] sm:$0xff]
        %v213 = vld [vmem:[%s188 + $0x68] sm:$0xff]
        %v214 = vld [vmem:[%s188 + $0x70] sm:$0xff]
        %v215 = vld [vmem:[%s188 + $0x78] sm:$0xff]
        %v216 = vld [vmem:[%s188 + $0x80] sm:$0xff]
        %v217 = vld [vmem:[%s188 + $0x88] sm:$0xff]
        %v218 = vld [vmem:[%s188 + $0x90] sm:$0xff]
        %v219 = vld [vmem:[%s188 + $0x98] sm:$0xff]
        %v220 = vld [vmem:[%s188 + $0xa0] sm:$0xff]
        %v221 = vld [vmem:[%s188 + $0xa8] sm:$0xff]
        %v222 = vld [vmem:[%s188 + $0xb0] sm:$0xff]
        %v223 = vld [vmem:[%s188 + $0xb8] sm:$0xff]
        %v224 = vld [vmem:[%s188 + $0xc0] sm:$0xff]
        %v225 = vld [vmem:[%s188 + $0xc8] sm:$0xff]
        %v226 = vld [vmem:[%s188 + $0xd0] sm:$0xff]
        %v227 = vld [vmem:[%s188 + $0xd8] sm:$0xff]
        %v228 = vld [vmem:[%s188 + $0xe0] sm:$0xff]
        %v229 = vld [vmem:[%s188 + $0xe8] sm:$0xff]
        %v230 = vld [vmem:[%s188 + $0xf0] sm:$0xff]
        %v231 = vld [vmem:[%s188 + $0xf8] sm:$0xff]
        %v232 = vld [vmem:[%s188 + $0x100] sm:$0xff]
        %v233 = vld [vmem:[%s188 + $0x108] sm:$0xff]
        %v234 = vld [vmem:[%s188 + $0x110] sm:$0xff]
        %v235 = vld [vmem:[%s188 + $0x118] sm:$0xff]
        %v236 = vld [vmem:[%s188 + $0x120] sm:$0xff]
        %v237 = vld [vmem:[%s188 + $0x128] sm:$0xff]
        %v238 = vld [vmem:[%s188 + $0x130] sm:$0xff]
        %v239 = vld [vmem:[%s188 + $0x138] sm:$0xff]
        %v240 = vld [vmem:[%s188 + $0x140] sm:$0xff]
        %v241 = vld [vmem:[%s188 + $0x148] sm:$0xff]
        %v242 = vld [vmem:[%s188 + $0x150] sm:$0xff]
        %v243 = vld [vmem:[%s188 + $0x158] sm:$0xff]
        %v244 = vld [vmem:[%s188 + $0x160] sm:$0xff]
        %v245 = vld [vmem:[%s188 + $0x168] sm:$0xff]
        %v246 = vld [vmem:[%s188 + $0x170] sm:$0xff]
        %v247 = vld [vmem:[%s188 + $0x178] sm:$0xff]
        %v248 = vld [vmem:[%s188 + $0x180] sm:$0xff]
        %v249 = vld [vmem:[%s188 + $0x188] sm:$0xff]
        %v250 = vld [vmem:[%s188 + $0x190] sm:$0xff]
        %v251 = vld [vmem:[%s188 + $0x198] sm:$0xff]
        %v252 = vld [vmem:[%s188 + $0x1a0] sm:$0xff]
        %v253 = vld [vmem:[%s188 + $0x1a8] sm:$0xff]
        %v254 = vld [vmem:[%s188 + $0x1b0] sm:$0xff]
        %v255 = vld [vmem:[%s188 + $0x1b8] sm:$0xff]
        %v256 = vld [vmem:[%s188 + $0x1c0] sm:$0xff]
        %v257 = vld [vmem:[%s188 + $0x1c8] sm:$0xff]
        %v258 = vld [vmem:[%s188 + $0x1d0] sm:$0xff]
        %v259 = vld [vmem:[%s188 + $0x1d8] sm:$0xff]
        %v260 = vld [vmem:[%s188 + $0x1e0] sm:$0xff]
        %v261 = vld [vmem:[%s188 + $0x1e8] sm:$0xff]
        %v262 = vld [vmem:[%s188 + $0x1f0] sm:$0xff]
        %v263 = vld [vmem:[%s188 + $0x1f8] sm:$0xff]
        %v264 = vld [vmem:[%s188 + $0x200] sm:$0xff]
        %v265 = vld [vmem:[%s188 + $0x208] sm:$0xff]
        %v266 = vld [vmem:[%s188 + $0x210] sm:$0xff]
        %v267 = vld [vmem:[%s188 + $0x218] sm:$0xff]
        %v268 = vld [vmem:[%s188 + $0x220] sm:$0xff]
        %v269 = vld [vmem:[%s188 + $0x228] sm:$0xff]
        %v270 = vld [vmem:[%s188 + $0x230] sm:$0xff]
        %v271 = vld [vmem:[%s188 + $0x238] sm:$0xff]
        %v272 = vld [vmem:[%s188 + $0x240] sm:$0xff]
        %v273 = vld [vmem:[%s1] sm:$0xf]
        %v274 = vld [vmem:[%s1 + $0x4] sm:$0xf]
        %v275 = vld [vmem:[%s1 + $0x8] sm:$0xf]
        %v276 = vld [vmem:[%s1 + $0xc] sm:$0xf]
        %v277 = vld [vmem:[%s1 + $0x10] sm:$0xf]
        %v278 = vld [vmem:[%s1 + $0x14] sm:$0xf]
        %v279 = vld [vmem:[%s1 + $0x18] sm:$0xf]
        %v280 = vld [vmem:[%s1 + $0x1c] sm:$0xf]
        %v281 = vld [vmem:[%s1 + $0x20] sm:$0xf]
        %v282 = vld [vmem:[%s1 + $0x24] sm:$0xf]
        %v283 = vld [vmem:[%s1 + $0x28] sm:$0xf]
        %v284 = vld [vmem:[%s1 + $0x2c] sm:$0xf]
        %v285 = vld [vmem:[%s1 + $0x30] sm:$0xf]
        %v286 = vld [vmem:[%s1 + $0x34] sm:$0xf]
        %v287 = vld [vmem:[%s1 + $0x38] sm:$0xf]
        %v288 = vld [vmem:[%s1 + $0x3c] sm:$0xf]
        %v289 = vld [vmem:[%s1 + $0x40] sm:$0xf]
        %v290 = vld [vmem:[%s1 + $0x44] sm:$0xf]
        %v291 = vld [vmem:[%s1 + $0x48] sm:$0xf]
        %v292 = vld [vmem:[%s1 + $0x4c] sm:$0xf]
        %v293 = vld [vmem:[%s1 + $0x50] sm:$0xf]
        %v294 = vld [vmem:[%s1 + $0x54] sm:$0xf]
        %v295 = vld [vmem:[%s1 + $0x58] sm:$0xf]
        %v296 = vld [vmem:[%s1 + $0x5c] sm:$0xf]
        %v297 = vld [vmem:[%s1 + $0x60] sm:$0xf]
        %v298 = vld [vmem:[%s1 + $0x64] sm:$0xf]
        %v299 = vld [vmem:[%s1 + $0x68] sm:$0xf]
        %v300 = vld [vmem:[%s1 + $0x6c] sm:$0xf]
        %v301 = vld [vmem:[%s1 + $0x70] sm:$0xf]
        %v302 = vld [vmem:[%s1 + $0x74] sm:$0xf]
        %v303 = vld [vmem:[%s1 + $0x78] sm:$0xf]
        %v304 = vld [vmem:[%s1 + $0x7c] sm:$0xf]
        %v305 = vld [vmem:[%s2] sm:$0x1]
        %v307 = vperm.slane %v305, 0
        %v382 = vunpack.c.l.b16 %v200
        %v383 = vunpack.c.h.b16 %v200
        %v384 = vunpack.c.l.b16 %v201
        %v385 = vunpack.c.h.b16 %v201
        %v386 = vunpack.c.l.b16 %v202
        %v387 = vunpack.c.h.b16 %v202
        %v388 = vunpack.c.l.b16 %v203
        %v389 = vunpack.c.h.b16 %v203
        %v390 = vunpack.c.l.b16 %v204
        %v391 = vunpack.c.h.b16 %v204
        %v392 = vunpack.c.l.b16 %v205
        %v393 = vunpack.c.h.b16 %v205
        %v394 = vunpack.c.l.b16 %v206
        %v395 = vunpack.c.h.b16 %v206
        %v396 = vunpack.c.l.b16 %v207
        %v397 = vunpack.c.h.b16 %v207
        %v398 = vunpack.c.l.b16 %v208
        %v399 = vunpack.c.h.b16 %v208
        %v400 = vunpack.c.l.b16 %v209
        %v401 = vunpack.c.h.b16 %v209
        %v402 = vunpack.c.l.b16 %v210
        %v403 = vunpack.c.h.b16 %v210
        %v404 = vunpack.c.l.b16 %v211
        %v405 = vunpack.c.h.b16 %v211
        %v406 = vunpack.c.l.b16 %v212
        %v407 = vunpack.c.h.b16 %v212
        %v408 = vunpack.c.l.b16 %v213
        %v409 = vunpack.c.h.b16 %v213
        %v410 = vunpack.c.l.b16 %v214
        %v411 = vunpack.c.h.b16 %v214
        %v412 = vunpack.c.l.b16 %v215
        %v413 = vunpack.c.h.b16 %v215
        %v414 = vunpack.c.l.b16 %v216
        %v415 = vunpack.c.h.b16 %v216
        %v416 = vunpack.c.l.b16 %v217
        %v417 = vunpack.c.h.b16 %v217
        %v418 = vunpack.c.l.b16 %v218
        %v419 = vunpack.c.h.b16 %v218
        %v420 = vunpack.c.l.b16 %v219
        %v421 = vunpack.c.h.b16 %v219
        %v422 = vunpack.c.l.b16 %v220
        %v423 = vunpack.c.h.b16 %v220
        %v424 = vunpack.c.l.b16 %v221
        %v425 = vunpack.c.h.b16 %v221
        %v426 = vunpack.c.l.b16 %v222
        %v427 = vunpack.c.h.b16 %v222
        %v428 = vunpack.c.l.b16 %v223
        %v429 = vunpack.c.h.b16 %v223
        %v430 = vunpack.c.l.b16 %v224
        %v431 = vunpack.c.h.b16 %v224
        %v432 = vunpack.c.l.b16 %v225
        %v433 = vunpack.c.h.b16 %v225
        %v434 = vunpack.c.l.b16 %v226
        %v435 = vunpack.c.h.b16 %v226
        %v436 = vunpack.c.l.b16 %v227
        %v437 = vunpack.c.h.b16 %v227
        %v438 = vunpack.c.l.b16 %v228
        %v439 = vunpack.c.h.b16 %v228
        %v440 = vunpack.c.l.b16 %v229
        %v441 = vunpack.c.h.b16 %v229
        %v442 = vunpack.c.l.b16 %v230
        %v443 = vunpack.c.h.b16 %v230
        %v444 = vunpack.c.l.b16 %v231
        %v445 = vunpack.c.h.b16 %v231
        %v446 = vunpack.c.l.b16 %v232
        %v447 = vunpack.c.h.b16 %v232
        %v448 = vunpack.c.l.b16 %v233
        %v449 = vunpack.c.h.b16 %v233
        %v450 = vunpack.c.l.b16 %v234
        %v451 = vunpack.c.h.b16 %v234
        %v452 = vunpack.c.l.b16 %v235
        %v453 = vunpack.c.h.b16 %v235
        %v454 = vunpack.c.l.b16 %v236
        %v455 = vunpack.c.h.b16 %v236
        %v456 = vunpack.c.l.b16 %v237
        %v457 = vunpack.c.h.b16 %v237
        %v458 = vunpack.c.l.b16 %v238
        %v459 = vunpack.c.h.b16 %v238
        %v460 = vunpack.c.l.b16 %v239
        %v461 = vunpack.c.h.b16 %v239
        %v462 = vunpack.c.l.b16 %v240
        %v463 = vunpack.c.h.b16 %v240
        %v464 = vunpack.c.l.b16 %v241
        %v465 = vunpack.c.h.b16 %v241
        %v466 = vunpack.c.l.b16 %v242
        %v467 = vunpack.c.h.b16 %v242
        %v468 = vunpack.c.l.b16 %v243
        %v469 = vunpack.c.h.b16 %v243
        %v470 = vunpack.c.l.b16 %v244
        %v471 = vunpack.c.h.b16 %v244
        %v472 = vunpack.c.l.b16 %v245
        %v473 = vunpack.c.h.b16 %v245
        %v474 = vunpack.c.l.b16 %v246
        %v475 = vunpack.c.h.b16 %v246
        %v476 = vunpack.c.l.b16 %v247
        %v477 = vunpack.c.h.b16 %v247
        %v478 = vunpack.c.l.b16 %v248
        %v479 = vunpack.c.h.b16 %v248
        %v480 = vunpack.c.l.b16 %v249
        %v481 = vunpack.c.h.b16 %v249
        %v482 = vunpack.c.l.b16 %v250
        %v483 = vunpack.c.h.b16 %v250
        %v484 = vunpack.c.l.b16 %v251
        %v485 = vunpack.c.h.b16 %v251
        %v486 = vunpack.c.l.b16 %v252
        %v487 = vunpack.c.h.b16 %v252
        %v488 = vunpack.c.l.b16 %v253
        %v489 = vunpack.c.h.b16 %v253
        %v490 = vunpack.c.l.b16 %v254
        %v491 = vunpack.c.h.b16 %v254
        %v492 = vunpack.c.l.b16 %v255
        %v493 = vunpack.c.h.b16 %v255
        %v494 = vunpack.c.l.b16 %v256
        %v495 = vunpack.c.h.b16 %v256
        %v496 = vunpack.c.l.b16 %v257
        %v497 = vunpack.c.h.b16 %v257
        %v498 = vunpack.c.l.b16 %v258
        %v499 = vunpack.c.h.b16 %v258
        %v500 = vunpack.c.l.b16 %v259
        %v501 = vunpack.c.h.b16 %v259
        %v502 = vunpack.c.l.b16 %v260
        %v503 = vunpack.c.h.b16 %v260
        %v504 = vunpack.c.l.b16 %v261
        %v505 = vunpack.c.h.b16 %v261
        %v506 = vunpack.c.l.b16 %v262
        %v507 = vunpack.c.h.b16 %v262
        %v508 = vunpack.c.l.b16 %v263
        %v509 = vunpack.c.h.b16 %v263
        %v510 = vunpack.c.l.b16 %v264
        %v511 = vunpack.c.h.b16 %v264
        %v512 = vunpack.c.l.b16 %v265
        %v513 = vunpack.c.h.b16 %v265
        %v514 = vunpack.c.l.b16 %v266
        %v515 = vunpack.c.h.b16 %v266
        %v516 = vunpack.c.l.b16 %v267
        %v517 = vunpack.c.h.b16 %v267
        %v518 = vunpack.c.l.b16 %v268
        %v519 = vunpack.c.h.b16 %v268
        %v520 = vunpack.c.l.b16 %v269
        %v521 = vunpack.c.h.b16 %v269
        %v522 = vunpack.c.l.b16 %v270
        %v523 = vunpack.c.h.b16 %v270
        %v524 = vunpack.c.l.b16 %v271
        %v525 = vunpack.c.h.b16 %v271
        %v526 = vunpack.c.l.b16 %v272
        %v527 = vunpack.c.h.b16 %v272
        %v528 = vpack.c.b16 %v384, %v382
        %v529 = vpack.c.b16 %v385, %v383
        %v530 = vpack.c.b16 %v388, %v386
        %v531 = vpack.c.b16 %v389, %v387
        %v532 = vpack.c.b16 %v392, %v390
        %v533 = vpack.c.b16 %v393, %v391
        %v534 = vpack.c.b16 %v396, %v394
        %v535 = vpack.c.b16 %v397, %v395
        %v536 = vpack.c.b16 %v400, %v398
        %v537 = vpack.c.b16 %v401, %v399
        %v538 = vpack.c.b16 %v404, %v402
        %v539 = vpack.c.b16 %v405, %v403
        %v540 = vpack.c.b16 %v408, %v406
        %v541 = vpack.c.b16 %v409, %v407
        %v542 = vpack.c.b16 %v412, %v410
        %v543 = vpack.c.b16 %v413, %v411
        %v544 = vpack.c.b16 %v416, %v414
        %v545 = vpack.c.b16 %v417, %v415
        %v546 = vpack.c.b16 %v420, %v418
        %v547 = vpack.c.b16 %v421, %v419
        %v548 = vpack.c.b16 %v424, %v422
        %v549 = vpack.c.b16 %v425, %v423
        %v550 = vpack.c.b16 %v428, %v426
        %v551 = vpack.c.b16 %v429, %v427
        %v552 = vpack.c.b16 %v432, %v430
        %v553 = vpack.c.b16 %v433, %v431
        %v554 = vpack.c.b16 %v436, %v434
        %v555 = vpack.c.b16 %v437, %v435
        %v556 = vpack.c.b16 %v440, %v438
        %v557 = vpack.c.b16 %v441, %v439
        %v558 = vpack.c.b16 %v444, %v442
        %v559 = vpack.c.b16 %v445, %v443
        %v560 = vpack.c.b16 %v448, %v446
        %v561 = vpack.c.b16 %v449, %v447
        %v562 = vpack.c.b16 %v452, %v450
        %v563 = vpack.c.b16 %v453, %v451
        %v564 = vpack.c.b16 %v456, %v454
        %v565 = vpack.c.b16 %v457, %v455
        %v566 = vpack.c.b16 %v460, %v458
        %v567 = vpack.c.b16 %v461, %v459
        %v568 = vpack.c.b16 %v464, %v462
        %v569 = vpack.c.b16 %v465, %v463
        %v570 = vpack.c.b16 %v468, %v466
        %v571 = vpack.c.b16 %v469, %v467
        %v572 = vpack.c.b16 %v472, %v470
        %v573 = vpack.c.b16 %v473, %v471
        %v574 = vpack.c.b16 %v476, %v474
        %v575 = vpack.c.b16 %v477, %v475
        %v576 = vpack.c.b16 %v480, %v478
        %v577 = vpack.c.b16 %v481, %v479
        %v578 = vpack.c.b16 %v484, %v482
        %v579 = vpack.c.b16 %v485, %v483
        %v580 = vpack.c.b16 %v488, %v486
        %v581 = vpack.c.b16 %v489, %v487
        %v582 = vpack.c.b16 %v492, %v490
        %v583 = vpack.c.b16 %v493, %v491
        %v584 = vpack.c.b16 %v496, %v494
        %v585 = vpack.c.b16 %v497, %v495
        %v586 = vpack.c.b16 %v500, %v498
        %v587 = vpack.c.b16 %v501, %v499
        %v588 = vpack.c.b16 %v504, %v502
        %v589 = vpack.c.b16 %v505, %v503
        %v590 = vpack.c.b16 %v508, %v506
        %v591 = vpack.c.b16 %v509, %v507
        %v592 = vpack.c.b16 %v512, %v510
        %v593 = vpack.c.b16 %v513, %v511
        %v594 = vpack.c.b16 %v516, %v514
        %v595 = vpack.c.b16 %v517, %v515
        %v596 = vpack.c.b16 %v520, %v518
        %v597 = vpack.c.b16 %v521, %v519
        %v598 = vpack.c.b16 %v524, %v522
        %v599 = vpack.c.b16 %v525, %v523
        %v600 = vpack.c.b16 %v526, %v526
        %v601 = vpack.c.b16 %v527, %v527
        %v708 = vunpack.c.l.b16 %v273
        %v709 = vunpack.c.l.b16 %v274
        %v710 = vunpack.c.l.b16 %v275
        %v711 = vunpack.c.l.b16 %v276
        %v712 = vunpack.c.l.b16 %v277
        %v713 = vunpack.c.l.b16 %v278
        %v714 = vunpack.c.l.b16 %v279
        %v715 = vunpack.c.l.b16 %v280
        %v716 = vunpack.c.l.b16 %v281
        %v717 = vunpack.c.l.b16 %v282
        %v718 = vunpack.c.l.b16 %v283
        %v719 = vunpack.c.l.b16 %v284
        %v720 = vunpack.c.l.b16 %v285
        %v721 = vunpack.c.l.b16 %v286
        %v722 = vunpack.c.l.b16 %v287
        %v723 = vunpack.c.l.b16 %v288
        %v724 = vunpack.c.l.b16 %v289
        %v725 = vunpack.c.l.b16 %v290
        %v726 = vunpack.c.l.b16 %v291
        %v727 = vunpack.c.l.b16 %v292
        %v728 = vunpack.c.l.b16 %v293
        %v729 = vunpack.c.l.b16 %v294
        %v730 = vunpack.c.l.b16 %v295
        %v731 = vunpack.c.l.b16 %v296
        %v732 = vunpack.c.l.b16 %v297
        %v733 = vunpack.c.l.b16 %v298
        %v734 = vunpack.c.l.b16 %v299
        %v735 = vunpack.c.l.b16 %v300
        %v736 = vunpack.c.l.b16 %v301
        %v737 = vunpack.c.l.b16 %v302
        %v738 = vunpack.c.l.b16 %v303
        %v739 = vunpack.c.l.b16 %v304
        %v740 = vpack.c.b16 %v709, %v708
        %v741 = vpack.c.b16 %v711, %v710
        %v742 = vpack.c.b16 %v713, %v712
        %v743 = vpack.c.b16 %v715, %v714
        %v744 = vpack.c.b16 %v717, %v716
        %v745 = vpack.c.b16 %v719, %v718
        %v746 = vpack.c.b16 %v721, %v720
        %v747 = vpack.c.b16 %v723, %v722
        %v748 = vpack.c.b16 %v725, %v724
        %v749 = vpack.c.b16 %v727, %v726
        %v750 = vpack.c.b16 %v729, %v728
        %v751 = vpack.c.b16 %v731, %v730
        %v752 = vpack.c.b16 %v733, %v732
        %v753 = vpack.c.b16 %v735, %v734
        %v754 = vpack.c.b16 %v737, %v736
        %v755 = vpack.c.b16 %v739, %v738
        %772 = vmatpush.bf16.msra.mxu0 %v747
        %773 = vmatpush.bf16.msra.mxu0 %v746
        %774 = vmatpush.bf16.msra.mxu0 %v745
        %775 = vmatpush.bf16.msra.mxu0 %v744
        %776 = vmatpush.bf16.msra.mxu0 %v743
        %777 = vmatpush.bf16.msra.mxu0 %v742
        %778 = vmatpush.bf16.msra.mxu0 %v741
        %779 = vmatpush.bf16.msra.mxu0 %v740
        %780 = vmatmul.bf16.gmra.mxu0 %v528
        %v781 = vpop.f32.mrf.mxu0
        %v782 = vadd.f32 %v307, %v781
        %v783 = vpop.f32.mrf.mxu0
        %v784 = vadd.f32 %v307, %v783
        %785 = vmatmul.bf16.gmra.mxu0 %v530
        %v786 = vpop.f32.mrf.mxu0
        %v787 = vadd.f32 %v307, %v786
        %v788 = vpop.f32.mrf.mxu0
        %v789 = vadd.f32 %v307, %v788
        %790 = vmatmul.bf16.gmra.mxu0 %v532
        %v791 = vpop.f32.mrf.mxu0
        %v792 = vadd.f32 %v307, %v791
        %v793 = vpop.f32.mrf.mxu0
        %v794 = vadd.f32 %v307, %v793
        %795 = vmatmul.bf16.gmra.mxu0 %v534
        %v796 = vpop.f32.mrf.mxu0
        %v797 = vadd.f32 %v307, %v796
        %v798 = vpop.f32.mrf.mxu0
        %v799 = vadd.f32 %v307, %v798
        %800 = vmatmul.bf16.gmra.mxu0 %v536
        %v801 = vpop.f32.mrf.mxu0
        %v802 = vadd.f32 %v307, %v801
        %v803 = vpop.f32.mrf.mxu0
        %v804 = vadd.f32 %v307, %v803
        %805 = vmatmul.bf16.gmra.mxu0 %v538
        %v806 = vpop.f32.mrf.mxu0
        %v807 = vadd.f32 %v307, %v806
        %v808 = vpop.f32.mrf.mxu0
        %v809 = vadd.f32 %v307, %v808
        %810 = vmatmul.bf16.gmra.mxu0 %v540
        %v811 = vpop.f32.mrf.mxu0
        %v812 = vadd.f32 %v307, %v811
        %v813 = vpop.f32.mrf.mxu0
        %v814 = vadd.f32 %v307, %v813
        %815 = vmatmul.bf16.gmra.mxu0 %v542
        %v816 = vpop.f32.mrf.mxu0
        %v817 = vadd.f32 %v307, %v816
        %v818 = vpop.f32.mrf.mxu0
        %v819 = vadd.f32 %v307, %v818
        %820 = vmatmul.bf16.gmra.mxu0 %v544
        %v821 = vpop.f32.mrf.mxu0
        %v822 = vadd.f32 %v307, %v821
        %v823 = vpop.f32.mrf.mxu0
        %v824 = vadd.f32 %v307, %v823
        %825 = vmatmul.bf16.gmra.mxu0 %v546
        %v826 = vpop.f32.mrf.mxu0
        %v827 = vadd.f32 %v307, %v826
        %v828 = vpop.f32.mrf.mxu0
        %v829 = vadd.f32 %v307, %v828
        %830 = vmatmul.bf16.gmra.mxu0 %v548
        %v831 = vpop.f32.mrf.mxu0
        %v832 = vadd.f32 %v307, %v831
        %v833 = vpop.f32.mrf.mxu0
        %v834 = vadd.f32 %v307, %v833
        %835 = vmatmul.bf16.gmra.mxu0 %v550
        %v836 = vpop.f32.mrf.mxu0
        %v837 = vadd.f32 %v307, %v836
        %v838 = vpop.f32.mrf.mxu0
        %v839 = vadd.f32 %v307, %v838
        %840 = vmatmul.bf16.gmra.mxu0 %v552
        %v841 = vpop.f32.mrf.mxu0
        %v842 = vadd.f32 %v307, %v841
        %v843 = vpop.f32.mrf.mxu0
        %v844 = vadd.f32 %v307, %v843
        %845 = vmatmul.bf16.gmra.mxu0 %v554
        %v846 = vpop.f32.mrf.mxu0
        %v847 = vadd.f32 %v307, %v846
        %v848 = vpop.f32.mrf.mxu0
        %v849 = vadd.f32 %v307, %v848
        %850 = vmatmul.bf16.gmra.mxu0 %v556
        %v851 = vpop.f32.mrf.mxu0
        %v852 = vadd.f32 %v307, %v851
        %v853 = vpop.f32.mrf.mxu0
        %v854 = vadd.f32 %v307, %v853
        %855 = vmatmul.bf16.gmra.mxu0 %v558
        %v856 = vpop.f32.mrf.mxu0
        %v857 = vadd.f32 %v307, %v856
        %v858 = vpop.f32.mrf.mxu0
        %v859 = vadd.f32 %v307, %v858
        %860 = vmatmul.bf16.gmra.mxu0 %v560
        %v861 = vpop.f32.mrf.mxu0
        %v862 = vadd.f32 %v307, %v861
        %v863 = vpop.f32.mrf.mxu0
        %v864 = vadd.f32 %v307, %v863
        %865 = vmatmul.bf16.gmra.mxu0 %v562
        %v866 = vpop.f32.mrf.mxu0
        %v867 = vadd.f32 %v307, %v866
        %v868 = vpop.f32.mrf.mxu0
        %v869 = vadd.f32 %v307, %v868
        %870 = vmatmul.bf16.gmra.mxu0 %v564
        %v871 = vpop.f32.mrf.mxu0
        %v872 = vadd.f32 %v307, %v871
        %v873 = vpop.f32.mrf.mxu0
        %v874 = vadd.f32 %v307, %v873
        %875 = vmatmul.bf16.gmra.mxu0 %v566
        %v876 = vpop.f32.mrf.mxu0
        %v877 = vadd.f32 %v307, %v876
        %v878 = vpop.f32.mrf.mxu0
        %v879 = vadd.f32 %v307, %v878
        %880 = vmatmul.bf16.gmra.mxu0 %v568
        %v881 = vpop.f32.mrf.mxu0
        %v882 = vadd.f32 %v307, %v881
        %v883 = vpop.f32.mrf.mxu0
        %v884 = vadd.f32 %v307, %v883
        %885 = vmatmul.bf16.gmra.mxu0 %v570
        %v886 = vpop.f32.mrf.mxu0
        %v887 = vadd.f32 %v307, %v886
        %v888 = vpop.f32.mrf.mxu0
        %v889 = vadd.f32 %v307, %v888
        %890 = vmatmul.bf16.gmra.mxu0 %v572
        %v891 = vpop.f32.mrf.mxu0
        %v892 = vadd.f32 %v307, %v891
        %v893 = vpop.f32.mrf.mxu0
        %v894 = vadd.f32 %v307, %v893
        %895 = vmatmul.bf16.gmra.mxu0 %v574
        %v896 = vpop.f32.mrf.mxu0
        %v897 = vadd.f32 %v307, %v896
        %v898 = vpop.f32.mrf.mxu0
        %v899 = vadd.f32 %v307, %v898
        %900 = vmatmul.bf16.gmra.mxu0 %v576
        %v901 = vpop.f32.mrf.mxu0
        %v902 = vadd.f32 %v307, %v901
        %v903 = vpop.f32.mrf.mxu0
        %v904 = vadd.f32 %v307, %v903
        %905 = vmatmul.bf16.gmra.mxu0 %v578
        %v906 = vpop.f32.mrf.mxu0
        %v907 = vadd.f32 %v307, %v906
        %v908 = vpop.f32.mrf.mxu0
        %v909 = vadd.f32 %v307, %v908
        %910 = vmatmul.bf16.gmra.mxu0 %v580
        %v911 = vpop.f32.mrf.mxu0
        %v912 = vadd.f32 %v307, %v911
        %v913 = vpop.f32.mrf.mxu0
        %v914 = vadd.f32 %v307, %v913
        %915 = vmatmul.bf16.gmra.mxu0 %v582
        %v916 = vpop.f32.mrf.mxu0
        %v917 = vadd.f32 %v307, %v916
        %v918 = vpop.f32.mrf.mxu0
        %v919 = vadd.f32 %v307, %v918
        %920 = vmatmul.bf16.gmra.mxu0 %v584
        %v921 = vpop.f32.mrf.mxu0
        %v922 = vadd.f32 %v307, %v921
        %v923 = vpop.f32.mrf.mxu0
        %v924 = vadd.f32 %v307, %v923
        %925 = vmatmul.bf16.gmra.mxu0 %v586
        %v926 = vpop.f32.mrf.mxu0
        %v927 = vadd.f32 %v307, %v926
        %v928 = vpop.f32.mrf.mxu0
        %v929 = vadd.f32 %v307, %v928
        %930 = vmatmul.bf16.gmra.mxu0 %v588
        %v931 = vpop.f32.mrf.mxu0
        %v932 = vadd.f32 %v307, %v931
        %v933 = vpop.f32.mrf.mxu0
        %v934 = vadd.f32 %v307, %v933
        %935 = vmatmul.bf16.gmra.mxu0 %v590
        %v936 = vpop.f32.mrf.mxu0
        %v937 = vadd.f32 %v307, %v936
        %v938 = vpop.f32.mrf.mxu0
        %v939 = vadd.f32 %v307, %v938
        %940 = vmatmul.bf16.gmra.mxu0 %v592
        %v941 = vpop.f32.mrf.mxu0
        %v942 = vadd.f32 %v307, %v941
        %v943 = vpop.f32.mrf.mxu0
        %v944 = vadd.f32 %v307, %v943
        %945 = vmatmul.bf16.gmra.mxu0 %v594
        %v946 = vpop.f32.mrf.mxu0
        %v947 = vadd.f32 %v307, %v946
        %v948 = vpop.f32.mrf.mxu0
        %v949 = vadd.f32 %v307, %v948
        %950 = vmatmul.bf16.gmra.mxu0 %v596
        %v951 = vpop.f32.mrf.mxu0
        %v952 = vadd.f32 %v307, %v951
        %v953 = vpop.f32.mrf.mxu0
        %v954 = vadd.f32 %v307, %v953
        %955 = vmatmul.bf16.gmra.mxu0 %v598
        %v956 = vpop.f32.mrf.mxu0
        %v957 = vadd.f32 %v307, %v956
        %v958 = vpop.f32.mrf.mxu0
        %v959 = vadd.f32 %v307, %v958
        %960 = vmatmul.bf16.gmra.mxu0 %v600
        %v961 = vpop.f32.mrf.mxu0
        %v962 = vadd.f32 %v307, %v961
        %v963 = vpop.f32.mrf.mxu0
        %964 = vdwg.mxu0
        %965 = vmatpush.bf16.msra.mxu0 %v755
        %966 = vmatpush.bf16.msra.mxu0 %v754
        %967 = vmatpush.bf16.msra.mxu0 %v753
        %968 = vmatpush.bf16.msra.mxu0 %v752
        %969 = vmatpush.bf16.msra.mxu0 %v751
        %970 = vmatpush.bf16.msra.mxu0 %v750
        %971 = vmatpush.bf16.msra.mxu0 %v749
        %972 = vmatpush.bf16.msra.mxu0 %v748
        %973 = vmatmul.bf16.gmra.mxu0 %v529
        %v974 = vpop.f32.mrf.mxu0
        %v975 = vadd.f32 %v782, %v974
        %v976 = vpop.f32.mrf.mxu0
        %v977 = vadd.f32 %v784, %v976
        %978 = vmatmul.bf16.gmra.mxu0 %v531
        %v979 = vpop.f32.mrf.mxu0
        %v980 = vadd.f32 %v787, %v979
        %v981 = vpop.f32.mrf.mxu0
        %v982 = vadd.f32 %v789, %v981
        %983 = vmatmul.bf16.gmra.mxu0 %v533
        %v984 = vpop.f32.mrf.mxu0
        %v985 = vadd.f32 %v792, %v984
        %v986 = vpop.f32.mrf.mxu0
        %v987 = vadd.f32 %v794, %v986
        %988 = vmatmul.bf16.gmra.mxu0 %v535
        %v989 = vpop.f32.mrf.mxu0
        %v990 = vadd.f32 %v797, %v989
        %v991 = vpop.f32.mrf.mxu0
        %v992 = vadd.f32 %v799, %v991
        %993 = vmatmul.bf16.gmra.mxu0 %v537
        %v994 = vpop.f32.mrf.mxu0
        %v995 = vadd.f32 %v802, %v994
        %v996 = vpop.f32.mrf.mxu0
        %v997 = vadd.f32 %v804, %v996
        %998 = vmatmul.bf16.gmra.mxu0 %v539
        %v999 = vpop.f32.mrf.mxu0
        %v1000 = vadd.f32 %v807, %v999
        %v1001 = vpop.f32.mrf.mxu0
        %v1002 = vadd.f32 %v809, %v1001
        %1003 = vmatmul.bf16.gmra.mxu0 %v541
        %v1004 = vpop.f32.mrf.mxu0
        %v1005 = vadd.f32 %v812, %v1004
        %v1006 = vpop.f32.mrf.mxu0
        %v1007 = vadd.f32 %v814, %v1006
        %1008 = vmatmul.bf16.gmra.mxu0 %v543
        %v1009 = vpop.f32.mrf.mxu0
        %v1010 = vadd.f32 %v817, %v1009
        %v1011 = vpop.f32.mrf.mxu0
        %v1012 = vadd.f32 %v819, %v1011
        %1013 = vmatmul.bf16.gmra.mxu0 %v545
        %v1014 = vpop.f32.mrf.mxu0
        %v1015 = vadd.f32 %v822, %v1014
        %v1016 = vpop.f32.mrf.mxu0
        %v1017 = vadd.f32 %v824, %v1016
        %1018 = vmatmul.bf16.gmra.mxu0 %v547
        %v1019 = vpop.f32.mrf.mxu0
        %v1020 = vadd.f32 %v827, %v1019
        %v1021 = vpop.f32.mrf.mxu0
        %v1022 = vadd.f32 %v829, %v1021
        %1023 = vmatmul.bf16.gmra.mxu0 %v549
        %v1024 = vpop.f32.mrf.mxu0
        %v1025 = vadd.f32 %v832, %v1024
        %v1026 = vpop.f32.mrf.mxu0
        %v1027 = vadd.f32 %v834, %v1026
        %1028 = vmatmul.bf16.gmra.mxu0 %v551
        %v1029 = vpop.f32.mrf.mxu0
        %v1030 = vadd.f32 %v837, %v1029
        %v1031 = vpop.f32.mrf.mxu0
        %v1032 = vadd.f32 %v839, %v1031
        %1033 = vmatmul.bf16.gmra.mxu0 %v553
        %v1034 = vpop.f32.mrf.mxu0
        %v1035 = vadd.f32 %v842, %v1034
        %v1036 = vpop.f32.mrf.mxu0
        %v1037 = vadd.f32 %v844, %v1036
        %1038 = vmatmul.bf16.gmra.mxu0 %v555
        %v1039 = vpop.f32.mrf.mxu0
        %v1040 = vadd.f32 %v847, %v1039
        %v1041 = vpop.f32.mrf.mxu0
        %v1042 = vadd.f32 %v849, %v1041
        %1043 = vmatmul.bf16.gmra.mxu0 %v557
        %v1044 = vpop.f32.mrf.mxu0
        %v1045 = vadd.f32 %v852, %v1044
        %v1046 = vpop.f32.mrf.mxu0
        %v1047 = vadd.f32 %v854, %v1046
        %1048 = vmatmul.bf16.gmra.mxu0 %v559
        %v1049 = vpop.f32.mrf.mxu0
        %v1050 = vadd.f32 %v857, %v1049
        %v1051 = vpop.f32.mrf.mxu0
        %v1052 = vadd.f32 %v859, %v1051
        %1053 = vmatmul.bf16.gmra.mxu0 %v561
        %v1054 = vpop.f32.mrf.mxu0
        %v1055 = vadd.f32 %v862, %v1054
        %v1056 = vpop.f32.mrf.mxu0
        %v1057 = vadd.f32 %v864, %v1056
        %1058 = vmatmul.bf16.gmra.mxu0 %v563
        %v1059 = vpop.f32.mrf.mxu0
        %v1060 = vadd.f32 %v867, %v1059
        %v1061 = vpop.f32.mrf.mxu0
        %v1062 = vadd.f32 %v869, %v1061
        %1063 = vmatmul.bf16.gmra.mxu0 %v565
        %v1064 = vpop.f32.mrf.mxu0
        %v1065 = vadd.f32 %v872, %v1064
        %v1066 = vpop.f32.mrf.mxu0
        %v1067 = vadd.f32 %v874, %v1066
        %1068 = vmatmul.bf16.gmra.mxu0 %v567
        %v1069 = vpop.f32.mrf.mxu0
        %v1070 = vadd.f32 %v877, %v1069
        %v1071 = vpop.f32.mrf.mxu0
        %v1072 = vadd.f32 %v879, %v1071
        %1073 = vmatmul.bf16.gmra.mxu0 %v569
        %v1074 = vpop.f32.mrf.mxu0
        %v1075 = vadd.f32 %v882, %v1074
        %v1076 = vpop.f32.mrf.mxu0
        %v1077 = vadd.f32 %v884, %v1076
        %1078 = vmatmul.bf16.gmra.mxu0 %v571
        %v1079 = vpop.f32.mrf.mxu0
        %v1080 = vadd.f32 %v887, %v1079
        %v1081 = vpop.f32.mrf.mxu0
        %v1082 = vadd.f32 %v889, %v1081
        %1083 = vmatmul.bf16.gmra.mxu0 %v573
        %v1084 = vpop.f32.mrf.mxu0
        %v1085 = vadd.f32 %v892, %v1084
        %v1086 = vpop.f32.mrf.mxu0
        %v1087 = vadd.f32 %v894, %v1086
        %1088 = vmatmul.bf16.gmra.mxu0 %v575
        %v1089 = vpop.f32.mrf.mxu0
        %v1090 = vadd.f32 %v897, %v1089
        %v1091 = vpop.f32.mrf.mxu0
        %v1092 = vadd.f32 %v899, %v1091
        %1093 = vmatmul.bf16.gmra.mxu0 %v577
        %v1094 = vpop.f32.mrf.mxu0
        %v1095 = vadd.f32 %v902, %v1094
        %v1096 = vpop.f32.mrf.mxu0
        %v1097 = vadd.f32 %v904, %v1096
        %1098 = vmatmul.bf16.gmra.mxu0 %v579
        %v1099 = vpop.f32.mrf.mxu0
        %v1100 = vadd.f32 %v907, %v1099
        %v1101 = vpop.f32.mrf.mxu0
        %v1102 = vadd.f32 %v909, %v1101
        %1103 = vmatmul.bf16.gmra.mxu0 %v581
        %v1104 = vpop.f32.mrf.mxu0
        %v1105 = vadd.f32 %v912, %v1104
        %v1106 = vpop.f32.mrf.mxu0
        %v1107 = vadd.f32 %v914, %v1106
        %1108 = vmatmul.bf16.gmra.mxu0 %v583
        %v1109 = vpop.f32.mrf.mxu0
        %v1110 = vadd.f32 %v917, %v1109
        %v1111 = vpop.f32.mrf.mxu0
        %v1112 = vadd.f32 %v919, %v1111
        %1113 = vmatmul.bf16.gmra.mxu0 %v585
        %v1114 = vpop.f32.mrf.mxu0
        %v1115 = vadd.f32 %v922, %v1114
        %v1116 = vpop.f32.mrf.mxu0
        %v1117 = vadd.f32 %v924, %v1116
        %1118 = vmatmul.bf16.gmra.mxu0 %v587
        %v1119 = vpop.f32.mrf.mxu0
        %v1120 = vadd.f32 %v927, %v1119
        %v1121 = vpop.f32.mrf.mxu0
        %v1122 = vadd.f32 %v929, %v1121
        %1123 = vmatmul.bf16.gmra.mxu0 %v589
        %v1124 = vpop.f32.mrf.mxu0
        %v1125 = vadd.f32 %v932, %v1124
        %v1126 = vpop.f32.mrf.mxu0
        %v1127 = vadd.f32 %v934, %v1126
        %1128 = vmatmul.bf16.gmra.mxu0 %v591
        %v1129 = vpop.f32.mrf.mxu0
        %v1130 = vadd.f32 %v937, %v1129
        %v1131 = vpop.f32.mrf.mxu0
        %v1132 = vadd.f32 %v939, %v1131
        %1133 = vmatmul.bf16.gmra.mxu0 %v593
        %v1134 = vpop.f32.mrf.mxu0
        %v1135 = vadd.f32 %v942, %v1134
        %v1136 = vpop.f32.mrf.mxu0
        %v1137 = vadd.f32 %v944, %v1136
        %1138 = vmatmul.bf16.gmra.mxu0 %v595
        %v1139 = vpop.f32.mrf.mxu0
        %v1140 = vadd.f32 %v947, %v1139
        %v1141 = vpop.f32.mrf.mxu0
        %v1142 = vadd.f32 %v949, %v1141
        %1143 = vmatmul.bf16.gmra.mxu0 %v597
        %v1144 = vpop.f32.mrf.mxu0
        %v1145 = vadd.f32 %v952, %v1144
        %v1146 = vpop.f32.mrf.mxu0
        %v1147 = vadd.f32 %v954, %v1146
        %1148 = vmatmul.bf16.gmra.mxu0 %v599
        %v1149 = vpop.f32.mrf.mxu0
        %v1150 = vadd.f32 %v957, %v1149
        %v1151 = vpop.f32.mrf.mxu0
        %v1152 = vadd.f32 %v959, %v1151
        %1153 = vmatmul.bf16.gmra.mxu0 %v601
        %v1154 = vpop.f32.mrf.mxu0
        %v1155 = vadd.f32 %v962, %v1154
        %v1156 = vpop.f32.mrf.mxu0
        %1157 = vdwg.mxu0
        %v1158 = vmax.f32 %v975, 0.0
        %v1159 = vmax.f32 %v977, 0.0
        %v1160 = vmax.f32 %v980, 0.0
        %v1161 = vmax.f32 %v982, 0.0
        %v1162 = vmax.f32 %v985, 0.0
        %v1163 = vmax.f32 %v987, 0.0
        %v1164 = vmax.f32 %v990, 0.0
        %v1165 = vmax.f32 %v992, 0.0
        %v1166 = vmax.f32 %v995, 0.0
        %v1167 = vmax.f32 %v997, 0.0
        %v1168 = vmax.f32 %v1000, 0.0
        %v1169 = vmax.f32 %v1002, 0.0
        %v1170 = vmax.f32 %v1005, 0.0
        %v1171 = vmax.f32 %v1007, 0.0
        %v1172 = vmax.f32 %v1010, 0.0
        %v1173 = vmax.f32 %v1012, 0.0
        %v1174 = vmax.f32 %v1015, 0.0
        %v1175 = vmax.f32 %v1017, 0.0
        %v1176 = vmax.f32 %v1020, 0.0
        %v1177 = vmax.f32 %v1022, 0.0
        %v1178 = vmax.f32 %v1025, 0.0
        %v1179 = vmax.f32 %v1027, 0.0
        %v1180 = vmax.f32 %v1030, 0.0
        %v1181 = vmax.f32 %v1032, 0.0
        %v1182 = vmax.f32 %v1035, 0.0
        %v1183 = vmax.f32 %v1037, 0.0
        %v1184 = vmax.f32 %v1040, 0.0
        %v1185 = vmax.f32 %v1042, 0.0
        %v1186 = vmax.f32 %v1045, 0.0
        %v1187 = vmax.f32 %v1047, 0.0
        %v1188 = vmax.f32 %v1050, 0.0
        %v1189 = vmax.f32 %v1052, 0.0
        %v1190 = vmax.f32 %v1055, 0.0
        %v1191 = vmax.f32 %v1057, 0.0
        %v1192 = vmax.f32 %v1060, 0.0
        %v1193 = vmax.f32 %v1062, 0.0
        %v1194 = vmax.f32 %v1065, 0.0
        %v1195 = vmax.f32 %v1067, 0.0
        %v1196 = vmax.f32 %v1070, 0.0
        %v1197 = vmax.f32 %v1072, 0.0
        %v1198 = vmax.f32 %v1075, 0.0
        %v1199 = vmax.f32 %v1077, 0.0
        %v1200 = vmax.f32 %v1080, 0.0
        %v1201 = vmax.f32 %v1082, 0.0
        %v1202 = vmax.f32 %v1085, 0.0
        %v1203 = vmax.f32 %v1087, 0.0
        %v1204 = vmax.f32 %v1090, 0.0
        %v1205 = vmax.f32 %v1092, 0.0
        %v1206 = vmax.f32 %v1095, 0.0
        %v1207 = vmax.f32 %v1097, 0.0
        %v1208 = vmax.f32 %v1100, 0.0
        %v1209 = vmax.f32 %v1102, 0.0
        %v1210 = vmax.f32 %v1105, 0.0
        %v1211 = vmax.f32 %v1107, 0.0
        %v1212 = vmax.f32 %v1110, 0.0
        %v1213 = vmax.f32 %v1112, 0.0
        %v1214 = vmax.f32 %v1115, 0.0
        %v1215 = vmax.f32 %v1117, 0.0
        %v1216 = vmax.f32 %v1120, 0.0
        %v1217 = vmax.f32 %v1122, 0.0
        %v1218 = vmax.f32 %v1125, 0.0
        %v1219 = vmax.f32 %v1127, 0.0
        %v1220 = vmax.f32 %v1130, 0.0
        %v1221 = vmax.f32 %v1132, 0.0
        %v1222 = vmax.f32 %v1135, 0.0
        %v1223 = vmax.f32 %v1137, 0.0
        %v1224 = vmax.f32 %v1140, 0.0
        %v1225 = vmax.f32 %v1142, 0.0
        %v1226 = vmax.f32 %v1145, 0.0
        %v1227 = vmax.f32 %v1147, 0.0
        %v1228 = vmax.f32 %v1150, 0.0
        %v1229 = vmax.f32 %v1152, 0.0
        %v1230 = vmax.f32 %v1155, 0.0
        %v1231 = vpack.c.bf16 %v1158, %v1158
        %v1232 = vpack.c.bf16 %v1159, %v1159
        %v1233 = vpack.c.bf16 %v1160, %v1160
        %v1234 = vpack.c.bf16 %v1161, %v1161
        %v1235 = vpack.c.bf16 %v1162, %v1162
        %v1236 = vpack.c.bf16 %v1163, %v1163
        %v1237 = vpack.c.bf16 %v1164, %v1164
        %v1238 = vpack.c.bf16 %v1165, %v1165
        %v1239 = vpack.c.bf16 %v1166, %v1166
        %v1240 = vpack.c.bf16 %v1167, %v1167
        %v1241 = vpack.c.bf16 %v1168, %v1168
        %v1242 = vpack.c.bf16 %v1169, %v1169
        %v1243 = vpack.c.bf16 %v1170, %v1170
        %v1244 = vpack.c.bf16 %v1171, %v1171
        %v1245 = vpack.c.bf16 %v1172, %v1172
        %v1246 = vpack.c.bf16 %v1173, %v1173
        %v1247 = vpack.c.bf16 %v1174, %v1174
        %v1248 = vpack.c.bf16 %v1175, %v1175
        %v1249 = vpack.c.bf16 %v1176, %v1176
        %v1250 = vpack.c.bf16 %v1177, %v1177
        %v1251 = vpack.c.bf16 %v1178, %v1178
        %v1252 = vpack.c.bf16 %v1179, %v1179
        %v1253 = vpack.c.bf16 %v1180, %v1180
        %v1254 = vpack.c.bf16 %v1181, %v1181
        %v1255 = vpack.c.bf16 %v1182, %v1182
        %v1256 = vpack.c.bf16 %v1183, %v1183
        %v1257 = vpack.c.bf16 %v1184, %v1184
        %v1258 = vpack.c.bf16 %v1185, %v1185
        %v1259 = vpack.c.bf16 %v1186, %v1186
        %v1260 = vpack.c.bf16 %v1187, %v1187
        %v1261 = vpack.c.bf16 %v1188, %v1188
        %v1262 = vpack.c.bf16 %v1189, %v1189
        %v1263 = vpack.c.bf16 %v1190, %v1190
        %v1264 = vpack.c.bf16 %v1191, %v1191
        %v1265 = vpack.c.bf16 %v1192, %v1192
        %v1266 = vpack.c.bf16 %v1193, %v1193
        %v1267 = vpack.c.bf16 %v1194, %v1194
        %v1268 = vpack.c.bf16 %v1195, %v1195
        %v1269 = vpack.c.bf16 %v1196, %v1196
        %v1270 = vpack.c.bf16 %v1197, %v1197
        %v1271 = vpack.c.bf16 %v1198, %v1198
        %v1272 = vpack.c.bf16 %v1199, %v1199
        %v1273 = vpack.c.bf16 %v1200, %v1200
        %v1274 = vpack.c.bf16 %v1201, %v1201
        %v1275 = vpack.c.bf16 %v1202, %v1202
        %v1276 = vpack.c.bf16 %v1203, %v1203
        %v1277 = vpack.c.bf16 %v1204, %v1204
        %v1278 = vpack.c.bf16 %v1205, %v1205
        %v1279 = vpack.c.bf16 %v1206, %v1206
        %v1280 = vpack.c.bf16 %v1207, %v1207
        %v1281 = vpack.c.bf16 %v1208, %v1208
        %v1282 = vpack.c.bf16 %v1209, %v1209
        %v1283 = vpack.c.bf16 %v1210, %v1210
        %v1284 = vpack.c.bf16 %v1211, %v1211
        %v1285 = vpack.c.bf16 %v1212, %v1212
        %v1286 = vpack.c.bf16 %v1213, %v1213
        %v1287 = vpack.c.bf16 %v1214, %v1214
        %v1288 = vpack.c.bf16 %v1215, %v1215
        %v1289 = vpack.c.bf16 %v1216, %v1216
        %v1290 = vpack.c.bf16 %v1217, %v1217
        %v1291 = vpack.c.bf16 %v1218, %v1218
        %v1292 = vpack.c.bf16 %v1219, %v1219
        %v1293 = vpack.c.bf16 %v1220, %v1220
        %v1294 = vpack.c.bf16 %v1221, %v1221
        %v1295 = vpack.c.bf16 %v1222, %v1222
        %v1296 = vpack.c.bf16 %v1223, %v1223
        %v1297 = vpack.c.bf16 %v1224, %v1224
        %v1298 = vpack.c.bf16 %v1225, %v1225
        %v1299 = vpack.c.bf16 %v1226, %v1226
        %v1300 = vpack.c.bf16 %v1227, %v1227
        %v1301 = vpack.c.bf16 %v1228, %v1228
        %v1302 = vpack.c.bf16 %v1229, %v1229
        %v1303 = vpack.c.bf16 %v1230, %v1230
        %vm1304 = vcmask 125952
        %1305 = vst.msk [vmem:[%s177] sm:$0xf] %vm1304, %v1231
        %1306 = vst.msk [vmem:[%s177 + $0x4] sm:$0xf] %vm1304, %v1232
        %1307 = vst.msk [vmem:[%s177 + $0x8] sm:$0xf] %vm1304, %v1233
        %1308 = vst.msk [vmem:[%s177 + $0xc] sm:$0xf] %vm1304, %v1234
        %1309 = vst.msk [vmem:[%s177 + $0x10] sm:$0xf] %vm1304, %v1235
        %1310 = vst.msk [vmem:[%s177 + $0x14] sm:$0xf] %vm1304, %v1236
        %1311 = vst.msk [vmem:[%s177 + $0x18] sm:$0xf] %vm1304, %v1237
        %1312 = vst.msk [vmem:[%s177 + $0x1c] sm:$0xf] %vm1304, %v1238
        %1313 = vst.msk [vmem:[%s177 + $0x20] sm:$0xf] %vm1304, %v1239
        %1314 = vst.msk [vmem:[%s177 + $0x24] sm:$0xf] %vm1304, %v1240
        %1315 = vst.msk [vmem:[%s177 + $0x28] sm:$0xf] %vm1304, %v1241
        %1316 = vst.msk [vmem:[%s177 + $0x2c] sm:$0xf] %vm1304, %v1242
        %1317 = vst.msk [vmem:[%s177 + $0x30] sm:$0xf] %vm1304, %v1243
        %1318 = vst.msk [vmem:[%s177 + $0x34] sm:$0xf] %vm1304, %v1244
        %1319 = vst.msk [vmem:[%s177 + $0x38] sm:$0xf] %vm1304, %v1245
        %1320 = vst.msk [vmem:[%s177 + $0x3c] sm:$0xf] %vm1304, %v1246
        %1321 = vst.msk [vmem:[%s177 + $0x40] sm:$0xf] %vm1304, %v1247
        %1322 = vst.msk [vmem:[%s177 + $0x44] sm:$0xf] %vm1304, %v1248
        %1323 = vst.msk [vmem:[%s177 + $0x48] sm:$0xf] %vm1304, %v1249
        %1324 = vst.msk [vmem:[%s177 + $0x4c] sm:$0xf] %vm1304, %v1250
        %1325 = vst.msk [vmem:[%s177 + $0x50] sm:$0xf] %vm1304, %v1251
        %1326 = vst.msk [vmem:[%s177 + $0x54] sm:$0xf] %vm1304, %v1252
        %1327 = vst.msk [vmem:[%s177 + $0x58] sm:$0xf] %vm1304, %v1253
        %1328 = vst.msk [vmem:[%s177 + $0x5c] sm:$0xf] %vm1304, %v1254
        %1329 = vst.msk [vmem:[%s177 + $0x60] sm:$0xf] %vm1304, %v1255
        %1330 = vst.msk [vmem:[%s177 + $0x64] sm:$0xf] %vm1304, %v1256
        %1331 = vst.msk [vmem:[%s177 + $0x68] sm:$0xf] %vm1304, %v1257
        %1332 = vst.msk [vmem:[%s177 + $0x6c] sm:$0xf] %vm1304, %v1258
        %1333 = vst.msk [vmem:[%s177 + $0x70] sm:$0xf] %vm1304, %v1259
        %1334 = vst.msk [vmem:[%s177 + $0x74] sm:$0xf] %vm1304, %v1260
        %1335 = vst.msk [vmem:[%s177 + $0x78] sm:$0xf] %vm1304, %v1261
        %1336 = vst.msk [vmem:[%s177 + $0x7c] sm:$0xf] %vm1304, %v1262
        %1337 = vst.msk [vmem:[%s177 + $0x80] sm:$0xf] %vm1304, %v1263
        %1338 = vst.msk [vmem:[%s177 + $0x84] sm:$0xf] %vm1304, %v1264
        %1339 = vst.msk [vmem:[%s177 + $0x88] sm:$0xf] %vm1304, %v1265
        %1340 = vst.msk [vmem:[%s177 + $0x8c] sm:$0xf] %vm1304, %v1266
        %1341 = vst.msk [vmem:[%s177 + $0x90] sm:$0xf] %vm1304, %v1267
        %1342 = vst.msk [vmem:[%s177 + $0x94] sm:$0xf] %vm1304, %v1268
        %1343 = vst.msk [vmem:[%s177 + $0x98] sm:$0xf] %vm1304, %v1269
        %1344 = vst.msk [vmem:[%s177 + $0x9c] sm:$0xf] %vm1304, %v1270
        %1345 = vst.msk [vmem:[%s177 + $0xa0] sm:$0xf] %vm1304, %v1271
        %1346 = vst.msk [vmem:[%s177 + $0xa4] sm:$0xf] %vm1304, %v1272
        %1347 = vst.msk [vmem:[%s177 + $0xa8] sm:$0xf] %vm1304, %v1273
        %1348 = vst.msk [vmem:[%s177 + $0xac] sm:$0xf] %vm1304, %v1274
        %1349 = vst.msk [vmem:[%s177 + $0xb0] sm:$0xf] %vm1304, %v1275
        %1350 = vst.msk [vmem:[%s177 + $0xb4] sm:$0xf] %vm1304, %v1276
        %1351 = vst.msk [vmem:[%s177 + $0xb8] sm:$0xf] %vm1304, %v1277
        %1352 = vst.msk [vmem:[%s177 + $0xbc] sm:$0xf] %vm1304, %v1278
        %1353 = vst.msk [vmem:[%s177 + $0xc0] sm:$0xf] %vm1304, %v1279
        %1354 = vst.msk [vmem:[%s177 + $0xc4] sm:$0xf] %vm1304, %v1280
        %1355 = vst.msk [vmem:[%s177 + $0xc8] sm:$0xf] %vm1304, %v1281
        %1356 = vst.msk [vmem:[%s177 + $0xcc] sm:$0xf] %vm1304, %v1282
        %1357 = vst.msk [vmem:[%s177 + $0xd0] sm:$0xf] %vm1304, %v1283
        %1358 = vst.msk [vmem:[%s177 + $0xd4] sm:$0xf] %vm1304, %v1284
        %1359 = vst.msk [vmem:[%s177 + $0xd8] sm:$0xf] %vm1304, %v1285
        %1360 = vst.msk [vmem:[%s177 + $0xdc] sm:$0xf] %vm1304, %v1286
        %1361 = vst.msk [vmem:[%s177 + $0xe0] sm:$0xf] %vm1304, %v1287
        %1362 = vst.msk [vmem:[%s177 + $0xe4] sm:$0xf] %vm1304, %v1288
        %1363 = vst.msk [vmem:[%s177 + $0xe8] sm:$0xf] %vm1304, %v1289
        %1364 = vst.msk [vmem:[%s177 + $0xec] sm:$0xf] %vm1304, %v1290
        %1365 = vst.msk [vmem:[%s177 + $0xf0] sm:$0xf] %vm1304, %v1291
        %1366 = vst.msk [vmem:[%s177 + $0xf4] sm:$0xf] %vm1304, %v1292
        %1367 = vst.msk [vmem:[%s177 + $0xf8] sm:$0xf] %vm1304, %v1293
        %1368 = vst.msk [vmem:[%s177 + $0xfc] sm:$0xf] %vm1304, %v1294
        %1369 = vst.msk [vmem:[%s177 + $0x100] sm:$0xf] %vm1304, %v1295
        %1370 = vst.msk [vmem:[%s177 + $0x104] sm:$0xf] %vm1304, %v1296
        %1371 = vst.msk [vmem:[%s177 + $0x108] sm:$0xf] %vm1304, %v1297
        %1372 = vst.msk [vmem:[%s177 + $0x10c] sm:$0xf] %vm1304, %v1298
        %1373 = vst.msk [vmem:[%s177 + $0x110] sm:$0xf] %vm1304, %v1299
        %1374 = vst.msk [vmem:[%s177 + $0x114] sm:$0xf] %vm1304, %v1300
        %1375 = vst.msk [vmem:[%s177 + $0x118] sm:$0xf] %vm1304, %v1301
        %1376 = vst.msk [vmem:[%s177 + $0x11c] sm:$0xf] %vm1304, %v1302
        %1377 = vst.msk [vmem:[%s177 + $0x120] sm:$0xf] %vm1304, %v1303
        %s1378 = sand.u32 %s90, 1
        %s1379 = sand.u32 %s90, 1
        %s1380 = smul.addr %s1379, 292
        %s1381 = scalar_lea.vmem [#allocation2], %s1380
        // Predicated region
        $region33: #{dqn_forward.3} parent=31 // pred_check
          %p1382 = pneg %p100
        $region34: #{dqn_forward.3} parent=31 // pred_check_branch
          %1384 = sbr.rel (%p1382) target = $region36
        $region35: #{dqn_forward.3} parent=31 // pred_region
          %s1385 = smul.u32 73, %s14
          %s1386 = ssub.s32 145, %s1385
          %p1387 = scmp.lt.s32.totalorder %s1386, 73
          %s1388 = scalar_select %p1387, %s1386, 73
          %s1389 = smul.u32 4, %s1388
          %p1390 = scmp.ne.s32.totalorder 0, %s1389
          %s1391 = smul.addr %s1385, 4
          %s1392 = scalar_lea.vmem %s3, %s1391
          // Predicated region
          $region37: #{dqn_forward.3} parent=35 // pred_check
            %p1393 = pneg %p1390
          $region38: #{dqn_forward.3} parent=35 // pred_check_branch
            %1395 = sbr.rel (%p1393) target = $region40
          $region39: #{dqn_forward.3} parent=35 // pred_region
            // Predicated region
            $region41: #{dqn_forward.3} parent=39 // pred_check
              _
            $region42: #{dqn_forward.3} parent=39 // pred_check_branch
              %1397 = sbr.rel target = $region44
            $region43: #{dqn_forward.3} parent=39 // pred_region
              // Predicated region
              $region63: #{dqn_forward.3} parent=43 // pred_check
                _
              $region64: #{dqn_forward.3} parent=43 // pred_check_branch
                %1509 = sbr.rel (0) target = $region66
              $region65: #{dqn_forward.3} parent=43 // pred_region
                %s1511 = ssub.s32 16, 1
                %s1512 = sshrl.u32 %s1388, 5
                // While loop
                $region67: #{dqn_forward.3} parent=65 // loop_pre_header
                  _
                $region68: #{dqn_forward.3} parent=65 // loop_header
                  %s1514 = sphi 0, %s1516
                  %p1515 = scmp.ge.s32.totalorder %s1514, %s1512
                  %s1519 = sphi 0, %s1588
                  %s1520 = sphi %s1381, %s1591
                  %s1521 = sphi %s1392, %s1592
                $region69: #{dqn_forward.3} parent=65 // loop_header_branch
                  %1518 = sbr.rel (%p1515) target = $region73
                $region70: #{dqn_forward.3} parent=65 // loop_body
                  %v1522 = vld [vmem:[%s1520] sm:%s1511]
                  %1523 = vst [vmem:[%s1521] sm:%s1511] %v1522
                  %v1524 = vld [vmem:[%s1520 + $0x4] sm:%s1511]
                  %1525 = vst [vmem:[%s1521 + $0x4] sm:%s1511] %v1524
                  %v1526 = vld [vmem:[%s1520 + $0x8] sm:%s1511]
                  %1527 = vst [vmem:[%s1521 + $0x8] sm:%s1511] %v1526
                  %v1528 = vld [vmem:[%s1520 + $0xc] sm:%s1511]
                  %1529 = vst [vmem:[%s1521 + $0xc] sm:%s1511] %v1528
                  %v1530 = vld [vmem:[%s1520 + $0x10] sm:%s1511]
                  %1531 = vst [vmem:[%s1521 + $0x10] sm:%s1511] %v1530
                  %v1532 = vld [vmem:[%s1520 + $0x14] sm:%s1511]
                  %1533 = vst [vmem:[%s1521 + $0x14] sm:%s1511] %v1532
                  %v1534 = vld [vmem:[%s1520 + $0x18] sm:%s1511]
                  %1535 = vst [vmem:[%s1521 + $0x18] sm:%s1511] %v1534
                  %v1536 = vld [vmem:[%s1520 + $0x1c] sm:%s1511]
                  %1537 = vst [vmem:[%s1521 + $0x1c] sm:%s1511] %v1536
                  %v1538 = vld [vmem:[%s1520 + $0x20] sm:%s1511]
                  %1539 = vst [vmem:[%s1521 + $0x20] sm:%s1511] %v1538
                  %v1540 = vld [vmem:[%s1520 + $0x24] sm:%s1511]
                  %1541 = vst [vmem:[%s1521 + $0x24] sm:%s1511] %v1540
                  %v1542 = vld [vmem:[%s1520 + $0x28] sm:%s1511]
                  %1543 = vst [vmem:[%s1521 + $0x28] sm:%s1511] %v1542
                  %v1544 = vld [vmem:[%s1520 + $0x2c] sm:%s1511]
                  %1545 = vst [vmem:[%s1521 + $0x2c] sm:%s1511] %v1544
                  %v1546 = vld [vmem:[%s1520 + $0x30] sm:%s1511]
                  %1547 = vst [vmem:[%s1521 + $0x30] sm:%s1511] %v1546
                  %v1548 = vld [vmem:[%s1520 + $0x34] sm:%s1511]
                  %1549 = vst [vmem:[%s1521 + $0x34] sm:%s1511] %v1548
                  %v1550 = vld [vmem:[%s1520 + $0x38] sm:%s1511]
                  %1551 = vst [vmem:[%s1521 + $0x38] sm:%s1511] %v1550
                  %v1552 = vld [vmem:[%s1520 + $0x3c] sm:%s1511]
                  %1553 = vst [vmem:[%s1521 + $0x3c] sm:%s1511] %v1552
                  %v1554 = vld [vmem:[%s1520 + $0x40] sm:%s1511]
                  %1555 = vst [vmem:[%s1521 + $0x40] sm:%s1511] %v1554
                  %v1556 = vld [vmem:[%s1520 + $0x44] sm:%s1511]
                  %1557 = vst [vmem:[%s1521 + $0x44] sm:%s1511] %v1556
                  %v1558 = vld [vmem:[%s1520 + $0x48] sm:%s1511]
                  %1559 = vst [vmem:[%s1521 + $0x48] sm:%s1511] %v1558
                  %v1560 = vld [vmem:[%s1520 + $0x4c] sm:%s1511]
                  %1561 = vst [vmem:[%s1521 + $0x4c] sm:%s1511] %v1560
                  %v1562 = vld [vmem:[%s1520 + $0x50] sm:%s1511]
                  %1563 = vst [vmem:[%s1521 + $0x50] sm:%s1511] %v1562
                  %v1564 = vld [vmem:[%s1520 + $0x54] sm:%s1511]
                  %1565 = vst [vmem:[%s1521 + $0x54] sm:%s1511] %v1564
                  %v1566 = vld [vmem:[%s1520 + $0x58] sm:%s1511]
                  %1567 = vst [vmem:[%s1521 + $0x58] sm:%s1511] %v1566
                  %v1568 = vld [vmem:[%s1520 + $0x5c] sm:%s1511]
                  %1569 = vst [vmem:[%s1521 + $0x5c] sm:%s1511] %v1568
                  %v1570 = vld [vmem:[%s1520 + $0x60] sm:%s1511]
                  %1571 = vst [vmem:[%s1521 + $0x60] sm:%s1511] %v1570
                  %v1572 = vld [vmem:[%s1520 + $0x64] sm:%s1511]
                  %1573 = vst [vmem:[%s1521 + $0x64] sm:%s1511] %v1572
                  %v1574 = vld [vmem:[%s1520 + $0x68] sm:%s1511]
                  %1575 = vst [vmem:[%s1521 + $0x68] sm:%s1511] %v1574
                  %v1576 = vld [vmem:[%s1520 + $0x6c] sm:%s1511]
                  %1577 = vst [vmem:[%s1521 + $0x6c] sm:%s1511] %v1576
                  %v1578 = vld [vmem:[%s1520 + $0x70] sm:%s1511]
                  %1579 = vst [vmem:[%s1521 + $0x70] sm:%s1511] %v1578
                  %v1580 = vld [vmem:[%s1520 + $0x74] sm:%s1511]
                  %1581 = vst [vmem:[%s1521 + $0x74] sm:%s1511] %v1580
                  %v1582 = vld [vmem:[%s1520 + $0x78] sm:%s1511]
                  %1583 = vst [vmem:[%s1521 + $0x78] sm:%s1511] %v1582
                  %v1584 = vld [vmem:[%s1520 + $0x7c] sm:%s1511]
                  %1585 = vst [vmem:[%s1521 + $0x7c] sm:%s1511] %v1584
                  %s1586 = sadd.s32 1, %s1519
                  %p1587 = scmp.ge.s32.totalorder %s1586, %s1512
                  %s1588 = scalar_select %p1587, 0, %s1586
                  %s1589 = smul.u32 %s1588, 128
                  %s1590 = smul.u32 %s1588, 128
                  %s1591 = scalar_lea.vmem %s1381, %s1589 [#allocation2]
                  %s1592 = scalar_lea.vmem %s1392, %s1590
                $region71: #{dqn_forward.3} parent=65 // loop_footer
                  %s1516 = sadd.s32 %s1514, 1
                $region72: #{dqn_forward.3} parent=65 // loop_footer_branch
                  %1513 = sbr.rel target = $region68
                $region73: #{dqn_forward.3} parent=65 // loop_exit
                  _
                %s1593 = sshrl.u32 %s1388, 5
                %s1594 = sand.u32 %s1388, 31
                %s1595 = smul.u32 %s1593, 32
                %s1596 = smul.u32 4, %s1595
                %s1597 = scalar_lea.vmem %s1381, %s1596 [#allocation2]
                %s1598 = smul.u32 4, %s1595
                %s1599 = scalar_lea.vmem %s1392, %s1598
                // While loop
                $region74: #{dqn_forward.3} parent=65 // loop_pre_header
                  _
                $region75: #{dqn_forward.3} parent=65 // loop_header
                  %s1601 = sphi 0, %s1603
                  %p1602 = scmp.ge.s32.totalorder %s1601, %s1594
                  %s1606 = sphi 0, %s1613
                  %s1607 = sphi %s1597, %s1616
                  %s1608 = sphi %s1599, %s1617
                $region76: #{dqn_forward.3} parent=65 // loop_header_branch
                  %1605 = sbr.rel (%p1602) target = $region80
                $region77: #{dqn_forward.3} parent=65 // loop_body
                  %v1609 = vld [vmem:[%s1607] sm:%s1511]
                  %1610 = vst [vmem:[%s1608] sm:%s1511] %v1609
                  %s1611 = sadd.s32 1, %s1606
                  %p1612 = scmp.ge.s32.totalorder %s1611, %s1594
                  %s1613 = scalar_select %p1612, 0, %s1611
                  %s1614 = smul.u32 %s1613, 4
                  %s1615 = smul.u32 %s1613, 4
                  %s1616 = scalar_lea.vmem %s1597, %s1614 [#allocation2]
                  %s1617 = scalar_lea.vmem %s1599, %s1615
                $region78: #{dqn_forward.3} parent=65 // loop_footer
                  %s1603 = sadd.s32 %s1601, 1
                $region79: #{dqn_forward.3} parent=65 // loop_footer_branch
                  %1600 = sbr.rel target = $region75
                $region80: #{dqn_forward.3} parent=65 // loop_exit
                  _
              $region66: #{dqn_forward.3} parent=43 // pred_fallthru
                _
            $region44: #{dqn_forward.3} parent=39 // pred_fallthru
              _
            // Predicated region
            $region45: #{dqn_forward.3} parent=39 // pred_check
              _
            $region46: #{dqn_forward.3} parent=39 // pred_check_branch
              %1399 = sbr.rel (0) target = $region48
            $region47: #{dqn_forward.3} parent=39 // pred_region
              %s1401 = ssub.s32 16, 1
              %s1402 = sshrl.u32 %s1388, 5
              // While loop
              $region49: #{dqn_forward.3} parent=47 // loop_pre_header
                _
              $region50: #{dqn_forward.3} parent=47 // loop_header
                %s1404 = sphi 0, %s1406
                %p1405 = scmp.ge.s32.totalorder %s1404, %s1402
                %s1409 = sphi 0, %s1478
                %s1410 = sphi %s1381, %s1481
                %s1411 = sphi %s1392, %s1482
              $region51: #{dqn_forward.3} parent=47 // loop_header_branch
                %1408 = sbr.rel (%p1405) target = $region55
              $region52: #{dqn_forward.3} parent=47 // loop_body
                %v1412 = vld [vmem:[%s1410] sm:%s1401]
                %1413 = vst [vmem:[%s1411] sm:%s1401] %v1412
                %v1414 = vld [vmem:[%s1410 + $0x4] sm:%s1401]
                %1415 = vst [vmem:[%s1411 + $0x4] sm:%s1401] %v1414
                %v1416 = vld [vmem:[%s1410 + $0x8] sm:%s1401]
                %1417 = vst [vmem:[%s1411 + $0x8] sm:%s1401] %v1416
                %v1418 = vld [vmem:[%s1410 + $0xc] sm:%s1401]
                %1419 = vst [vmem:[%s1411 + $0xc] sm:%s1401] %v1418
                %v1420 = vld [vmem:[%s1410 + $0x10] sm:%s1401]
                %1421 = vst [vmem:[%s1411 + $0x10] sm:%s1401] %v1420
                %v1422 = vld [vmem:[%s1410 + $0x14] sm:%s1401]
                %1423 = vst [vmem:[%s1411 + $0x14] sm:%s1401] %v1422
                %v1424 = vld [vmem:[%s1410 + $0x18] sm:%s1401]
                %1425 = vst [vmem:[%s1411 + $0x18] sm:%s1401] %v1424
                %v1426 = vld [vmem:[%s1410 + $0x1c] sm:%s1401]
                %1427 = vst [vmem:[%s1411 + $0x1c] sm:%s1401] %v1426
                %v1428 = vld [vmem:[%s1410 + $0x20] sm:%s1401]
                %1429 = vst [vmem:[%s1411 + $0x20] sm:%s1401] %v1428
                %v1430 = vld [vmem:[%s1410 + $0x24] sm:%s1401]
                %1431 = vst [vmem:[%s1411 + $0x24] sm:%s1401] %v1430
                %v1432 = vld [vmem:[%s1410 + $0x28] sm:%s1401]
                %1433 = vst [vmem:[%s1411 + $0x28] sm:%s1401] %v1432
                %v1434 = vld [vmem:[%s1410 + $0x2c] sm:%s1401]
                %1435 = vst [vmem:[%s1411 + $0x2c] sm:%s1401] %v1434
                %v1436 = vld [vmem:[%s1410 + $0x30] sm:%s1401]
                %1437 = vst [vmem:[%s1411 + $0x30] sm:%s1401] %v1436
                %v1438 = vld [vmem:[%s1410 + $0x34] sm:%s1401]
                %1439 = vst [vmem:[%s1411 + $0x34] sm:%s1401] %v1438
                %v1440 = vld [vmem:[%s1410 + $0x38] sm:%s1401]
                %1441 = vst [vmem:[%s1411 + $0x38] sm:%s1401] %v1440
                %v1442 = vld [vmem:[%s1410 + $0x3c] sm:%s1401]
                %1443 = vst [vmem:[%s1411 + $0x3c] sm:%s1401] %v1442
                %v1444 = vld [vmem:[%s1410 + $0x40] sm:%s1401]
                %1445 = vst [vmem:[%s1411 + $0x40] sm:%s1401] %v1444
                %v1446 = vld [vmem:[%s1410 + $0x44] sm:%s1401]
                %1447 = vst [vmem:[%s1411 + $0x44] sm:%s1401] %v1446
                %v1448 = vld [vmem:[%s1410 + $0x48] sm:%s1401]
                %1449 = vst [vmem:[%s1411 + $0x48] sm:%s1401] %v1448
                %v1450 = vld [vmem:[%s1410 + $0x4c] sm:%s1401]
                %1451 = vst [vmem:[%s1411 + $0x4c] sm:%s1401] %v1450
                %v1452 = vld [vmem:[%s1410 + $0x50] sm:%s1401]
                %1453 = vst [vmem:[%s1411 + $0x50] sm:%s1401] %v1452
                %v1454 = vld [vmem:[%s1410 + $0x54] sm:%s1401]
                %1455 = vst [vmem:[%s1411 + $0x54] sm:%s1401] %v1454
                %v1456 = vld [vmem:[%s1410 + $0x58] sm:%s1401]
                %1457 = vst [vmem:[%s1411 + $0x58] sm:%s1401] %v1456
                %v1458 = vld [vmem:[%s1410 + $0x5c] sm:%s1401]
                %1459 = vst [vmem:[%s1411 + $0x5c] sm:%s1401] %v1458
                %v1460 = vld [vmem:[%s1410 + $0x60] sm:%s1401]
                %1461 = vst [vmem:[%s1411 + $0x60] sm:%s1401] %v1460
                %v1462 = vld [vmem:[%s1410 + $0x64] sm:%s1401]
                %1463 = vst [vmem:[%s1411 + $0x64] sm:%s1401] %v1462
                %v1464 = vld [vmem:[%s1410 + $0x68] sm:%s1401]
                %1465 = vst [vmem:[%s1411 + $0x68] sm:%s1401] %v1464
                %v1466 = vld [vmem:[%s1410 + $0x6c] sm:%s1401]
                %1467 = vst [vmem:[%s1411 + $0x6c] sm:%s1401] %v1466
                %v1468 = vld [vmem:[%s1410 + $0x70] sm:%s1401]
                %1469 = vst [vmem:[%s1411 + $0x70] sm:%s1401] %v1468
                %v1470 = vld [vmem:[%s1410 + $0x74] sm:%s1401]
                %1471 = vst [vmem:[%s1411 + $0x74] sm:%s1401] %v1470
                %v1472 = vld [vmem:[%s1410 + $0x78] sm:%s1401]
                %1473 = vst [vmem:[%s1411 + $0x78] sm:%s1401] %v1472
                %v1474 = vld [vmem:[%s1410 + $0x7c] sm:%s1401]
                %1475 = vst [vmem:[%s1411 + $0x7c] sm:%s1401] %v1474
                %s1476 = sadd.s32 1, %s1409
                %p1477 = scmp.ge.s32.totalorder %s1476, %s1402
                %s1478 = scalar_select %p1477, 0, %s1476
                %s1479 = smul.u32 %s1478, 128
                %s1480 = smul.u32 %s1478, 128
                %s1481 = scalar_lea.vmem %s1381, %s1479 [#allocation2]
                %s1482 = scalar_lea.vmem %s1392, %s1480
              $region53: #{dqn_forward.3} parent=47 // loop_footer
                %s1406 = sadd.s32 %s1404, 1
              $region54: #{dqn_forward.3} parent=47 // loop_footer_branch
                %1403 = sbr.rel target = $region50
              $region55: #{dqn_forward.3} parent=47 // loop_exit
                _
              %s1483 = sshrl.u32 %s1388, 5
              %s1484 = sand.u32 %s1388, 31
              %s1485 = smul.u32 %s1483, 32
              %s1486 = smul.u32 4, %s1485
              %s1487 = scalar_lea.vmem %s1381, %s1486 [#allocation2]
              %s1488 = smul.u32 4, %s1485
              %s1489 = scalar_lea.vmem %s1392, %s1488
              // While loop
              $region56: #{dqn_forward.3} parent=47 // loop_pre_header
                _
              $region57: #{dqn_forward.3} parent=47 // loop_header
                %s1491 = sphi 0, %s1493
                %p1492 = scmp.ge.s32.totalorder %s1491, %s1484
                %s1496 = sphi 0, %s1503
                %s1497 = sphi %s1487, %s1506
                %s1498 = sphi %s1489, %s1507
              $region58: #{dqn_forward.3} parent=47 // loop_header_branch
                %1495 = sbr.rel (%p1492) target = $region62
              $region59: #{dqn_forward.3} parent=47 // loop_body
                %v1499 = vld [vmem:[%s1497] sm:%s1401]
                %1500 = vst [vmem:[%s1498] sm:%s1401] %v1499
                %s1501 = sadd.s32 1, %s1496
                %p1502 = scmp.ge.s32.totalorder %s1501, %s1484
                %s1503 = scalar_select %p1502, 0, %s1501
                %s1504 = smul.u32 %s1503, 4
                %s1505 = smul.u32 %s1503, 4
                %s1506 = scalar_lea.vmem %s1487, %s1504 [#allocation2]
                %s1507 = scalar_lea.vmem %s1489, %s1505
              $region60: #{dqn_forward.3} parent=47 // loop_footer
                %s1493 = sadd.s32 %s1491, 1
              $region61: #{dqn_forward.3} parent=47 // loop_footer_branch
                %1490 = sbr.rel target = $region57
              $region62: #{dqn_forward.3} parent=47 // loop_exit
                _
            $region48: #{dqn_forward.3} parent=39 // pred_fallthru
              _
          $region40: #{dqn_forward.3} parent=35 // pred_fallthru
            _
          %1618 = vnop
        $region36: #{dqn_forward.3} parent=31 // pred_fallthru
          _
      $region32: #{dqn_forward.3} parent=5 // pred_fallthru
        _
      %p1619 = scmp.le.s32.totalorder 2, %s9
      // Predicated region
      $region81: #{dqn_forward.3} parent=5 // pred_check
        %p1620 = pneg %p1619
      $region82: #{dqn_forward.3} parent=5 // pred_check_branch
        %1622 = sbr.rel (%p1620) target = $region84
      $region83: #{dqn_forward.3} parent=5 // pred_region
        %s1623 = ssub.s32 %s9, 2
        // Predicated region
        $region85: #{dqn_forward.3} parent=83 // pred_check
          %p1624 = pneg %p106
        $region86: #{dqn_forward.3} parent=83 // pred_check_branch
          %1626 = sbr.rel (%p1624) target = $region88
        $region87: #{dqn_forward.3} parent=83 // pred_region
          %s1627 = sand.u32 %s91, 1
          %s1628 = sand.u32 %s91, 1
          %s1629 = smul.addr %s1628, 292
          %s1630 = scalar_lea.vmem [#allocation2], %s1629
        $region88: #{dqn_forward.3} parent=83 // pred_fallthru
          _
      $region84: #{dqn_forward.3} parent=5 // pred_fallthru
        _
    $region6: #{dqn_forward.3} parent=1 // loop_footer
      %s13 = sadd.s32 1, %s9
    $region7: #{dqn_forward.3} parent=1 // loop_footer_branch
      %8 = sbr.rel target = $region3
    $region8: #{dqn_forward.3} parent=1 // loop_exit
      _

// kernel: dqn_forward.4
$region0: #{dqn_forward.4}
  #allocation0 [shape = 'u32[]', space=smem, size = 0x4, offset = 0x4, fixed_abs, tag = 'smem constant byte address 0x4 - core index']
  #allocation1 [shape = 'u32[72,128]{1,0:T(1,128)}', space=vmem, size = 0x9000, scoped, tag = 'internal scratch']
  %s0 = inlined_call_operand.vmem [shape: bf16[208,400], index: 0, kind: input, shape index: {}]
  %s1 = inlined_call_operand.vmem [shape: bf16[400,32], index: 1, kind: input, shape index: {}]
  %s2 = inlined_call_operand.vmem [shape: f32[1,32], index: 2, kind: input, shape index: {}]
  %s3 = inlined_call_operand.vmem [shape: bf16[208,32], index: 3, kind: output, shape index: {}]
  %s4 = sld [smem:[#allocation0]]
  $region22: #{dqn_forward.4} parent=0
    _
  %s6 = ssub.s32 1, %s4
  %s7 = scalar_select 0, %s6, %s4
  // Predicated region
  $region2: #{dqn_forward.4} parent=0 // pred_check
    _
  $region3: #{dqn_forward.4} parent=0 // pred_check_branch
    %9 = sbr.rel (0) target = $region5
  $region4: #{dqn_forward.4} parent=0 // pred_region
    _
  $region5: #{dqn_forward.4} parent=0 // pred_fallthru
    _
  // Predicated region
  $region6: #{dqn_forward.4} parent=0 // pred_check
    _
  $region7: #{dqn_forward.4} parent=0 // pred_check_branch
    %11 = sbr.rel (0) target = $region9
  $region8: #{dqn_forward.4} parent=0 // pred_region
    _
  $region9: #{dqn_forward.4} parent=0 // pred_fallthru
    _
  // Predicated region
  $region10: #{dqn_forward.4} parent=0 // pred_check
    _
  $region11: #{dqn_forward.4} parent=0 // pred_check_branch
    %13 = sbr.rel (0) target = $region13
  $region12: #{dqn_forward.4} parent=0 // pred_region
    _
  $region13: #{dqn_forward.4} parent=0 // pred_fallthru
    _
  %v15 = vld [vmem:[%s0] sm:$0xff]
  %v16 = vld [vmem:[%s0 + $0x8] sm:$0xff]
  %v17 = vld [vmem:[%s0 + $0x10] sm:$0xff]
  %v18 = vld [vmem:[%s0 + $0x18] sm:$0xff]
  %v19 = vld [vmem:[%s0 + $0x20] sm:$0xff]
  %v20 = vld [vmem:[%s0 + $0x28] sm:$0xff]
  %v21 = vld [vmem:[%s0 + $0x30] sm:$0xff]
  %v22 = vld [vmem:[%s0 + $0x38] sm:$0xff]
  %v23 = vld [vmem:[%s0 + $0x40] sm:$0xff]
  %v24 = vld [vmem:[%s0 + $0x48] sm:$0xff]
  %v25 = vld [vmem:[%s0 + $0x50] sm:$0xff]
  %v26 = vld [vmem:[%s0 + $0x58] sm:$0xff]
  %v27 = vld [vmem:[%s0 + $0x60] sm:$0xff]
  %v28 = vld [vmem:[%s0 + $0x68] sm:$0xff]
  %v29 = vld [vmem:[%s0 + $0x70] sm:$0xff]
  %v30 = vld [vmem:[%s0 + $0x78] sm:$0xff]
  %v31 = vld [vmem:[%s0 + $0x80] sm:$0xff]
  %v32 = vld [vmem:[%s0 + $0x88] sm:$0xff]
  %v33 = vld [vmem:[%s0 + $0x90] sm:$0xff]
  %v34 = vld [vmem:[%s0 + $0x98] sm:$0xff]
  %v35 = vld [vmem:[%s0 + $0xa0] sm:$0xff]
  %v36 = vld [vmem:[%s0 + $0xa8] sm:$0xff]
  %v37 = vld [vmem:[%s0 + $0xb0] sm:$0xff]
  %v38 = vld [vmem:[%s0 + $0xb8] sm:$0xff]
  %v39 = vld [vmem:[%s0 + $0xc0] sm:$0xff]
  %v40 = vld [vmem:[%s0 + $0xc8] sm:$0xff]
  %v41 = vld [vmem:[%s0 + $0xd0] sm:$0xff]
  %v42 = vld [vmem:[%s0 + $0xd8] sm:$0xff]
  %v43 = vld [vmem:[%s0 + $0xe0] sm:$0xff]
  %v44 = vld [vmem:[%s0 + $0xe8] sm:$0xff]
  %v45 = vld [vmem:[%s0 + $0xf0] sm:$0xff]
  %v46 = vld [vmem:[%s0 + $0xf8] sm:$0xff]
  %v47 = vld [vmem:[%s0 + $0x100] sm:$0xff]
  %v48 = vld [vmem:[%s0 + $0x108] sm:$0xff]
  %v49 = vld [vmem:[%s0 + $0x110] sm:$0xff]
  %v50 = vld [vmem:[%s0 + $0x118] sm:$0xff]
  %v51 = vld [vmem:[%s0 + $0x120] sm:$0xff]
  %v52 = vld [vmem:[%s0 + $0x128] sm:$0xff]
  %v53 = vld [vmem:[%s0 + $0x130] sm:$0xff]
  %v54 = vld [vmem:[%s0 + $0x138] sm:$0xff]
  %v55 = vld [vmem:[%s0 + $0x140] sm:$0xff]
  %v56 = vld [vmem:[%s0 + $0x148] sm:$0xff]
  %v57 = vld [vmem:[%s0 + $0x150] sm:$0xff]
  %v58 = vld [vmem:[%s0 + $0x158] sm:$0xff]
  %v59 = vld [vmem:[%s0 + $0x160] sm:$0xff]
  %v60 = vld [vmem:[%s0 + $0x168] sm:$0xff]
  %v61 = vld [vmem:[%s0 + $0x170] sm:$0xff]
  %v62 = vld [vmem:[%s0 + $0x178] sm:$0xff]
  %v63 = vld [vmem:[%s0 + $0x180] sm:$0xff]
  %v64 = vld [vmem:[%s0 + $0x188] sm:$0xff]
  %v65 = vld [vmem:[%s0 + $0x190] sm:$0xff]
  %v66 = vld [vmem:[%s0 + $0x198] sm:$0xff]
  %v67 = vld [vmem:[%s1] sm:$0xf]
  %v68 = vld [vmem:[%s1 + $0x4] sm:$0xf]
  %v69 = vld [vmem:[%s1 + $0x8] sm:$0xf]
  %v70 = vld [vmem:[%s1 + $0xc] sm:$0xf]
  %v71 = vld [vmem:[%s1 + $0x10] sm:$0xf]
  %v72 = vld [vmem:[%s1 + $0x14] sm:$0xf]
  %v73 = vld [vmem:[%s1 + $0x18] sm:$0xf]
  %v74 = vld [vmem:[%s1 + $0x1c] sm:$0xf]
  %v75 = vld [vmem:[%s1 + $0x20] sm:$0xf]
  %v76 = vld [vmem:[%s1 + $0x24] sm:$0xf]
  %v77 = vld [vmem:[%s1 + $0x28] sm:$0xf]
  %v78 = vld [vmem:[%s1 + $0x2c] sm:$0xf]
  %v79 = vld [vmem:[%s1 + $0x30] sm:$0xf]
  %v80 = vld [vmem:[%s1 + $0x34] sm:$0xf]
  %v81 = vld [vmem:[%s1 + $0x38] sm:$0xf]
  %v82 = vld [vmem:[%s1 + $0x3c] sm:$0xf]
  %v83 = vld [vmem:[%s1 + $0x40] sm:$0xf]
  %v84 = vld [vmem:[%s1 + $0x44] sm:$0xf]
  %v85 = vld [vmem:[%s1 + $0x48] sm:$0xf]
  %v86 = vld [vmem:[%s1 + $0x4c] sm:$0xf]
  %v87 = vld [vmem:[%s1 + $0x50] sm:$0xf]
  %v88 = vld [vmem:[%s1 + $0x54] sm:$0xf]
  %v89 = vld [vmem:[%s1 + $0x58] sm:$0xf]
  %v90 = vld [vmem:[%s1 + $0x5c] sm:$0xf]
  %v91 = vld [vmem:[%s1 + $0x60] sm:$0xf]
  %v92 = vld [vmem:[%s1 + $0x64] sm:$0xf]
  %v93 = vld [vmem:[%s1 + $0x68] sm:$0xf]
  %v94 = vld [vmem:[%s1 + $0x6c] sm:$0xf]
  %v95 = vld [vmem:[%s1 + $0x70] sm:$0xf]
  %v96 = vld [vmem:[%s1 + $0x74] sm:$0xf]
  %v97 = vld [vmem:[%s1 + $0x78] sm:$0xf]
  %v98 = vld [vmem:[%s1 + $0x7c] sm:$0xf]
  %v99 = vld [vmem:[%s1 + $0x80] sm:$0xf]
  %v100 = vld [vmem:[%s1 + $0x84] sm:$0xf]
  %v101 = vld [vmem:[%s1 + $0x88] sm:$0xf]
  %v102 = vld [vmem:[%s1 + $0x8c] sm:$0xf]
  %v103 = vld [vmem:[%s1 + $0x90] sm:$0xf]
  %v104 = vld [vmem:[%s1 + $0x94] sm:$0xf]
  %v105 = vld [vmem:[%s1 + $0x98] sm:$0xf]
  %v106 = vld [vmem:[%s1 + $0x9c] sm:$0xf]
  %v107 = vld [vmem:[%s1 + $0xa0] sm:$0xf]
  %v108 = vld [vmem:[%s1 + $0xa4] sm:$0xf]
  %v109 = vld [vmem:[%s1 + $0xa8] sm:$0xf]
  %v110 = vld [vmem:[%s1 + $0xac] sm:$0xf]
  %v111 = vld [vmem:[%s1 + $0xb0] sm:$0xf]
  %v112 = vld [vmem:[%s1 + $0xb4] sm:$0xf]
  %v113 = vld [vmem:[%s1 + $0xb8] sm:$0xf]
  %v114 = vld [vmem:[%s1 + $0xbc] sm:$0xf]
  %v115 = vld [vmem:[%s1 + $0xc0] sm:$0xf]
  %v116 = vld [vmem:[%s1 + $0xc4] sm:$0xf]
  %v117 = vld [vmem:[%s2] sm:$0x1]
  %v119 = vperm.slane %v117, 0
  %v173 = vunpack.c.l.b16 %v15
  %v174 = vunpack.c.h.b16 %v15
  %v175 = vunpack.c.l.b16 %v16
  %v176 = vunpack.c.h.b16 %v16
  %v177 = vunpack.c.l.b16 %v17
  %v178 = vunpack.c.h.b16 %v17
  %v179 = vunpack.c.l.b16 %v18
  %v180 = vunpack.c.h.b16 %v18
  %v181 = vunpack.c.l.b16 %v19
  %v182 = vunpack.c.h.b16 %v19
  %v183 = vunpack.c.l.b16 %v20
  %v184 = vunpack.c.h.b16 %v20
  %v185 = vunpack.c.l.b16 %v21
  %v186 = vunpack.c.h.b16 %v21
  %v187 = vunpack.c.l.b16 %v22
  %v188 = vunpack.c.h.b16 %v22
  %v189 = vunpack.c.l.b16 %v23
  %v190 = vunpack.c.h.b16 %v23
  %v191 = vunpack.c.l.b16 %v24
  %v192 = vunpack.c.h.b16 %v24
  %v193 = vunpack.c.l.b16 %v25
  %v194 = vunpack.c.h.b16 %v25
  %v195 = vunpack.c.l.b16 %v26
  %v196 = vunpack.c.h.b16 %v26
  %v197 = vunpack.c.l.b16 %v27
  %v198 = vunpack.c.h.b16 %v27
  %v199 = vunpack.c.l.b16 %v28
  %v200 = vunpack.c.h.b16 %v28
  %v201 = vunpack.c.l.b16 %v29
  %v202 = vunpack.c.h.b16 %v29
  %v203 = vunpack.c.l.b16 %v30
  %v204 = vunpack.c.h.b16 %v30
  %v205 = vunpack.c.l.b16 %v31
  %v206 = vunpack.c.h.b16 %v31
  %v207 = vunpack.c.l.b16 %v32
  %v208 = vunpack.c.h.b16 %v32
  %v209 = vunpack.c.l.b16 %v33
  %v210 = vunpack.c.h.b16 %v33
  %v211 = vunpack.c.l.b16 %v34
  %v212 = vunpack.c.h.b16 %v34
  %v213 = vunpack.c.l.b16 %v35
  %v214 = vunpack.c.h.b16 %v35
  %v215 = vunpack.c.l.b16 %v36
  %v216 = vunpack.c.h.b16 %v36
  %v217 = vunpack.c.l.b16 %v37
  %v218 = vunpack.c.h.b16 %v37
  %v219 = vunpack.c.l.b16 %v38
  %v220 = vunpack.c.h.b16 %v38
  %v221 = vunpack.c.l.b16 %v39
  %v222 = vunpack.c.h.b16 %v39
  %v223 = vunpack.c.l.b16 %v40
  %v224 = vunpack.c.h.b16 %v40
  %v225 = vunpack.c.l.b16 %v41
  %v226 = vunpack.c.h.b16 %v41
  %v227 = vunpack.c.l.b16 %v42
  %v228 = vunpack.c.h.b16 %v42
  %v229 = vunpack.c.l.b16 %v43
  %v230 = vunpack.c.h.b16 %v43
  %v231 = vunpack.c.l.b16 %v44
  %v232 = vunpack.c.h.b16 %v44
  %v233 = vunpack.c.l.b16 %v45
  %v234 = vunpack.c.h.b16 %v45
  %v235 = vunpack.c.l.b16 %v46
  %v236 = vunpack.c.h.b16 %v46
  %v237 = vunpack.c.l.b16 %v47
  %v238 = vunpack.c.h.b16 %v47
  %v239 = vunpack.c.l.b16 %v48
  %v240 = vunpack.c.h.b16 %v48
  %v241 = vunpack.c.l.b16 %v49
  %v242 = vunpack.c.h.b16 %v49
  %v243 = vunpack.c.l.b16 %v50
  %v244 = vunpack.c.h.b16 %v50
  %v245 = vunpack.c.l.b16 %v51
  %v246 = vunpack.c.h.b16 %v51
  %v247 = vunpack.c.l.b16 %v52
  %v248 = vunpack.c.h.b16 %v52
  %v249 = vunpack.c.l.b16 %v53
  %v250 = vunpack.c.h.b16 %v53
  %v251 = vunpack.c.l.b16 %v54
  %v252 = vunpack.c.h.b16 %v54
  %v253 = vunpack.c.l.b16 %v55
  %v254 = vunpack.c.h.b16 %v55
  %v255 = vunpack.c.l.b16 %v56
  %v256 = vunpack.c.h.b16 %v56
  %v257 = vunpack.c.l.b16 %v57
  %v258 = vunpack.c.h.b16 %v57
  %v259 = vunpack.c.l.b16 %v58
  %v260 = vunpack.c.h.b16 %v58
  %v261 = vunpack.c.l.b16 %v59
  %v262 = vunpack.c.h.b16 %v59
  %v263 = vunpack.c.l.b16 %v60
  %v264 = vunpack.c.h.b16 %v60
  %v265 = vunpack.c.l.b16 %v61
  %v266 = vunpack.c.h.b16 %v61
  %v267 = vunpack.c.l.b16 %v62
  %v268 = vunpack.c.h.b16 %v62
  %v269 = vunpack.c.l.b16 %v63
  %v270 = vunpack.c.h.b16 %v63
  %v271 = vunpack.c.l.b16 %v64
  %v272 = vunpack.c.h.b16 %v64
  %v273 = vunpack.c.l.b16 %v65
  %v274 = vunpack.c.h.b16 %v65
  %v275 = vunpack.c.l.b16 %v66
  %v276 = vunpack.c.h.b16 %v66
  %v277 = vpack.c.b16 %v177, %v173
  %v278 = vpack.c.b16 %v178, %v174
  %v279 = vpack.c.b16 %v179, %v175
  %v280 = vpack.c.b16 %v180, %v176
  %v281 = vpack.c.b16 %v185, %v181
  %v282 = vpack.c.b16 %v186, %v182
  %v283 = vpack.c.b16 %v187, %v183
  %v284 = vpack.c.b16 %v188, %v184
  %v285 = vpack.c.b16 %v193, %v189
  %v286 = vpack.c.b16 %v194, %v190
  %v287 = vpack.c.b16 %v195, %v191
  %v288 = vpack.c.b16 %v196, %v192
  %v289 = vpack.c.b16 %v201, %v197
  %v290 = vpack.c.b16 %v202, %v198
  %v291 = vpack.c.b16 %v203, %v199
  %v292 = vpack.c.b16 %v204, %v200
  %v293 = vpack.c.b16 %v209, %v205
  %v294 = vpack.c.b16 %v210, %v206
  %v295 = vpack.c.b16 %v211, %v207
  %v296 = vpack.c.b16 %v212, %v208
  %v297 = vpack.c.b16 %v217, %v213
  %v298 = vpack.c.b16 %v218, %v214
  %v299 = vpack.c.b16 %v219, %v215
  %v300 = vpack.c.b16 %v220, %v216
  %v301 = vpack.c.b16 %v225, %v221
  %v302 = vpack.c.b16 %v226, %v222
  %v303 = vpack.c.b16 %v227, %v223
  %v304 = vpack.c.b16 %v228, %v224
  %v305 = vpack.c.b16 %v233, %v229
  %v306 = vpack.c.b16 %v234, %v230
  %v307 = vpack.c.b16 %v235, %v231
  %v308 = vpack.c.b16 %v236, %v232
  %v309 = vpack.c.b16 %v241, %v237
  %v310 = vpack.c.b16 %v242, %v238
  %v311 = vpack.c.b16 %v243, %v239
  %v312 = vpack.c.b16 %v244, %v240
  %v313 = vpack.c.b16 %v249, %v245
  %v314 = vpack.c.b16 %v250, %v246
  %v315 = vpack.c.b16 %v251, %v247
  %v316 = vpack.c.b16 %v252, %v248
  %v317 = vpack.c.b16 %v257, %v253
  %v318 = vpack.c.b16 %v258, %v254
  %v319 = vpack.c.b16 %v259, %v255
  %v320 = vpack.c.b16 %v260, %v256
  %v321 = vpack.c.b16 %v265, %v261
  %v322 = vpack.c.b16 %v266, %v262
  %v323 = vpack.c.b16 %v267, %v263
  %v324 = vpack.c.b16 %v268, %v264
  %v325 = vpack.c.b16 %v273, %v269
  %v326 = vpack.c.b16 %v274, %v270
  %v327 = vpack.c.b16 %v275, %v271
  %v328 = vpack.c.b16 %v276, %v272
  %v418 = vunpack.c.l.b16 %v67
  %v419 = vunpack.c.l.b16 %v68
  %v420 = vunpack.c.l.b16 %v69
  %v421 = vunpack.c.l.b16 %v70
  %v422 = vunpack.c.l.b16 %v71
  %v423 = vunpack.c.l.b16 %v72
  %v424 = vunpack.c.l.b16 %v73
  %v425 = vunpack.c.l.b16 %v74
  %v426 = vunpack.c.l.b16 %v75
  %v427 = vunpack.c.l.b16 %v76
  %v428 = vunpack.c.l.b16 %v77
  %v429 = vunpack.c.l.b16 %v78
  %v430 = vunpack.c.l.b16 %v79
  %v431 = vunpack.c.l.b16 %v80
  %v432 = vunpack.c.l.b16 %v81
  %v433 = vunpack.c.l.b16 %v82
  %v434 = vunpack.c.l.b16 %v83
  %v435 = vunpack.c.l.b16 %v84
  %v436 = vunpack.c.l.b16 %v85
  %v437 = vunpack.c.l.b16 %v86
  %v438 = vunpack.c.l.b16 %v87
  %v439 = vunpack.c.l.b16 %v88
  %v440 = vunpack.c.l.b16 %v89
  %v441 = vunpack.c.l.b16 %v90
  %v442 = vunpack.c.l.b16 %v91
  %v443 = vunpack.c.l.b16 %v92
  %v444 = vunpack.c.l.b16 %v93
  %v445 = vunpack.c.l.b16 %v94
  %v446 = vunpack.c.l.b16 %v95
  %v447 = vunpack.c.l.b16 %v96
  %v448 = vunpack.c.l.b16 %v97
  %v449 = vunpack.c.l.b16 %v98
  %v450 = vunpack.c.l.b16 %v99
  %v451 = vunpack.c.l.b16 %v100
  %v452 = vunpack.c.l.b16 %v101
  %v453 = vunpack.c.l.b16 %v102
  %v454 = vunpack.c.l.b16 %v103
  %v455 = vunpack.c.l.b16 %v104
  %v456 = vunpack.c.l.b16 %v105
  %v457 = vunpack.c.l.b16 %v106
  %v458 = vunpack.c.l.b16 %v107
  %v459 = vunpack.c.l.b16 %v108
  %v460 = vunpack.c.l.b16 %v109
  %v461 = vunpack.c.l.b16 %v110
  %v462 = vunpack.c.l.b16 %v111
  %v463 = vunpack.c.l.b16 %v112
  %v464 = vunpack.c.l.b16 %v113
  %v465 = vunpack.c.l.b16 %v114
  %v466 = vunpack.c.l.b16 %v115
  %v467 = vunpack.c.l.b16 %v116
  %v468 = vpack.c.b16 %v419, %v418
  %v469 = vpack.c.b16 %v421, %v420
  %v470 = vpack.c.b16 %v423, %v422
  %v471 = vpack.c.b16 %v425, %v424
  %v472 = vpack.c.b16 %v427, %v426
  %v473 = vpack.c.b16 %v429, %v428
  %v474 = vpack.c.b16 %v431, %v430
  %v475 = vpack.c.b16 %v433, %v432
  %v476 = vpack.c.b16 %v435, %v434
  %v477 = vpack.c.b16 %v437, %v436
  %v478 = vpack.c.b16 %v439, %v438
  %v479 = vpack.c.b16 %v441, %v440
  %v480 = vpack.c.b16 %v443, %v442
  %v481 = vpack.c.b16 %v445, %v444
  %v482 = vpack.c.b16 %v447, %v446
  %v483 = vpack.c.b16 %v449, %v448
  %v484 = vpack.c.b16 %v451, %v450
  %v485 = vpack.c.b16 %v453, %v452
  %v486 = vpack.c.b16 %v455, %v454
  %v487 = vpack.c.b16 %v457, %v456
  %v488 = vpack.c.b16 %v459, %v458
  %v489 = vpack.c.b16 %v461, %v460
  %v490 = vpack.c.b16 %v463, %v462
  %v491 = vpack.c.b16 %v465, %v464
  %v492 = vpack.c.b16 %v467, %v466
  %vm518 = vcmask 130048
  %v520 = vsel %vm518, %v280, 0
  %v523 = vsel %vm518, %v284, 0
  %v526 = vsel %vm518, %v288, 0
  %v529 = vsel %vm518, %v292, 0
  %v532 = vsel %vm518, %v296, 0
  %v535 = vsel %vm518, %v300, 0
  %v538 = vsel %vm518, %v304, 0
  %v541 = vsel %vm518, %v308, 0
  %v544 = vsel %vm518, %v312, 0
  %v547 = vsel %vm518, %v316, 0
  %v550 = vsel %vm518, %v320, 0
  %v553 = vsel %vm518, %v324, 0
  %v556 = vsel %vm518, %v328, 0
  %558 = vmatpush.bf16.msra.mxu0 %v475
  %559 = vmatpush.bf16.msra.mxu0 %v474
  %560 = vmatpush.bf16.msra.mxu0 %v473
  %561 = vmatpush.bf16.msra.mxu0 %v472
  %562 = vmatpush.bf16.msra.mxu0 %v471
  %563 = vmatpush.bf16.msra.mxu0 %v470
  %564 = vmatpush.bf16.msra.mxu0 %v469
  %565 = vmatpush.bf16.msra.mxu0 %v468
  %566 = vmatmul.bf16.gmra.mxu0 %v277
  %v567 = vpop.f32.mrf.mxu0
  %v568 = vadd.f32 %v119, %v567
  %v569 = vpop.f32.mrf.mxu0
  %v570 = vadd.f32 %v119, %v569
  %571 = vmatmul.bf16.gmra.mxu0 %v281
  %v572 = vpop.f32.mrf.mxu0
  %v573 = vadd.f32 %v119, %v572
  %v574 = vpop.f32.mrf.mxu0
  %v575 = vadd.f32 %v119, %v574
  %576 = vmatmul.bf16.gmra.mxu0 %v285
  %v577 = vpop.f32.mrf.mxu0
  %v578 = vadd.f32 %v119, %v577
  %v579 = vpop.f32.mrf.mxu0
  %v580 = vadd.f32 %v119, %v579
  %581 = vmatmul.bf16.gmra.mxu0 %v289
  %v582 = vpop.f32.mrf.mxu0
  %v583 = vadd.f32 %v119, %v582
  %v584 = vpop.f32.mrf.mxu0
  %v585 = vadd.f32 %v119, %v584
  %586 = vmatmul.bf16.gmra.mxu0 %v293
  %v587 = vpop.f32.mrf.mxu0
  %v588 = vadd.f32 %v119, %v587
  %v589 = vpop.f32.mrf.mxu0
  %v590 = vadd.f32 %v119, %v589
  %591 = vmatmul.bf16.gmra.mxu0 %v297
  %v592 = vpop.f32.mrf.mxu0
  %v593 = vadd.f32 %v119, %v592
  %v594 = vpop.f32.mrf.mxu0
  %v595 = vadd.f32 %v119, %v594
  %596 = vmatmul.bf16.gmra.mxu0 %v301
  %v597 = vpop.f32.mrf.mxu0
  %v598 = vadd.f32 %v119, %v597
  %v599 = vpop.f32.mrf.mxu0
  %v600 = vadd.f32 %v119, %v599
  %601 = vmatmul.bf16.gmra.mxu0 %v305
  %v602 = vpop.f32.mrf.mxu0
  %v603 = vadd.f32 %v119, %v602
  %v604 = vpop.f32.mrf.mxu0
  %v605 = vadd.f32 %v119, %v604
  %606 = vmatmul.bf16.gmra.mxu0 %v309
  %v607 = vpop.f32.mrf.mxu0
  %v608 = vadd.f32 %v119, %v607
  %v609 = vpop.f32.mrf.mxu0
  %v610 = vadd.f32 %v119, %v609
  %611 = vmatmul.bf16.gmra.mxu0 %v313
  %v612 = vpop.f32.mrf.mxu0
  %v613 = vadd.f32 %v119, %v612
  %v614 = vpop.f32.mrf.mxu0
  %v615 = vadd.f32 %v119, %v614
  %616 = vmatmul.bf16.gmra.mxu0 %v317
  %v617 = vpop.f32.mrf.mxu0
  %v618 = vadd.f32 %v119, %v617
  %v619 = vpop.f32.mrf.mxu0
  %v620 = vadd.f32 %v119, %v619
  %621 = vmatmul.bf16.gmra.mxu0 %v321
  %v622 = vpop.f32.mrf.mxu0
  %v623 = vadd.f32 %v119, %v622
  %v624 = vpop.f32.mrf.mxu0
  %v625 = vadd.f32 %v119, %v624
  %626 = vmatmul.bf16.gmra.mxu0 %v325
  %v627 = vpop.f32.mrf.mxu0
  %v628 = vadd.f32 %v119, %v627
  %v629 = vpop.f32.mrf.mxu0
  %v630 = vadd.f32 %v119, %v629
  %631 = vdwg.mxu0
  %632 = vmatpush.bf16.msra.mxu0 %v483
  %633 = vmatpush.bf16.msra.mxu0 %v482
  %634 = vmatpush.bf16.msra.mxu0 %v481
  %635 = vmatpush.bf16.msra.mxu0 %v480
  %636 = vmatpush.bf16.msra.mxu0 %v479
  %637 = vmatpush.bf16.msra.mxu0 %v478
  %638 = vmatpush.bf16.msra.mxu0 %v477
  %639 = vmatpush.bf16.msra.mxu0 %v476
  %640 = vmatmul.bf16.gmra.mxu0 %v278
  %v641 = vpop.f32.mrf.mxu0
  %v642 = vadd.f32 %v568, %v641
  %v643 = vpop.f32.mrf.mxu0
  %v644 = vadd.f32 %v570, %v643
  %645 = vmatmul.bf16.gmra.mxu0 %v282
  %v646 = vpop.f32.mrf.mxu0
  %v647 = vadd.f32 %v573, %v646
  %v648 = vpop.f32.mrf.mxu0
  %v649 = vadd.f32 %v575, %v648
  %650 = vmatmul.bf16.gmra.mxu0 %v286
  %v651 = vpop.f32.mrf.mxu0
  %v652 = vadd.f32 %v578, %v651
  %v653 = vpop.f32.mrf.mxu0
  %v654 = vadd.f32 %v580, %v653
  %655 = vmatmul.bf16.gmra.mxu0 %v290
  %v656 = vpop.f32.mrf.mxu0
  %v657 = vadd.f32 %v583, %v656
  %v658 = vpop.f32.mrf.mxu0
  %v659 = vadd.f32 %v585, %v658
  %660 = vmatmul.bf16.gmra.mxu0 %v294
  %v661 = vpop.f32.mrf.mxu0
  %v662 = vadd.f32 %v588, %v661
  %v663 = vpop.f32.mrf.mxu0
  %v664 = vadd.f32 %v590, %v663
  %665 = vmatmul.bf16.gmra.mxu0 %v298
  %v666 = vpop.f32.mrf.mxu0
  %v667 = vadd.f32 %v593, %v666
  %v668 = vpop.f32.mrf.mxu0
  %v669 = vadd.f32 %v595, %v668
  %670 = vmatmul.bf16.gmra.mxu0 %v302
  %v671 = vpop.f32.mrf.mxu0
  %v672 = vadd.f32 %v598, %v671
  %v673 = vpop.f32.mrf.mxu0
  %v674 = vadd.f32 %v600, %v673
  %675 = vmatmul.bf16.gmra.mxu0 %v306
  %v676 = vpop.f32.mrf.mxu0
  %v677 = vadd.f32 %v603, %v676
  %v678 = vpop.f32.mrf.mxu0
  %v679 = vadd.f32 %v605, %v678
  %680 = vmatmul.bf16.gmra.mxu0 %v310
  %v681 = vpop.f32.mrf.mxu0
  %v682 = vadd.f32 %v608, %v681
  %v683 = vpop.f32.mrf.mxu0
  %v684 = vadd.f32 %v610, %v683
  %685 = vmatmul.bf16.gmra.mxu0 %v314
  %v686 = vpop.f32.mrf.mxu0
  %v687 = vadd.f32 %v613, %v686
  %v688 = vpop.f32.mrf.mxu0
  %v689 = vadd.f32 %v615, %v688
  %690 = vmatmul.bf16.gmra.mxu0 %v318
  %v691 = vpop.f32.mrf.mxu0
  %v692 = vadd.f32 %v618, %v691
  %v693 = vpop.f32.mrf.mxu0
  %v694 = vadd.f32 %v620, %v693
  %695 = vmatmul.bf16.gmra.mxu0 %v322
  %v696 = vpop.f32.mrf.mxu0
  %v697 = vadd.f32 %v623, %v696
  %v698 = vpop.f32.mrf.mxu0
  %v699 = vadd.f32 %v625, %v698
  %700 = vmatmul.bf16.gmra.mxu0 %v326
  %v701 = vpop.f32.mrf.mxu0
  %v702 = vadd.f32 %v628, %v701
  %v703 = vpop.f32.mrf.mxu0
  %v704 = vadd.f32 %v630, %v703
  %705 = vdwg.mxu0
  %706 = vmatpush.bf16.msra.mxu0 %v491
  %707 = vmatpush.bf16.msra.mxu0 %v490
  %708 = vmatpush.bf16.msra.mxu0 %v489
  %709 = vmatpush.bf16.msra.mxu0 %v488
  %710 = vmatpush.bf16.msra.mxu0 %v487
  %711 = vmatpush.bf16.msra.mxu0 %v486
  %712 = vmatpush.bf16.msra.mxu0 %v485
  %713 = vmatpush.bf16.msra.mxu0 %v484
  %714 = vmatmul.bf16.gmra.mxu0 %v279
  %v715 = vpop.f32.mrf.mxu0
  %v716 = vadd.f32 %v642, %v715
  %v717 = vpop.f32.mrf.mxu0
  %v718 = vadd.f32 %v644, %v717
  %719 = vmatmul.bf16.gmra.mxu0 %v283
  %v720 = vpop.f32.mrf.mxu0
  %v721 = vadd.f32 %v647, %v720
  %v722 = vpop.f32.mrf.mxu0
  %v723 = vadd.f32 %v649, %v722
  %724 = vmatmul.bf16.gmra.mxu0 %v287
  %v725 = vpop.f32.mrf.mxu0
  %v726 = vadd.f32 %v652, %v725
  %v727 = vpop.f32.mrf.mxu0
  %v728 = vadd.f32 %v654, %v727
  %729 = vmatmul.bf16.gmra.mxu0 %v291
  %v730 = vpop.f32.mrf.mxu0
  %v731 = vadd.f32 %v657, %v730
  %v732 = vpop.f32.mrf.mxu0
  %v733 = vadd.f32 %v659, %v732
  %734 = vmatmul.bf16.gmra.mxu0 %v295
  %v735 = vpop.f32.mrf.mxu0
  %v736 = vadd.f32 %v662, %v735
  %v737 = vpop.f32.mrf.mxu0
  %v738 = vadd.f32 %v664, %v737
  %739 = vmatmul.bf16.gmra.mxu0 %v299
  %v740 = vpop.f32.mrf.mxu0
  %v741 = vadd.f32 %v667, %v740
  %v742 = vpop.f32.mrf.mxu0
  %v743 = vadd.f32 %v669, %v742
  %744 = vmatmul.bf16.gmra.mxu0 %v303
  %v745 = vpop.f32.mrf.mxu0
  %v746 = vadd.f32 %v672, %v745
  %v747 = vpop.f32.mrf.mxu0
  %v748 = vadd.f32 %v674, %v747
  %749 = vmatmul.bf16.gmra.mxu0 %v307
  %v750 = vpop.f32.mrf.mxu0
  %v751 = vadd.f32 %v677, %v750
  %v752 = vpop.f32.mrf.mxu0
  %v753 = vadd.f32 %v679, %v752
  %754 = vmatmul.bf16.gmra.mxu0 %v311
  %v755 = vpop.f32.mrf.mxu0
  %v756 = vadd.f32 %v682, %v755
  %v757 = vpop.f32.mrf.mxu0
  %v758 = vadd.f32 %v684, %v757
  %759 = vmatmul.bf16.gmra.mxu0 %v315
  %v760 = vpop.f32.mrf.mxu0
  %v761 = vadd.f32 %v687, %v760
  %v762 = vpop.f32.mrf.mxu0
  %v763 = vadd.f32 %v689, %v762
  %764 = vmatmul.bf16.gmra.mxu0 %v319
  %v765 = vpop.f32.mrf.mxu0
  %v766 = vadd.f32 %v692, %v765
  %v767 = vpop.f32.mrf.mxu0
  %v768 = vadd.f32 %v694, %v767
  %769 = vmatmul.bf16.gmra.mxu0 %v323
  %v770 = vpop.f32.mrf.mxu0
  %v771 = vadd.f32 %v697, %v770
  %v772 = vpop.f32.mrf.mxu0
  %v773 = vadd.f32 %v699, %v772
  %774 = vmatmul.bf16.gmra.mxu0 %v327
  %v775 = vpop.f32.mrf.mxu0
  %v776 = vadd.f32 %v702, %v775
  %v777 = vpop.f32.mrf.mxu0
  %v778 = vadd.f32 %v704, %v777
  %779 = vdwg.mxu0
  %780 = vmatpush.bf16.msra.mxu0 0
  %781 = vmatpush.bf16.msra.mxu0 0
  %782 = vmatpush.bf16.msra.mxu0 0
  %783 = vmatpush.bf16.msra.mxu0 0
  %784 = vmatpush.bf16.msra.mxu0 0
  %785 = vmatpush.bf16.msra.mxu0 0
  %786 = vmatpush.bf16.msra.mxu0 0
  %787 = vmatpush.bf16.msra.mxu0 %v492
  %788 = vmatmul.bf16.gmra.mxu0 %v520
  %v789 = vpop.f32.mrf.mxu0
  %v790 = vadd.f32 %v716, %v789
  %v791 = vpop.f32.mrf.mxu0
  %v792 = vadd.f32 %v718, %v791
  %793 = vmatmul.bf16.gmra.mxu0 %v523
  %v794 = vpop.f32.mrf.mxu0
  %v795 = vadd.f32 %v721, %v794
  %v796 = vpop.f32.mrf.mxu0
  %v797 = vadd.f32 %v723, %v796
  %798 = vmatmul.bf16.gmra.mxu0 %v526
  %v799 = vpop.f32.mrf.mxu0
  %v800 = vadd.f32 %v726, %v799
  %v801 = vpop.f32.mrf.mxu0
  %v802 = vadd.f32 %v728, %v801
  %803 = vmatmul.bf16.gmra.mxu0 %v529
  %v804 = vpop.f32.mrf.mxu0
  %v805 = vadd.f32 %v731, %v804
  %v806 = vpop.f32.mrf.mxu0
  %v807 = vadd.f32 %v733, %v806
  %808 = vmatmul.bf16.gmra.mxu0 %v532
  %v809 = vpop.f32.mrf.mxu0
  %v810 = vadd.f32 %v736, %v809
  %v811 = vpop.f32.mrf.mxu0
  %v812 = vadd.f32 %v738, %v811
  %813 = vmatmul.bf16.gmra.mxu0 %v535
  %v814 = vpop.f32.mrf.mxu0
  %v815 = vadd.f32 %v741, %v814
  %v816 = vpop.f32.mrf.mxu0
  %v817 = vadd.f32 %v743, %v816
  %818 = vmatmul.bf16.gmra.mxu0 %v538
  %v819 = vpop.f32.mrf.mxu0
  %v820 = vadd.f32 %v746, %v819
  %v821 = vpop.f32.mrf.mxu0
  %v822 = vadd.f32 %v748, %v821
  %823 = vmatmul.bf16.gmra.mxu0 %v541
  %v824 = vpop.f32.mrf.mxu0
  %v825 = vadd.f32 %v751, %v824
  %v826 = vpop.f32.mrf.mxu0
  %v827 = vadd.f32 %v753, %v826
  %828 = vmatmul.bf16.gmra.mxu0 %v544
  %v829 = vpop.f32.mrf.mxu0
  %v830 = vadd.f32 %v756, %v829
  %v831 = vpop.f32.mrf.mxu0
  %v832 = vadd.f32 %v758, %v831
  %833 = vmatmul.bf16.gmra.mxu0 %v547
  %v834 = vpop.f32.mrf.mxu0
  %v835 = vadd.f32 %v761, %v834
  %v836 = vpop.f32.mrf.mxu0
  %v837 = vadd.f32 %v763, %v836
  %838 = vmatmul.bf16.gmra.mxu0 %v550
  %v839 = vpop.f32.mrf.mxu0
  %v840 = vadd.f32 %v766, %v839
  %v841 = vpop.f32.mrf.mxu0
  %v842 = vadd.f32 %v768, %v841
  %843 = vmatmul.bf16.gmra.mxu0 %v553
  %v844 = vpop.f32.mrf.mxu0
  %v845 = vadd.f32 %v771, %v844
  %v846 = vpop.f32.mrf.mxu0
  %v847 = vadd.f32 %v773, %v846
  %848 = vmatmul.bf16.gmra.mxu0 %v556
  %v849 = vpop.f32.mrf.mxu0
  %v850 = vadd.f32 %v776, %v849
  %v851 = vpop.f32.mrf.mxu0
  %v852 = vadd.f32 %v778, %v851
  %853 = vdwg.mxu0
  %v854 = vmax.f32 %v790, 0.0
  %v855 = vmax.f32 %v792, 0.0
  %v856 = vmax.f32 %v795, 0.0
  %v857 = vmax.f32 %v797, 0.0
  %v858 = vmax.f32 %v800, 0.0
  %v859 = vmax.f32 %v802, 0.0
  %v860 = vmax.f32 %v805, 0.0
  %v861 = vmax.f32 %v807, 0.0
  %v862 = vmax.f32 %v810, 0.0
  %v863 = vmax.f32 %v812, 0.0
  %v864 = vmax.f32 %v815, 0.0
  %v865 = vmax.f32 %v817, 0.0
  %v866 = vmax.f32 %v820, 0.0
  %v867 = vmax.f32 %v822, 0.0
  %v868 = vmax.f32 %v825, 0.0
  %v869 = vmax.f32 %v827, 0.0
  %v870 = vmax.f32 %v830, 0.0
  %v871 = vmax.f32 %v832, 0.0
  %v872 = vmax.f32 %v835, 0.0
  %v873 = vmax.f32 %v837, 0.0
  %v874 = vmax.f32 %v840, 0.0
  %v875 = vmax.f32 %v842, 0.0
  %v876 = vmax.f32 %v845, 0.0
  %v877 = vmax.f32 %v847, 0.0
  %v878 = vmax.f32 %v850, 0.0
  %v879 = vmax.f32 %v852, 0.0
  %v880 = vpack.c.bf16 %v854, %v854
  %v881 = vpack.c.bf16 %v855, %v855
  %v882 = vpack.c.bf16 %v856, %v856
  %v883 = vpack.c.bf16 %v857, %v857
  %v884 = vpack.c.bf16 %v858, %v858
  %v885 = vpack.c.bf16 %v859, %v859
  %v886 = vpack.c.bf16 %v860, %v860
  %v887 = vpack.c.bf16 %v861, %v861
  %v888 = vpack.c.bf16 %v862, %v862
  %v889 = vpack.c.bf16 %v863, %v863
  %v890 = vpack.c.bf16 %v864, %v864
  %v891 = vpack.c.bf16 %v865, %v865
  %v892 = vpack.c.bf16 %v866, %v866
  %v893 = vpack.c.bf16 %v867, %v867
  %v894 = vpack.c.bf16 %v868, %v868
  %v895 = vpack.c.bf16 %v869, %v869
  %v896 = vpack.c.bf16 %v870, %v870
  %v897 = vpack.c.bf16 %v871, %v871
  %v898 = vpack.c.bf16 %v872, %v872
  %v899 = vpack.c.bf16 %v873, %v873
  %v900 = vpack.c.bf16 %v874, %v874
  %v901 = vpack.c.bf16 %v875, %v875
  %v902 = vpack.c.bf16 %v876, %v876
  %v903 = vpack.c.bf16 %v877, %v877
  %v904 = vpack.c.bf16 %v878, %v878
  %v905 = vpack.c.bf16 %v879, %v879
  %vm906 = vcmask 257024
  %907 = vst.msk [vmem:[%s3] sm:$0xf] %vm906, %v880
  %908 = vst.msk [vmem:[%s3 + $0x4] sm:$0xf] %vm906, %v881
  %909 = vst.msk [vmem:[%s3 + $0x8] sm:$0xf] %vm906, %v882
  %910 = vst.msk [vmem:[%s3 + $0xc] sm:$0xf] %vm906, %v883
  %911 = vst.msk [vmem:[%s3 + $0x10] sm:$0xf] %vm906, %v884
  %912 = vst.msk [vmem:[%s3 + $0x14] sm:$0xf] %vm906, %v885
  %913 = vst.msk [vmem:[%s3 + $0x18] sm:$0xf] %vm906, %v886
  %914 = vst.msk [vmem:[%s3 + $0x1c] sm:$0xf] %vm906, %v887
  %915 = vst.msk [vmem:[%s3 + $0x20] sm:$0xf] %vm906, %v888
  %916 = vst.msk [vmem:[%s3 + $0x24] sm:$0xf] %vm906, %v889
  %917 = vst.msk [vmem:[%s3 + $0x28] sm:$0xf] %vm906, %v890
  %918 = vst.msk [vmem:[%s3 + $0x2c] sm:$0xf] %vm906, %v891
  %919 = vst.msk [vmem:[%s3 + $0x30] sm:$0xf] %vm906, %v892
  %920 = vst.msk [vmem:[%s3 + $0x34] sm:$0xf] %vm906, %v893
  %921 = vst.msk [vmem:[%s3 + $0x38] sm:$0xf] %vm906, %v894
  %922 = vst.msk [vmem:[%s3 + $0x3c] sm:$0xf] %vm906, %v895
  %923 = vst.msk [vmem:[%s3 + $0x40] sm:$0xf] %vm906, %v896
  %924 = vst.msk [vmem:[%s3 + $0x44] sm:$0xf] %vm906, %v897
  %925 = vst.msk [vmem:[%s3 + $0x48] sm:$0xf] %vm906, %v898
  %926 = vst.msk [vmem:[%s3 + $0x4c] sm:$0xf] %vm906, %v899
  %927 = vst.msk [vmem:[%s3 + $0x50] sm:$0xf] %vm906, %v900
  %928 = vst.msk [vmem:[%s3 + $0x54] sm:$0xf] %vm906, %v901
  %929 = vst.msk [vmem:[%s3 + $0x58] sm:$0xf] %vm906, %v902
  %930 = vst.msk [vmem:[%s3 + $0x5c] sm:$0xf] %vm906, %v903
  %931 = vst.msk [vmem:[%s3 + $0x60] sm:$0xf] %vm906, %v904
  %932 = vst.msk [vmem:[%s3 + $0x64] sm:$0xf] %vm906, %v905
  // Predicated region
  $region14: #{dqn_forward.4} parent=0 // pred_check
    _
  $region15: #{dqn_forward.4} parent=0 // pred_check_branch
    %934 = sbr.rel (0) target = $region17
  $region16: #{dqn_forward.4} parent=0 // pred_region
    _
  $region17: #{dqn_forward.4} parent=0 // pred_fallthru
    _
  // Predicated region
  $region18: #{dqn_forward.4} parent=0 // pred_check
    _
  $region19: #{dqn_forward.4} parent=0 // pred_check_branch
    %936 = sbr.rel (0) target = $region21
  $region20: #{dqn_forward.4} parent=0 // pred_region
    _
  $region21: #{dqn_forward.4} parent=0 // pred_fallthru
    _

// kernel: dqn_forward.5
$region0: #{dqn_forward.5}
  #allocation0 [shape = 'u32[]', space=smem, size = 0x4, offset = 0x4, fixed_abs, tag = 'smem constant byte address 0x4 - core index']
  #allocation1 [shape = 'u32[72,128]{1,0:T(1,128)}', space=vmem, size = 0x9000, scoped, tag = 'internal scratch']
  %s0 = inlined_call_operand.vmem [shape: bf16[2,3328], index: 0, kind: input, shape index: {}]
  %s1 = inlined_call_operand.vmem [shape: bf16[3328,256], index: 1, kind: input, shape index: {}]
  %s2 = inlined_call_operand.vmem [shape: f32[1,256], index: 2, kind: input, shape index: {}]
  %s3 = inlined_call_operand.vmem [shape: bf16[256,6], index: 3, kind: input, shape index: {}]
  %s4 = inlined_call_operand.vmem [shape: f32[1,6], index: 4, kind: input, shape index: {}]
  %s5 = inlined_call_operand.hbm [shape: f32[2,6], index: 5, kind: output, shape index: {}]
  %s6 = sld [smem:[#allocation0]]
  $region30: #{dqn_forward.5} parent=0
    _
  %s8 = ssub.s32 1, %s6
  %s9 = scalar_select 0, %s8, %s6
  $region1: #{dqn_forward.5} parent=0
    #allocation2 [shape = 'u8[1024]{0}', space=vmem, size = 0x400, scoped, tag = 'output window, operand 0, single buffered']
    #allocation3 [shape = 's32[1]{0}', space=sflag, size = 0x4, scoped, tag = 'scoped memory for dqn_forward.5']
    %10 = vsyncpa [#allocation3], 0
    // Predicated region
    $region2: #{dqn_forward.5} parent=1 // pred_check
      _
    $region3: #{dqn_forward.5} parent=1 // pred_check_branch
      %12 = sbr.rel (0) target = $region5
    $region4: #{dqn_forward.5} parent=1 // pred_region
      _
    $region5: #{dqn_forward.5} parent=1 // pred_fallthru
      _
    // Predicated region
    $region6: #{dqn_forward.5} parent=1 // pred_check
      _
    $region7: #{dqn_forward.5} parent=1 // pred_check_branch
      %14 = sbr.rel (0) target = $region9
    $region8: #{dqn_forward.5} parent=1 // pred_region
      _
    $region9: #{dqn_forward.5} parent=1 // pred_fallthru
      _
    // Predicated region
    $region10: #{dqn_forward.5} parent=1 // pred_check
      _
    $region11: #{dqn_forward.5} parent=1 // pred_check_branch
      %16 = sbr.rel (0) target = $region13
    $region12: #{dqn_forward.5} parent=1 // pred_region
      _
    $region13: #{dqn_forward.5} parent=1 // pred_fallthru
      _
    // Predicated region
    $region14: #{dqn_forward.5} parent=1 // pred_check
      _
    $region15: #{dqn_forward.5} parent=1 // pred_check_branch
      %18 = sbr.rel (0) target = $region17
    $region16: #{dqn_forward.5} parent=1 // pred_region
      _
    $region17: #{dqn_forward.5} parent=1 // pred_fallthru
      _
    // Predicated region
    $region18: #{dqn_forward.5} parent=1 // pred_check
      _
    $region19: #{dqn_forward.5} parent=1 // pred_check_branch
      %20 = sbr.rel (0) target = $region21
    $region20: #{dqn_forward.5} parent=1 // pred_region
      _
    $region21: #{dqn_forward.5} parent=1 // pred_fallthru
      _
    %v21 = vld [vmem:[%s0] sm:$0xff]
    %v22 = vld [vmem:[%s0 + $0x8] sm:$0xff]
    %v23 = vld [vmem:[%s0 + $0x10] sm:$0xff]
    %v24 = vld [vmem:[%s0 + $0x18] sm:$0x3]
    %v25 = vld [vmem:[%s1] sm:$0xff]
    %v26 = vld [vmem:[%s1 + $0x8] sm:$0xff]
    %v27 = vld [vmem:[%s1 + $0x10] sm:$0xff]
    %v28 = vld [vmem:[%s1 + $0x18] sm:$0xff]
    %v29 = vld [vmem:[%s1 + $0x20] sm:$0xff]
    %v30 = vld [vmem:[%s1 + $0x28] sm:$0xff]
    %v31 = vld [vmem:[%s1 + $0x30] sm:$0xff]
    %v32 = vld [vmem:[%s1 + $0x38] sm:$0xff]
    %v33 = vld [vmem:[%s1 + $0x40] sm:$0xff]
    %v34 = vld [vmem:[%s1 + $0x48] sm:$0xff]
    %v35 = vld [vmem:[%s1 + $0x50] sm:$0xff]
    %v36 = vld [vmem:[%s1 + $0x58] sm:$0xff]
    %v37 = vld [vmem:[%s1 + $0x60] sm:$0xff]
    %v38 = vld [vmem:[%s1 + $0x68] sm:$0xff]
    %v39 = vld [vmem:[%s1 + $0x70] sm:$0xff]
    %v40 = vld [vmem:[%s1 + $0x78] sm:$0xff]
    %v41 = vld [vmem:[%s1 + $0x80] sm:$0xff]
    %v42 = vld [vmem:[%s1 + $0x88] sm:$0xff]
    %v43 = vld [vmem:[%s1 + $0x90] sm:$0xff]
    %v44 = vld [vmem:[%s1 + $0x98] sm:$0xff]
    %v45 = vld [vmem:[%s1 + $0xa0] sm:$0xff]
    %v46 = vld [vmem:[%s1 + $0xa8] sm:$0xff]
    %v47 = vld [vmem:[%s1 + $0xb0] sm:$0xff]
    %v48 = vld [vmem:[%s1 + $0xb8] sm:$0xff]
    %v49 = vld [vmem:[%s1 + $0xc0] sm:$0xff]
    %v50 = vld [vmem:[%s1 + $0xc8] sm:$0xff]
    %v51 = vld [vmem:[%s1 + $0xd0] sm:$0xff]
    %v52 = vld [vmem:[%s1 + $0xd8] sm:$0xff]
    %v53 = vld [vmem:[%s1 + $0xe0] sm:$0xff]
    %v54 = vld [vmem:[%s1 + $0xe8] sm:$0xff]
    %v55 = vld [vmem:[%s1 + $0xf0] sm:$0xff]
    %v56 = vld [vmem:[%s1 + $0xf8] sm:$0xff]
    %v57 = vld [vmem:[%s1 + $0x100] sm:$0xff]
    %v58 = vld [vmem:[%s1 + $0x108] sm:$0xff]
    %v59 = vld [vmem:[%s1 + $0x110] sm:$0xff]
    %v60 = vld [vmem:[%s1 + $0x118] sm:$0xff]
    %v61 = vld [vmem:[%s1 + $0x120] sm:$0xff]
    %v62 = vld [vmem:[%s1 + $0x128] sm:$0xff]
    %v63 = vld [vmem:[%s1 + $0x130] sm:$0xff]
    %v64 = vld [vmem:[%s1 + $0x138] sm:$0xff]
    %v65 = vld [vmem:[%s1 + $0x140] sm:$0xff]
    %v66 = vld [vmem:[%s1 + $0x148] sm:$0xff]
    %v67 = vld [vmem:[%s1 + $0x150] sm:$0xff]
    %v68 = vld [vmem:[%s1 + $0x158] sm:$0xff]
    %v69 = vld [vmem:[%s1 + $0x160] sm:$0xff]
    %v70 = vld [vmem:[%s1 + $0x168] sm:$0xff]
    %v71 = vld [vmem:[%s1 + $0x170] sm:$0xff]
    %v72 = vld [vmem:[%s1 + $0x178] sm:$0xff]
    %v73 = vld [vmem:[%s1 + $0x180] sm:$0xff]
    %v74 = vld [vmem:[%s1 + $0x188] sm:$0xff]
    %v75 = vld [vmem:[%s1 + $0x190] sm:$0xff]
    %v76 = vld [vmem:[%s1 + $0x198] sm:$0xff]
    %v77 = vld [vmem:[%s1 + $0x1a0] sm:$0xff]
    %v78 = vld [vmem:[%s1 + $0x1a8] sm:$0xff]
    %v79 = vld [vmem:[%s1 + $0x1b0] sm:$0xff]
    %v80 = vld [vmem:[%s1 + $0x1b8] sm:$0xff]
    %v81 = vld [vmem:[%s1 + $0x1c0] sm:$0xff]
    %v82 = vld [vmem:[%s1 + $0x1c8] sm:$0xff]
    %v83 = vld [vmem:[%s1 + $0x1d0] sm:$0xff]
    %v84 = vld [vmem:[%s1 + $0x1d8] sm:$0xff]
    %v85 = vld [vmem:[%s1 + $0x1e0] sm:$0xff]
    %v86 = vld [vmem:[%s1 + $0x1e8] sm:$0xff]
    %v87 = vld [vmem:[%s1 + $0x1f0] sm:$0xff]
    %v88 = vld [vmem:[%s1 + $0x1f8] sm:$0xff]
    %v89 = vld [vmem:[%s1 + $0x200] sm:$0xff]
    %v90 = vld [vmem:[%s1 + $0x208] sm:$0xff]
    %v91 = vld [vmem:[%s1 + $0x210] sm:$0xff]
    %v92 = vld [vmem:[%s1 + $0x218] sm:$0xff]
    %v93 = vld [vmem:[%s1 + $0x220] sm:$0xff]
    %v94 = vld [vmem:[%s1 + $0x228] sm:$0xff]
    %v95 = vld [vmem:[%s1 + $0x230] sm:$0xff]
    %v96 = vld [vmem:[%s1 + $0x238] sm:$0xff]
    %v97 = vld [vmem:[%s1 + $0x240] sm:$0xff]
    %v98 = vld [vmem:[%s1 + $0x248] sm:$0xff]
    %v99 = vld [vmem:[%s1 + $0x250] sm:$0xff]
    %v100 = vld [vmem:[%s1 + $0x258] sm:$0xff]
    %v101 = vld [vmem:[%s1 + $0x260] sm:$0xff]
    %v102 = vld [vmem:[%s1 + $0x268] sm:$0xff]
    %v103 = vld [vmem:[%s1 + $0x270] sm:$0xff]
    %v104 = vld [vmem:[%s1 + $0x278] sm:$0xff]
    %v105 = vld [vmem:[%s1 + $0x280] sm:$0xff]
    %v106 = vld [vmem:[%s1 + $0x288] sm:$0xff]
    %v107 = vld [vmem:[%s1 + $0x290] sm:$0xff]
    %v108 = vld [vmem:[%s1 + $0x298] sm:$0xff]
    %v109 = vld [vmem:[%s1 + $0x2a0] sm:$0xff]
    %v110 = vld [vmem:[%s1 + $0x2a8] sm:$0xff]
    %v111 = vld [vmem:[%s1 + $0x2b0] sm:$0xff]
    %v112 = vld [vmem:[%s1 + $0x2b8] sm:$0xff]
    %v113 = vld [vmem:[%s1 + $0x2c0] sm:$0xff]
    %v114 = vld [vmem:[%s1 + $0x2c8] sm:$0xff]
    %v115 = vld [vmem:[%s1 + $0x2d0] sm:$0xff]
    %v116 = vld [vmem:[%s1 + $0x2d8] sm:$0xff]
    %v117 = vld [vmem:[%s1 + $0x2e0] sm:$0xff]
    %v118 = vld [vmem:[%s1 + $0x2e8] sm:$0xff]
    %v119 = vld [vmem:[%s1 + $0x2f0] sm:$0xff]
    %v120 = vld [vmem:[%s1 + $0x2f8] sm:$0xff]
    %v121 = vld [vmem:[%s1 + $0x300] sm:$0xff]
    %v122 = vld [vmem:[%s1 + $0x308] sm:$0xff]
    %v123 = vld [vmem:[%s1 + $0x310] sm:$0xff]
    %v124 = vld [vmem:[%s1 + $0x318] sm:$0xff]
    %v125 = vld [vmem:[%s1 + $0x320] sm:$0xff]
    %v126 = vld [vmem:[%s1 + $0x328] sm:$0xff]
    %v127 = vld [vmem:[%s1 + $0x330] sm:$0xff]
    %v128 = vld [vmem:[%s1 + $0x338] sm:$0xff]
    %v129 = vld [vmem:[%s1 + $0x340] sm:$0xff]
    %v130 = vld [vmem:[%s1 + $0x348] sm:$0xff]
    %v131 = vld [vmem:[%s1 + $0x350] sm:$0xff]
    %v132 = vld [vmem:[%s1 + $0x358] sm:$0xff]
    %v133 = vld [vmem:[%s1 + $0x360] sm:$0xff]
    %v134 = vld [vmem:[%s1 + $0x368] sm:$0xff]
    %v135 = vld [vmem:[%s1 + $0x370] sm:$0xff]
    %v136 = vld [vmem:[%s1 + $0x378] sm:$0xff]
    %v137 = vld [vmem:[%s1 + $0x380] sm:$0xff]
    %v138 = vld [vmem:[%s1 + $0x388] sm:$0xff]
    %v139 = vld [vmem:[%s1 + $0x390] sm:$0xff]
    %v140 = vld [vmem:[%s1 + $0x398] sm:$0xff]
    %v141 = vld [vmem:[%s1 + $0x3a0] sm:$0xff]
    %v142 = vld [vmem:[%s1 + $0x3a8] sm:$0xff]
    %v143 = vld [vmem:[%s1 + $0x3b0] sm:$0xff]
    %v144 = vld [vmem:[%s1 + $0x3b8] sm:$0xff]
    %v145 = vld [vmem:[%s1 + $0x3c0] sm:$0xff]
    %v146 = vld [vmem:[%s1 + $0x3c8] sm:$0xff]
    %v147 = vld [vmem:[%s1 + $0x3d0] sm:$0xff]
    %v148 = vld [vmem:[%s1 + $0x3d8] sm:$0xff]
    %v149 = vld [vmem:[%s1 + $0x3e0] sm:$0xff]
    %v150 = vld [vmem:[%s1 + $0x3e8] sm:$0xff]
    %v151 = vld [vmem:[%s1 + $0x3f0] sm:$0xff]
    %v152 = vld [vmem:[%s1 + $0x3f8] sm:$0xff]
    %v153 = vld [vmem:[%s1 + $0x400] sm:$0xff]
    %v154 = vld [vmem:[%s1 + $0x408] sm:$0xff]
    %v155 = vld [vmem:[%s1 + $0x410] sm:$0xff]
    %v156 = vld [vmem:[%s1 + $0x418] sm:$0xff]
    %v157 = vld [vmem:[%s1 + $0x420] sm:$0xff]
    %v158 = vld [vmem:[%s1 + $0x428] sm:$0xff]
    %v159 = vld [vmem:[%s1 + $0x430] sm:$0xff]
    %v160 = vld [vmem:[%s1 + $0x438] sm:$0xff]
    %v161 = vld [vmem:[%s1 + $0x440] sm:$0xff]
    %v162 = vld [vmem:[%s1 + $0x448] sm:$0xff]
    %v163 = vld [vmem:[%s1 + $0x450] sm:$0xff]
    %v164 = vld [vmem:[%s1 + $0x458] sm:$0xff]
    %v165 = vld [vmem:[%s1 + $0x460] sm:$0xff]
    %v166 = vld [vmem:[%s1 + $0x468] sm:$0xff]
    %v167 = vld [vmem:[%s1 + $0x470] sm:$0xff]
    %v168 = vld [vmem:[%s1 + $0x478] sm:$0xff]
    %v169 = vld [vmem:[%s1 + $0x480] sm:$0xff]
    %v170 = vld [vmem:[%s1 + $0x488] sm:$0xff]
    %v171 = vld [vmem:[%s1 + $0x490] sm:$0xff]
    %v172 = vld [vmem:[%s1 + $0x498] sm:$0xff]
    %v173 = vld [vmem:[%s1 + $0x4a0] sm:$0xff]
    %v174 = vld [vmem:[%s1 + $0x4a8] sm:$0xff]
    %v175 = vld [vmem:[%s1 + $0x4b0] sm:$0xff]
    %v176 = vld [vmem:[%s1 + $0x4b8] sm:$0xff]
    %v177 = vld [vmem:[%s1 + $0x4c0] sm:$0xff]
    %v178 = vld [vmem:[%s1 + $0x4c8] sm:$0xff]
    %v179 = vld [vmem:[%s1 + $0x4d0] sm:$0xff]
    %v180 = vld [vmem:[%s1 + $0x4d8] sm:$0xff]
    %v181 = vld [vmem:[%s1 + $0x4e0] sm:$0xff]
    %v182 = vld [vmem:[%s1 + $0x4e8] sm:$0xff]
    %v183 = vld [vmem:[%s1 + $0x4f0] sm:$0xff]
    %v184 = vld [vmem:[%s1 + $0x4f8] sm:$0xff]
    %v185 = vld [vmem:[%s1 + $0x500] sm:$0xff]
    %v186 = vld [vmem:[%s1 + $0x508] sm:$0xff]
    %v187 = vld [vmem:[%s1 + $0x510] sm:$0xff]
    %v188 = vld [vmem:[%s1 + $0x518] sm:$0xff]
    %v189 = vld [vmem:[%s1 + $0x520] sm:$0xff]
    %v190 = vld [vmem:[%s1 + $0x528] sm:$0xff]
    %v191 = vld [vmem:[%s1 + $0x530] sm:$0xff]
    %v192 = vld [vmem:[%s1 + $0x538] sm:$0xff]
    %v193 = vld [vmem:[%s1 + $0x540] sm:$0xff]
    %v194 = vld [vmem:[%s1 + $0x548] sm:$0xff]
    %v195 = vld [vmem:[%s1 + $0x550] sm:$0xff]
    %v196 = vld [vmem:[%s1 + $0x558] sm:$0xff]
    %v197 = vld [vmem:[%s1 + $0x560] sm:$0xff]
    %v198 = vld [vmem:[%s1 + $0x568] sm:$0xff]
    %v199 = vld [vmem:[%s1 + $0x570] sm:$0xff]
    %v200 = vld [vmem:[%s1 + $0x578] sm:$0xff]
    %v201 = vld [vmem:[%s1 + $0x580] sm:$0xff]
    %v202 = vld [vmem:[%s1 + $0x588] sm:$0xff]
    %v203 = vld [vmem:[%s1 + $0x590] sm:$0xff]
    %v204 = vld [vmem:[%s1 + $0x598] sm:$0xff]
    %v205 = vld [vmem:[%s1 + $0x5a0] sm:$0xff]
    %v206 = vld [vmem:[%s1 + $0x5a8] sm:$0xff]
    %v207 = vld [vmem:[%s1 + $0x5b0] sm:$0xff]
    %v208 = vld [vmem:[%s1 + $0x5b8] sm:$0xff]
    %v209 = vld [vmem:[%s1 + $0x5c0] sm:$0xff]
    %v210 = vld [vmem:[%s1 + $0x5c8] sm:$0xff]
    %v211 = vld [vmem:[%s1 + $0x5d0] sm:$0xff]
    %v212 = vld [vmem:[%s1 + $0x5d8] sm:$0xff]
    %v213 = vld [vmem:[%s1 + $0x5e0] sm:$0xff]
    %v214 = vld [vmem:[%s1 + $0x5e8] sm:$0xff]
    %v215 = vld [vmem:[%s1 + $0x5f0] sm:$0xff]
    %v216 = vld [vmem:[%s1 + $0x5f8] sm:$0xff]
    %v217 = vld [vmem:[%s1 + $0x600] sm:$0xff]
    %v218 = vld [vmem:[%s1 + $0x608] sm:$0xff]
    %v219 = vld [vmem:[%s1 + $0x610] sm:$0xff]
    %v220 = vld [vmem:[%s1 + $0x618] sm:$0xff]
    %v221 = vld [vmem:[%s1 + $0x620] sm:$0xff]
    %v222 = vld [vmem:[%s1 + $0x628] sm:$0xff]
    %v223 = vld [vmem:[%s1 + $0x630] sm:$0xff]
    %v224 = vld [vmem:[%s1 + $0x638] sm:$0xff]
    %v225 = vld [vmem:[%s1 + $0x640] sm:$0xff]
    %v226 = vld [vmem:[%s1 + $0x648] sm:$0xff]
    %v227 = vld [vmem:[%s1 + $0x650] sm:$0xff]
    %v228 = vld [vmem:[%s1 + $0x658] sm:$0xff]
    %v229 = vld [vmem:[%s1 + $0x660] sm:$0xff]
    %v230 = vld [vmem:[%s1 + $0x668] sm:$0xff]
    %v231 = vld [vmem:[%s1 + $0x670] sm:$0xff]
    %v232 = vld [vmem:[%s1 + $0x678] sm:$0xff]
    %v233 = vld [vmem:[%s1 + $0x680] sm:$0xff]
    %v234 = vld [vmem:[%s1 + $0x688] sm:$0xff]
    %v235 = vld [vmem:[%s1 + $0x690] sm:$0xff]
    %v236 = vld [vmem:[%s1 + $0x698] sm:$0xff]
    %v237 = vld [vmem:[%s1 + $0x6a0] sm:$0xff]
    %v238 = vld [vmem:[%s1 + $0x6a8] sm:$0xff]
    %v239 = vld [vmem:[%s1 + $0x6b0] sm:$0xff]
    %v240 = vld [vmem:[%s1 + $0x6b8] sm:$0xff]
    %v241 = vld [vmem:[%s1 + $0x6c0] sm:$0xff]
    %v242 = vld [vmem:[%s1 + $0x6c8] sm:$0xff]
    %v243 = vld [vmem:[%s1 + $0x6d0] sm:$0xff]
    %v244 = vld [vmem:[%s1 + $0x6d8] sm:$0xff]
    %v245 = vld [vmem:[%s1 + $0x6e0] sm:$0xff]
    %v246 = vld [vmem:[%s1 + $0x6e8] sm:$0xff]
    %v247 = vld [vmem:[%s1 + $0x6f0] sm:$0xff]
    %v248 = vld [vmem:[%s1 + $0x6f8] sm:$0xff]
    %v249 = vld [vmem:[%s1 + $0x700] sm:$0xff]
    %v250 = vld [vmem:[%s1 + $0x708] sm:$0xff]
    %v251 = vld [vmem:[%s1 + $0x710] sm:$0xff]
    %v252 = vld [vmem:[%s1 + $0x718] sm:$0xff]
    %v253 = vld [vmem:[%s1 + $0x720] sm:$0xff]
    %v254 = vld [vmem:[%s1 + $0x728] sm:$0xff]
    %v255 = vld [vmem:[%s1 + $0x730] sm:$0xff]
    %v256 = vld [vmem:[%s1 + $0x738] sm:$0xff]
    %v257 = vld [vmem:[%s1 + $0x740] sm:$0xff]
    %v258 = vld [vmem:[%s1 + $0x748] sm:$0xff]
    %v259 = vld [vmem:[%s1 + $0x750] sm:$0xff]
    %v260 = vld [vmem:[%s1 + $0x758] sm:$0xff]
    %v261 = vld [vmem:[%s1 + $0x760] sm:$0xff]
    %v262 = vld [vmem:[%s1 + $0x768] sm:$0xff]
    %v263 = vld [vmem:[%s1 + $0x770] sm:$0xff]
    %v264 = vld [vmem:[%s1 + $0x778] sm:$0xff]
    %v265 = vld [vmem:[%s1 + $0x780] sm:$0xff]
    %v266 = vld [vmem:[%s1 + $0x788] sm:$0xff]
    %v267 = vld [vmem:[%s1 + $0x790] sm:$0xff]
    %v268 = vld [vmem:[%s1 + $0x798] sm:$0xff]
    %v269 = vld [vmem:[%s1 + $0x7a0] sm:$0xff]
    %v270 = vld [vmem:[%s1 + $0x7a8] sm:$0xff]
    %v271 = vld [vmem:[%s1 + $0x7b0] sm:$0xff]
    %v272 = vld [vmem:[%s1 + $0x7b8] sm:$0xff]
    %v273 = vld [vmem:[%s1 + $0x7c0] sm:$0xff]
    %v274 = vld [vmem:[%s1 + $0x7c8] sm:$0xff]
    %v275 = vld [vmem:[%s1 + $0x7d0] sm:$0xff]
    %v276 = vld [vmem:[%s1 + $0x7d8] sm:$0xff]
    %v277 = vld [vmem:[%s1 + $0x7e0] sm:$0xff]
    %v278 = vld [vmem:[%s1 + $0x7e8] sm:$0xff]
    %v279 = vld [vmem:[%s1 + $0x7f0] sm:$0xff]
    %v280 = vld [vmem:[%s1 + $0x7f8] sm:$0xff]
    %v281 = vld [vmem:[%s1 + $0x800] sm:$0xff]
    %v282 = vld [vmem:[%s1 + $0x808] sm:$0xff]
    %v283 = vld [vmem:[%s1 + $0x810] sm:$0xff]
    %v284 = vld [vmem:[%s1 + $0x818] sm:$0xff]
    %v285 = vld [vmem:[%s1 + $0x820] sm:$0xff]
    %v286 = vld [vmem:[%s1 + $0x828] sm:$0xff]
    %v287 = vld [vmem:[%s1 + $0x830] sm:$0xff]
    %v288 = vld [vmem:[%s1 + $0x838] sm:$0xff]
    %v289 = vld [vmem:[%s1 + $0x840] sm:$0xff]
    %v290 = vld [vmem:[%s1 + $0x848] sm:$0xff]
    %v291 = vld [vmem:[%s1 + $0x850] sm:$0xff]
    %v292 = vld [vmem:[%s1 + $0x858] sm:$0xff]
    %v293 = vld [vmem:[%s1 + $0x860] sm:$0xff]
    %v294 = vld [vmem:[%s1 + $0x868] sm:$0xff]
    %v295 = vld [vmem:[%s1 + $0x870] sm:$0xff]
    %v296 = vld [vmem:[%s1 + $0x878] sm:$0xff]
    %v297 = vld [vmem:[%s1 + $0x880] sm:$0xff]
    %v298 = vld [vmem:[%s1 + $0x888] sm:$0xff]
    %v299 = vld [vmem:[%s1 + $0x890] sm:$0xff]
    %v300 = vld [vmem:[%s1 + $0x898] sm:$0xff]
    %v301 = vld [vmem:[%s1 + $0x8a0] sm:$0xff]
    %v302 = vld [vmem:[%s1 + $0x8a8] sm:$0xff]
    %v303 = vld [vmem:[%s1 + $0x8b0] sm:$0xff]
    %v304 = vld [vmem:[%s1 + $0x8b8] sm:$0xff]
    %v305 = vld [vmem:[%s1 + $0x8c0] sm:$0xff]
    %v306 = vld [vmem:[%s1 + $0x8c8] sm:$0xff]
    %v307 = vld [vmem:[%s1 + $0x8d0] sm:$0xff]
    %v308 = vld [vmem:[%s1 + $0x8d8] sm:$0xff]
    %v309 = vld [vmem:[%s1 + $0x8e0] sm:$0xff]
    %v310 = vld [vmem:[%s1 + $0x8e8] sm:$0xff]
    %v311 = vld [vmem:[%s1 + $0x8f0] sm:$0xff]
    %v312 = vld [vmem:[%s1 + $0x8f8] sm:$0xff]
    %v313 = vld [vmem:[%s1 + $0x900] sm:$0xff]
    %v314 = vld [vmem:[%s1 + $0x908] sm:$0xff]
    %v315 = vld [vmem:[%s1 + $0x910] sm:$0xff]
    %v316 = vld [vmem:[%s1 + $0x918] sm:$0xff]
    %v317 = vld [vmem:[%s1 + $0x920] sm:$0xff]
    %v318 = vld [vmem:[%s1 + $0x928] sm:$0xff]
    %v319 = vld [vmem:[%s1 + $0x930] sm:$0xff]
    %v320 = vld [vmem:[%s1 + $0x938] sm:$0xff]
    %v321 = vld [vmem:[%s1 + $0x940] sm:$0xff]
    %v322 = vld [vmem:[%s1 + $0x948] sm:$0xff]
    %v323 = vld [vmem:[%s1 + $0x950] sm:$0xff]
    %v324 = vld [vmem:[%s1 + $0x958] sm:$0xff]
    %v325 = vld [vmem:[%s1 + $0x960] sm:$0xff]
    %v326 = vld [vmem:[%s1 + $0x968] sm:$0xff]
    %v327 = vld [vmem:[%s1 + $0x970] sm:$0xff]
    %v328 = vld [vmem:[%s1 + $0x978] sm:$0xff]
    %v329 = vld [vmem:[%s1 + $0x980] sm:$0xff]
    %v330 = vld [vmem:[%s1 + $0x988] sm:$0xff]
    %v331 = vld [vmem:[%s1 + $0x990] sm:$0xff]
    %v332 = vld [vmem:[%s1 + $0x998] sm:$0xff]
    %v333 = vld [vmem:[%s1 + $0x9a0] sm:$0xff]
    %v334 = vld [vmem:[%s1 + $0x9a8] sm:$0xff]
    %v335 = vld [vmem:[%s1 + $0x9b0] sm:$0xff]
    %v336 = vld [vmem:[%s1 + $0x9b8] sm:$0xff]
    %v337 = vld [vmem:[%s1 + $0x9c0] sm:$0xff]
    %v338 = vld [vmem:[%s1 + $0x9c8] sm:$0xff]
    %v339 = vld [vmem:[%s1 + $0x9d0] sm:$0xff]
    %v340 = vld [vmem:[%s1 + $0x9d8] sm:$0xff]
    %v341 = vld [vmem:[%s1 + $0x9e0] sm:$0xff]
    %v342 = vld [vmem:[%s1 + $0x9e8] sm:$0xff]
    %v343 = vld [vmem:[%s1 + $0x9f0] sm:$0xff]
    %v344 = vld [vmem:[%s1 + $0x9f8] sm:$0xff]
    %v345 = vld [vmem:[%s1 + $0xa00] sm:$0xff]
    %v346 = vld [vmem:[%s1 + $0xa08] sm:$0xff]
    %v347 = vld [vmem:[%s1 + $0xa10] sm:$0xff]
    %v348 = vld [vmem:[%s1 + $0xa18] sm:$0xff]
    %v349 = vld [vmem:[%s1 + $0xa20] sm:$0xff]
    %v350 = vld [vmem:[%s1 + $0xa28] sm:$0xff]
    %v351 = vld [vmem:[%s1 + $0xa30] sm:$0xff]
    %v352 = vld [vmem:[%s1 + $0xa38] sm:$0xff]
    %v353 = vld [vmem:[%s1 + $0xa40] sm:$0xff]
    %v354 = vld [vmem:[%s1 + $0xa48] sm:$0xff]
    %v355 = vld [vmem:[%s1 + $0xa50] sm:$0xff]
    %v356 = vld [vmem:[%s1 + $0xa58] sm:$0xff]
    %v357 = vld [vmem:[%s1 + $0xa60] sm:$0xff]
    %v358 = vld [vmem:[%s1 + $0xa68] sm:$0xff]
    %v359 = vld [vmem:[%s1 + $0xa70] sm:$0xff]
    %v360 = vld [vmem:[%s1 + $0xa78] sm:$0xff]
    %v361 = vld [vmem:[%s1 + $0xa80] sm:$0xff]
    %v362 = vld [vmem:[%s1 + $0xa88] sm:$0xff]
    %v363 = vld [vmem:[%s1 + $0xa90] sm:$0xff]
    %v364 = vld [vmem:[%s1 + $0xa98] sm:$0xff]
    %v365 = vld [vmem:[%s1 + $0xaa0] sm:$0xff]
    %v366 = vld [vmem:[%s1 + $0xaa8] sm:$0xff]
    %v367 = vld [vmem:[%s1 + $0xab0] sm:$0xff]
    %v368 = vld [vmem:[%s1 + $0xab8] sm:$0xff]
    %v369 = vld [vmem:[%s1 + $0xac0] sm:$0xff]
    %v370 = vld [vmem:[%s1 + $0xac8] sm:$0xff]
    %v371 = vld [vmem:[%s1 + $0xad0] sm:$0xff]
    %v372 = vld [vmem:[%s1 + $0xad8] sm:$0xff]
    %v373 = vld [vmem:[%s1 + $0xae0] sm:$0xff]
    %v374 = vld [vmem:[%s1 + $0xae8] sm:$0xff]
    %v375 = vld [vmem:[%s1 + $0xaf0] sm:$0xff]
    %v376 = vld [vmem:[%s1 + $0xaf8] sm:$0xff]
    %v377 = vld [vmem:[%s1 + $0xb00] sm:$0xff]
    %v378 = vld [vmem:[%s1 + $0xb08] sm:$0xff]
    %v379 = vld [vmem:[%s1 + $0xb10] sm:$0xff]
    %v380 = vld [vmem:[%s1 + $0xb18] sm:$0xff]
    %v381 = vld [vmem:[%s1 + $0xb20] sm:$0xff]
    %v382 = vld [vmem:[%s1 + $0xb28] sm:$0xff]
    %v383 = vld [vmem:[%s1 + $0xb30] sm:$0xff]
    %v384 = vld [vmem:[%s1 + $0xb38] sm:$0xff]
    %v385 = vld [vmem:[%s1 + $0xb40] sm:$0xff]
    %v386 = vld [vmem:[%s1 + $0xb48] sm:$0xff]
    %v387 = vld [vmem:[%s1 + $0xb50] sm:$0xff]
    %v388 = vld [vmem:[%s1 + $0xb58] sm:$0xff]
    %v389 = vld [vmem:[%s1 + $0xb60] sm:$0xff]
    %v390 = vld [vmem:[%s1 + $0xb68] sm:$0xff]
    %v391 = vld [vmem:[%s1 + $0xb70] sm:$0xff]
    %v392 = vld [vmem:[%s1 + $0xb78] sm:$0xff]
    %v393 = vld [vmem:[%s1 + $0xb80] sm:$0xff]
    %v394 = vld [vmem:[%s1 + $0xb88] sm:$0xff]
    %v395 = vld [vmem:[%s1 + $0xb90] sm:$0xff]
    %v396 = vld [vmem:[%s1 + $0xb98] sm:$0xff]
    %v397 = vld [vmem:[%s1 + $0xba0] sm:$0xff]
    %v398 = vld [vmem:[%s1 + $0xba8] sm:$0xff]
    %v399 = vld [vmem:[%s1 + $0xbb0] sm:$0xff]
    %v400 = vld [vmem:[%s1 + $0xbb8] sm:$0xff]
    %v401 = vld [vmem:[%s1 + $0xbc0] sm:$0xff]
    %v402 = vld [vmem:[%s1 + $0xbc8] sm:$0xff]
    %v403 = vld [vmem:[%s1 + $0xbd0] sm:$0xff]
    %v404 = vld [vmem:[%s1 + $0xbd8] sm:$0xff]
    %v405 = vld [vmem:[%s1 + $0xbe0] sm:$0xff]
    %v406 = vld [vmem:[%s1 + $0xbe8] sm:$0xff]
    %v407 = vld [vmem:[%s1 + $0xbf0] sm:$0xff]
    %v408 = vld [vmem:[%s1 + $0xbf8] sm:$0xff]
    %v409 = vld [vmem:[%s1 + $0xc00] sm:$0xff]
    %v410 = vld [vmem:[%s1 + $0xc08] sm:$0xff]
    %v411 = vld [vmem:[%s1 + $0xc10] sm:$0xff]
    %v412 = vld [vmem:[%s1 + $0xc18] sm:$0xff]
    %v413 = vld [vmem:[%s1 + $0xc20] sm:$0xff]
    %v414 = vld [vmem:[%s1 + $0xc28] sm:$0xff]
    %v415 = vld [vmem:[%s1 + $0xc30] sm:$0xff]
    %v416 = vld [vmem:[%s1 + $0xc38] sm:$0xff]
    %v417 = vld [vmem:[%s1 + $0xc40] sm:$0xff]
    %v418 = vld [vmem:[%s1 + $0xc48] sm:$0xff]
    %v419 = vld [vmem:[%s1 + $0xc50] sm:$0xff]
    %v420 = vld [vmem:[%s1 + $0xc58] sm:$0xff]
    %v421 = vld [vmem:[%s1 + $0xc60] sm:$0xff]
    %v422 = vld [vmem:[%s1 + $0xc68] sm:$0xff]
    %v423 = vld [vmem:[%s1 + $0xc70] sm:$0xff]
    %v424 = vld [vmem:[%s1 + $0xc78] sm:$0xff]
    %v425 = vld [vmem:[%s1 + $0xc80] sm:$0xff]
    %v426 = vld [vmem:[%s1 + $0xc88] sm:$0xff]
    %v427 = vld [vmem:[%s1 + $0xc90] sm:$0xff]
    %v428 = vld [vmem:[%s1 + $0xc98] sm:$0xff]
    %v429 = vld [vmem:[%s1 + $0xca0] sm:$0xff]
    %v430 = vld [vmem:[%s1 + $0xca8] sm:$0xff]
    %v431 = vld [vmem:[%s1 + $0xcb0] sm:$0xff]
    %v432 = vld [vmem:[%s1 + $0xcb8] sm:$0xff]
    %v433 = vld [vmem:[%s1 + $0xcc0] sm:$0xff]
    %v434 = vld [vmem:[%s1 + $0xcc8] sm:$0xff]
    %v435 = vld [vmem:[%s1 + $0xcd0] sm:$0xff]
    %v436 = vld [vmem:[%s1 + $0xcd8] sm:$0xff]
    %v437 = vld [vmem:[%s1 + $0xce0] sm:$0xff]
    %v438 = vld [vmem:[%s1 + $0xce8] sm:$0xff]
    %v439 = vld [vmem:[%s1 + $0xcf0] sm:$0xff]
    %v440 = vld [vmem:[%s1 + $0xcf8] sm:$0xff]
    %v441 = vld [vmem:[%s2] sm:$0x3]
    %v443 = vperm.slane %v441, 0
    %v444 = vperm.slane %v441, 1
    %448 = vst [vmem:[#allocation1] ss:$9 sm:$0xff] %v21
    %v449 = vld [vmem:[#allocation1] sm:$0xff]
    %v450 = vld [vmem:[#allocation1 + $0x9] sm:$0xff]
    %v451 = vld [vmem:[#allocation1 + $0x12] sm:$0xff]
    %v452 = vld [vmem:[#allocation1 + $0x1b] sm:$0xff]
    %v453 = vld [vmem:[#allocation1 + $0x24] sm:$0xff]
    %v454 = vld [vmem:[#allocation1 + $0x2d] sm:$0xff]
    %v455 = vld [vmem:[#allocation1 + $0x36] sm:$0xff]
    %v456 = vld [vmem:[#allocation1 + $0x3f] sm:$0xff]
    %458 = vst [vmem:[#allocation1] ss:$9 sm:$0xff] %v22
    %v459 = vld [vmem:[#allocation1] sm:$0xff]
    %v460 = vld [vmem:[#allocation1 + $0x9] sm:$0xff]
    %v461 = vld [vmem:[#allocation1 + $0x12] sm:$0xff]
    %v462 = vld [vmem:[#allocation1 + $0x1b] sm:$0xff]
    %v463 = vld [vmem:[#allocation1 + $0x24] sm:$0xff]
    %v464 = vld [vmem:[#allocation1 + $0x2d] sm:$0xff]
    %v465 = vld [vmem:[#allocation1 + $0x36] sm:$0xff]
    %v466 = vld [vmem:[#allocation1 + $0x3f] sm:$0xff]
    %468 = vst [vmem:[#allocation1] ss:$9 sm:$0xff] %v23
    %v469 = vld [vmem:[#allocation1] sm:$0xff]
    %v470 = vld [vmem:[#allocation1 + $0x9] sm:$0xff]
    %v471 = vld [vmem:[#allocation1 + $0x12] sm:$0xff]
    %v472 = vld [vmem:[#allocation1 + $0x1b] sm:$0xff]
    %v473 = vld [vmem:[#allocation1 + $0x24] sm:$0xff]
    %v474 = vld [vmem:[#allocation1 + $0x2d] sm:$0xff]
    %v475 = vld [vmem:[#allocation1 + $0x36] sm:$0xff]
    %v476 = vld [vmem:[#allocation1 + $0x3f] sm:$0xff]
    %478 = vst [vmem:[#allocation1] ss:$9 sm:$0xff] %v24
    %v479 = vld [vmem:[#allocation1] sm:$0xff]
    %v480 = vld [vmem:[#allocation1 + $0x9] sm:$0xff]
    %v923 = vunpack.c.l.b16 %v25
    %v924 = vunpack.c.h.b16 %v25
    %v925 = vunpack.c.l.b16 %v26
    %v926 = vunpack.c.h.b16 %v26
    %v927 = vunpack.c.l.b16 %v27
    %v928 = vunpack.c.h.b16 %v27
    %v929 = vunpack.c.l.b16 %v28
    %v930 = vunpack.c.h.b16 %v28
    %v931 = vunpack.c.l.b16 %v29
    %v932 = vunpack.c.h.b16 %v29
    %v933 = vunpack.c.l.b16 %v30
    %v934 = vunpack.c.h.b16 %v30
    %v935 = vunpack.c.l.b16 %v31
    %v936 = vunpack.c.h.b16 %v31
    %v937 = vunpack.c.l.b16 %v32
    %v938 = vunpack.c.h.b16 %v32
    %v939 = vunpack.c.l.b16 %v33
    %v940 = vunpack.c.h.b16 %v33
    %v941 = vunpack.c.l.b16 %v34
    %v942 = vunpack.c.h.b16 %v34
    %v943 = vunpack.c.l.b16 %v35
    %v944 = vunpack.c.h.b16 %v35
    %v945 = vunpack.c.l.b16 %v36
    %v946 = vunpack.c.h.b16 %v36
    %v947 = vunpack.c.l.b16 %v37
    %v948 = vunpack.c.h.b16 %v37
    %v949 = vunpack.c.l.b16 %v38
    %v950 = vunpack.c.h.b16 %v38
    %v951 = vunpack.c.l.b16 %v39
    %v952 = vunpack.c.h.b16 %v39
    %v953 = vunpack.c.l.b16 %v40
    %v954 = vunpack.c.h.b16 %v40
    %v955 = vunpack.c.l.b16 %v41
    %v956 = vunpack.c.h.b16 %v41
    %v957 = vunpack.c.l.b16 %v42
    %v958 = vunpack.c.h.b16 %v42
    %v959 = vunpack.c.l.b16 %v43
    %v960 = vunpack.c.h.b16 %v43
    %v961 = vunpack.c.l.b16 %v44
    %v962 = vunpack.c.h.b16 %v44
    %v963 = vunpack.c.l.b16 %v45
    %v964 = vunpack.c.h.b16 %v45
    %v965 = vunpack.c.l.b16 %v46
    %v966 = vunpack.c.h.b16 %v46
    %v967 = vunpack.c.l.b16 %v47
    %v968 = vunpack.c.h.b16 %v47
    %v969 = vunpack.c.l.b16 %v48
    %v970 = vunpack.c.h.b16 %v48
    %v971 = vunpack.c.l.b16 %v49
    %v972 = vunpack.c.h.b16 %v49
    %v973 = vunpack.c.l.b16 %v50
    %v974 = vunpack.c.h.b16 %v50
    %v975 = vunpack.c.l.b16 %v51
    %v976 = vunpack.c.h.b16 %v51
    %v977 = vunpack.c.l.b16 %v52
    %v978 = vunpack.c.h.b16 %v52
    %v979 = vunpack.c.l.b16 %v53
    %v980 = vunpack.c.h.b16 %v53
    %v981 = vunpack.c.l.b16 %v54
    %v982 = vunpack.c.h.b16 %v54
    %v983 = vunpack.c.l.b16 %v55
    %v984 = vunpack.c.h.b16 %v55
    %v985 = vunpack.c.l.b16 %v56
    %v986 = vunpack.c.h.b16 %v56
    %v987 = vunpack.c.l.b16 %v57
    %v988 = vunpack.c.h.b16 %v57
    %v989 = vunpack.c.l.b16 %v58
    %v990 = vunpack.c.h.b16 %v58
    %v991 = vunpack.c.l.b16 %v59
    %v992 = vunpack.c.h.b16 %v59
    %v993 = vunpack.c.l.b16 %v60
    %v994 = vunpack.c.h.b16 %v60
    %v995 = vunpack.c.l.b16 %v61
    %v996 = vunpack.c.h.b16 %v61
    %v997 = vunpack.c.l.b16 %v62
    %v998 = vunpack.c.h.b16 %v62
    %v999 = vunpack.c.l.b16 %v63
    %v1000 = vunpack.c.h.b16 %v63
    %v1001 = vunpack.c.l.b16 %v64
    %v1002 = vunpack.c.h.b16 %v64
    %v1003 = vunpack.c.l.b16 %v65
    %v1004 = vunpack.c.h.b16 %v65
    %v1005 = vunpack.c.l.b16 %v66
    %v1006 = vunpack.c.h.b16 %v66
    %v1007 = vunpack.c.l.b16 %v67
    %v1008 = vunpack.c.h.b16 %v67
    %v1009 = vunpack.c.l.b16 %v68
    %v1010 = vunpack.c.h.b16 %v68
    %v1011 = vunpack.c.l.b16 %v69
    %v1012 = vunpack.c.h.b16 %v69
    %v1013 = vunpack.c.l.b16 %v70
    %v1014 = vunpack.c.h.b16 %v70
    %v1015 = vunpack.c.l.b16 %v71
    %v1016 = vunpack.c.h.b16 %v71
    %v1017 = vunpack.c.l.b16 %v72
    %v1018 = vunpack.c.h.b16 %v72
    %v1019 = vunpack.c.l.b16 %v73
    %v1020 = vunpack.c.h.b16 %v73
    %v1021 = vunpack.c.l.b16 %v74
    %v1022 = vunpack.c.h.b16 %v74
    %v1023 = vunpack.c.l.b16 %v75
    %v1024 = vunpack.c.h.b16 %v75
    %v1025 = vunpack.c.l.b16 %v76
    %v1026 = vunpack.c.h.b16 %v76
    %v1027 = vunpack.c.l.b16 %v77
    %v1028 = vunpack.c.h.b16 %v77
    %v1029 = vunpack.c.l.b16 %v78
    %v1030 = vunpack.c.h.b16 %v78
    %v1031 = vunpack.c.l.b16 %v79
    %v1032 = vunpack.c.h.b16 %v79
    %v1033 = vunpack.c.l.b16 %v80
    %v1034 = vunpack.c.h.b16 %v80
    %v1035 = vunpack.c.l.b16 %v81
    %v1036 = vunpack.c.h.b16 %v81
    %v1037 = vunpack.c.l.b16 %v82
    %v1038 = vunpack.c.h.b16 %v82
    %v1039 = vunpack.c.l.b16 %v83
    %v1040 = vunpack.c.h.b16 %v83
    %v1041 = vunpack.c.l.b16 %v84
    %v1042 = vunpack.c.h.b16 %v84
    %v1043 = vunpack.c.l.b16 %v85
    %v1044 = vunpack.c.h.b16 %v85
    %v1045 = vunpack.c.l.b16 %v86
    %v1046 = vunpack.c.h.b16 %v86
    %v1047 = vunpack.c.l.b16 %v87
    %v1048 = vunpack.c.h.b16 %v87
    %v1049 = vunpack.c.l.b16 %v88
    %v1050 = vunpack.c.h.b16 %v88
    %v1051 = vunpack.c.l.b16 %v89
    %v1052 = vunpack.c.h.b16 %v89
    %v1053 = vunpack.c.l.b16 %v90
    %v1054 = vunpack.c.h.b16 %v90
    %v1055 = vunpack.c.l.b16 %v91
    %v1056 = vunpack.c.h.b16 %v91
    %v1057 = vunpack.c.l.b16 %v92
    %v1058 = vunpack.c.h.b16 %v92
    %v1059 = vunpack.c.l.b16 %v93
    %v1060 = vunpack.c.h.b16 %v93
    %v1061 = vunpack.c.l.b16 %v94
    %v1062 = vunpack.c.h.b16 %v94
    %v1063 = vunpack.c.l.b16 %v95
    %v1064 = vunpack.c.h.b16 %v95
    %v1065 = vunpack.c.l.b16 %v96
    %v1066 = vunpack.c.h.b16 %v96
    %v1067 = vunpack.c.l.b16 %v97
    %v1068 = vunpack.c.h.b16 %v97
    %v1069 = vunpack.c.l.b16 %v98
    %v1070 = vunpack.c.h.b16 %v98
    %v1071 = vunpack.c.l.b16 %v99
    %v1072 = vunpack.c.h.b16 %v99
    %v1073 = vunpack.c.l.b16 %v100
    %v1074 = vunpack.c.h.b16 %v100
    %v1075 = vunpack.c.l.b16 %v101
    %v1076 = vunpack.c.h.b16 %v101
    %v1077 = vunpack.c.l.b16 %v102
    %v1078 = vunpack.c.h.b16 %v102
    %v1079 = vunpack.c.l.b16 %v103
    %v1080 = vunpack.c.h.b16 %v103
    %v1081 = vunpack.c.l.b16 %v104
    %v1082 = vunpack.c.h.b16 %v104
    %v1083 = vunpack.c.l.b16 %v105
    %v1084 = vunpack.c.h.b16 %v105
    %v1085 = vunpack.c.l.b16 %v106
    %v1086 = vunpack.c.h.b16 %v106
    %v1087 = vunpack.c.l.b16 %v107
    %v1088 = vunpack.c.h.b16 %v107
    %v1089 = vunpack.c.l.b16 %v108
    %v1090 = vunpack.c.h.b16 %v108
    %v1091 = vunpack.c.l.b16 %v109
    %v1092 = vunpack.c.h.b16 %v109
    %v1093 = vunpack.c.l.b16 %v110
    %v1094 = vunpack.c.h.b16 %v110
    %v1095 = vunpack.c.l.b16 %v111
    %v1096 = vunpack.c.h.b16 %v111
    %v1097 = vunpack.c.l.b16 %v112
    %v1098 = vunpack.c.h.b16 %v112
    %v1099 = vunpack.c.l.b16 %v113
    %v1100 = vunpack.c.h.b16 %v113
    %v1101 = vunpack.c.l.b16 %v114
    %v1102 = vunpack.c.h.b16 %v114
    %v1103 = vunpack.c.l.b16 %v115
    %v1104 = vunpack.c.h.b16 %v115
    %v1105 = vunpack.c.l.b16 %v116
    %v1106 = vunpack.c.h.b16 %v116
    %v1107 = vunpack.c.l.b16 %v117
    %v1108 = vunpack.c.h.b16 %v117
    %v1109 = vunpack.c.l.b16 %v118
    %v1110 = vunpack.c.h.b16 %v118
    %v1111 = vunpack.c.l.b16 %v119
    %v1112 = vunpack.c.h.b16 %v119
    %v1113 = vunpack.c.l.b16 %v120
    %v1114 = vunpack.c.h.b16 %v120
    %v1115 = vunpack.c.l.b16 %v121
    %v1116 = vunpack.c.h.b16 %v121
    %v1117 = vunpack.c.l.b16 %v122
    %v1118 = vunpack.c.h.b16 %v122
    %v1119 = vunpack.c.l.b16 %v123
    %v1120 = vunpack.c.h.b16 %v123
    %v1121 = vunpack.c.l.b16 %v124
    %v1122 = vunpack.c.h.b16 %v124
    %v1123 = vunpack.c.l.b16 %v125
    %v1124 = vunpack.c.h.b16 %v125
    %v1125 = vunpack.c.l.b16 %v126
    %v1126 = vunpack.c.h.b16 %v126
    %v1127 = vunpack.c.l.b16 %v127
    %v1128 = vunpack.c.h.b16 %v127
    %v1129 = vunpack.c.l.b16 %v128
    %v1130 = vunpack.c.h.b16 %v128
    %v1131 = vunpack.c.l.b16 %v129
    %v1132 = vunpack.c.h.b16 %v129
    %v1133 = vunpack.c.l.b16 %v130
    %v1134 = vunpack.c.h.b16 %v130
    %v1135 = vunpack.c.l.b16 %v131
    %v1136 = vunpack.c.h.b16 %v131
    %v1137 = vunpack.c.l.b16 %v132
    %v1138 = vunpack.c.h.b16 %v132
    %v1139 = vunpack.c.l.b16 %v133
    %v1140 = vunpack.c.h.b16 %v133
    %v1141 = vunpack.c.l.b16 %v134
    %v1142 = vunpack.c.h.b16 %v134
    %v1143 = vunpack.c.l.b16 %v135
    %v1144 = vunpack.c.h.b16 %v135
    %v1145 = vunpack.c.l.b16 %v136
    %v1146 = vunpack.c.h.b16 %v136
    %v1147 = vunpack.c.l.b16 %v137
    %v1148 = vunpack.c.h.b16 %v137
    %v1149 = vunpack.c.l.b16 %v138
    %v1150 = vunpack.c.h.b16 %v138
    %v1151 = vunpack.c.l.b16 %v139
    %v1152 = vunpack.c.h.b16 %v139
    %v1153 = vunpack.c.l.b16 %v140
    %v1154 = vunpack.c.h.b16 %v140
    %v1155 = vunpack.c.l.b16 %v141
    %v1156 = vunpack.c.h.b16 %v141
    %v1157 = vunpack.c.l.b16 %v142
    %v1158 = vunpack.c.h.b16 %v142
    %v1159 = vunpack.c.l.b16 %v143
    %v1160 = vunpack.c.h.b16 %v143
    %v1161 = vunpack.c.l.b16 %v144
    %v1162 = vunpack.c.h.b16 %v144
    %v1163 = vunpack.c.l.b16 %v145
    %v1164 = vunpack.c.h.b16 %v145
    %v1165 = vunpack.c.l.b16 %v146
    %v1166 = vunpack.c.h.b16 %v146
    %v1167 = vunpack.c.l.b16 %v147
    %v1168 = vunpack.c.h.b16 %v147
    %v1169 = vunpack.c.l.b16 %v148
    %v1170 = vunpack.c.h.b16 %v148
    %v1171 = vunpack.c.l.b16 %v149
    %v1172 = vunpack.c.h.b16 %v149
    %v1173 = vunpack.c.l.b16 %v150
    %v1174 = vunpack.c.h.b16 %v150
    %v1175 = vunpack.c.l.b16 %v151
    %v1176 = vunpack.c.h.b16 %v151
    %v1177 = vunpack.c.l.b16 %v152
    %v1178 = vunpack.c.h.b16 %v152
    %v1179 = vunpack.c.l.b16 %v153
    %v1180 = vunpack.c.h.b16 %v153
    %v1181 = vunpack.c.l.b16 %v154
    %v1182 = vunpack.c.h.b16 %v154
    %v1183 = vunpack.c.l.b16 %v155
    %v1184 = vunpack.c.h.b16 %v155
    %v1185 = vunpack.c.l.b16 %v156
    %v1186 = vunpack.c.h.b16 %v156
    %v1187 = vunpack.c.l.b16 %v157
    %v1188 = vunpack.c.h.b16 %v157
    %v1189 = vunpack.c.l.b16 %v158
    %v1190 = vunpack.c.h.b16 %v158
    %v1191 = vunpack.c.l.b16 %v159
    %v1192 = vunpack.c.h.b16 %v159
    %v1193 = vunpack.c.l.b16 %v160
    %v1194 = vunpack.c.h.b16 %v160
    %v1195 = vunpack.c.l.b16 %v161
    %v1196 = vunpack.c.h.b16 %v161
    %v1197 = vunpack.c.l.b16 %v162
    %v1198 = vunpack.c.h.b16 %v162
    %v1199 = vunpack.c.l.b16 %v163
    %v1200 = vunpack.c.h.b16 %v163
    %v1201 = vunpack.c.l.b16 %v164
    %v1202 = vunpack.c.h.b16 %v164
    %v1203 = vunpack.c.l.b16 %v165
    %v1204 = vunpack.c.h.b16 %v165
    %v1205 = vunpack.c.l.b16 %v166
    %v1206 = vunpack.c.h.b16 %v166
    %v1207 = vunpack.c.l.b16 %v167
    %v1208 = vunpack.c.h.b16 %v167
    %v1209 = vunpack.c.l.b16 %v168
    %v1210 = vunpack.c.h.b16 %v168
    %v1211 = vunpack.c.l.b16 %v169
    %v1212 = vunpack.c.h.b16 %v169
    %v1213 = vunpack.c.l.b16 %v170
    %v1214 = vunpack.c.h.b16 %v170
    %v1215 = vunpack.c.l.b16 %v171
    %v1216 = vunpack.c.h.b16 %v171
    %v1217 = vunpack.c.l.b16 %v172
    %v1218 = vunpack.c.h.b16 %v172
    %v1219 = vunpack.c.l.b16 %v173
    %v1220 = vunpack.c.h.b16 %v173
    %v1221 = vunpack.c.l.b16 %v174
    %v1222 = vunpack.c.h.b16 %v174
    %v1223 = vunpack.c.l.b16 %v175
    %v1224 = vunpack.c.h.b16 %v175
    %v1225 = vunpack.c.l.b16 %v176
    %v1226 = vunpack.c.h.b16 %v176
    %v1227 = vunpack.c.l.b16 %v177
    %v1228 = vunpack.c.h.b16 %v177
    %v1229 = vunpack.c.l.b16 %v178
    %v1230 = vunpack.c.h.b16 %v178
    %v1231 = vunpack.c.l.b16 %v179
    %v1232 = vunpack.c.h.b16 %v179
    %v1233 = vunpack.c.l.b16 %v180
    %v1234 = vunpack.c.h.b16 %v180
    %v1235 = vunpack.c.l.b16 %v181
    %v1236 = vunpack.c.h.b16 %v181
    %v1237 = vunpack.c.l.b16 %v182
    %v1238 = vunpack.c.h.b16 %v182
    %v1239 = vunpack.c.l.b16 %v183
    %v1240 = vunpack.c.h.b16 %v183
    %v1241 = vunpack.c.l.b16 %v184
    %v1242 = vunpack.c.h.b16 %v184
    %v1243 = vunpack.c.l.b16 %v185
    %v1244 = vunpack.c.h.b16 %v185
    %v1245 = vunpack.c.l.b16 %v186
    %v1246 = vunpack.c.h.b16 %v186
    %v1247 = vunpack.c.l.b16 %v187
    %v1248 = vunpack.c.h.b16 %v187
    %v1249 = vunpack.c.l.b16 %v188
    %v1250 = vunpack.c.h.b16 %v188
    %v1251 = vunpack.c.l.b16 %v189
    %v1252 = vunpack.c.h.b16 %v189
    %v1253 = vunpack.c.l.b16 %v190
    %v1254 = vunpack.c.h.b16 %v190
    %v1255 = vunpack.c.l.b16 %v191
    %v1256 = vunpack.c.h.b16 %v191
    %v1257 = vunpack.c.l.b16 %v192
    %v1258 = vunpack.c.h.b16 %v192
    %v1259 = vunpack.c.l.b16 %v193
    %v1260 = vunpack.c.h.b16 %v193
    %v1261 = vunpack.c.l.b16 %v194
    %v1262 = vunpack.c.h.b16 %v194
    %v1263 = vunpack.c.l.b16 %v195
    %v1264 = vunpack.c.h.b16 %v195
    %v1265 = vunpack.c.l.b16 %v196
    %v1266 = vunpack.c.h.b16 %v196
    %v1267 = vunpack.c.l.b16 %v197
    %v1268 = vunpack.c.h.b16 %v197
    %v1269 = vunpack.c.l.b16 %v198
    %v1270 = vunpack.c.h.b16 %v198
    %v1271 = vunpack.c.l.b16 %v199
    %v1272 = vunpack.c.h.b16 %v199
    %v1273 = vunpack.c.l.b16 %v200
    %v1274 = vunpack.c.h.b16 %v200
    %v1275 = vunpack.c.l.b16 %v201
    %v1276 = vunpack.c.h.b16 %v201
    %v1277 = vunpack.c.l.b16 %v202
    %v1278 = vunpack.c.h.b16 %v202
    %v1279 = vunpack.c.l.b16 %v203
    %v1280 = vunpack.c.h.b16 %v203
    %v1281 = vunpack.c.l.b16 %v204
    %v1282 = vunpack.c.h.b16 %v204
    %v1283 = vunpack.c.l.b16 %v205
    %v1284 = vunpack.c.h.b16 %v205
    %v1285 = vunpack.c.l.b16 %v206
    %v1286 = vunpack.c.h.b16 %v206
    %v1287 = vunpack.c.l.b16 %v207
    %v1288 = vunpack.c.h.b16 %v207
    %v1289 = vunpack.c.l.b16 %v208
    %v1290 = vunpack.c.h.b16 %v208
    %v1291 = vunpack.c.l.b16 %v209
    %v1292 = vunpack.c.h.b16 %v209
    %v1293 = vunpack.c.l.b16 %v210
    %v1294 = vunpack.c.h.b16 %v210
    %v1295 = vunpack.c.l.b16 %v211
    %v1296 = vunpack.c.h.b16 %v211
    %v1297 = vunpack.c.l.b16 %v212
    %v1298 = vunpack.c.h.b16 %v212
    %v1299 = vunpack.c.l.b16 %v213
    %v1300 = vunpack.c.h.b16 %v213
    %v1301 = vunpack.c.l.b16 %v214
    %v1302 = vunpack.c.h.b16 %v214
    %v1303 = vunpack.c.l.b16 %v215
    %v1304 = vunpack.c.h.b16 %v215
    %v1305 = vunpack.c.l.b16 %v216
    %v1306 = vunpack.c.h.b16 %v216
    %v1307 = vunpack.c.l.b16 %v217
    %v1308 = vunpack.c.h.b16 %v217
    %v1309 = vunpack.c.l.b16 %v218
    %v1310 = vunpack.c.h.b16 %v218
    %v1311 = vunpack.c.l.b16 %v219
    %v1312 = vunpack.c.h.b16 %v219
    %v1313 = vunpack.c.l.b16 %v220
    %v1314 = vunpack.c.h.b16 %v220
    %v1315 = vunpack.c.l.b16 %v221
    %v1316 = vunpack.c.h.b16 %v221
    %v1317 = vunpack.c.l.b16 %v222
    %v1318 = vunpack.c.h.b16 %v222
    %v1319 = vunpack.c.l.b16 %v223
    %v1320 = vunpack.c.h.b16 %v223
    %v1321 = vunpack.c.l.b16 %v224
    %v1322 = vunpack.c.h.b16 %v224
    %v1323 = vunpack.c.l.b16 %v225
    %v1324 = vunpack.c.h.b16 %v225
    %v1325 = vunpack.c.l.b16 %v226
    %v1326 = vunpack.c.h.b16 %v226
    %v1327 = vunpack.c.l.b16 %v227
    %v1328 = vunpack.c.h.b16 %v227
    %v1329 = vunpack.c.l.b16 %v228
    %v1330 = vunpack.c.h.b16 %v228
    %v1331 = vunpack.c.l.b16 %v229
    %v1332 = vunpack.c.h.b16 %v229
    %v1333 = vunpack.c.l.b16 %v230
    %v1334 = vunpack.c.h.b16 %v230
    %v1335 = vunpack.c.l.b16 %v231
    %v1336 = vunpack.c.h.b16 %v231
    %v1337 = vunpack.c.l.b16 %v232
    %v1338 = vunpack.c.h.b16 %v232
    %v1339 = vunpack.c.l.b16 %v233
    %v1340 = vunpack.c.h.b16 %v233
    %v1341 = vunpack.c.l.b16 %v234
    %v1342 = vunpack.c.h.b16 %v234
    %v1343 = vunpack.c.l.b16 %v235
    %v1344 = vunpack.c.h.b16 %v235
    %v1345 = vunpack.c.l.b16 %v236
    %v1346 = vunpack.c.h.b16 %v236
    %v1347 = vunpack.c.l.b16 %v237
    %v1348 = vunpack.c.h.b16 %v237
    %v1349 = vunpack.c.l.b16 %v238
    %v1350 = vunpack.c.h.b16 %v238
    %v1351 = vunpack.c.l.b16 %v239
    %v1352 = vunpack.c.h.b16 %v239
    %v1353 = vunpack.c.l.b16 %v240
    %v1354 = vunpack.c.h.b16 %v240
    %v1355 = vunpack.c.l.b16 %v241
    %v1356 = vunpack.c.h.b16 %v241
    %v1357 = vunpack.c.l.b16 %v242
    %v1358 = vunpack.c.h.b16 %v242
    %v1359 = vunpack.c.l.b16 %v243
    %v1360 = vunpack.c.h.b16 %v243
    %v1361 = vunpack.c.l.b16 %v244
    %v1362 = vunpack.c.h.b16 %v244
    %v1363 = vunpack.c.l.b16 %v245
    %v1364 = vunpack.c.h.b16 %v245
    %v1365 = vunpack.c.l.b16 %v246
    %v1366 = vunpack.c.h.b16 %v246
    %v1367 = vunpack.c.l.b16 %v247
    %v1368 = vunpack.c.h.b16 %v247
    %v1369 = vunpack.c.l.b16 %v248
    %v1370 = vunpack.c.h.b16 %v248
    %v1371 = vunpack.c.l.b16 %v249
    %v1372 = vunpack.c.h.b16 %v249
    %v1373 = vunpack.c.l.b16 %v250
    %v1374 = vunpack.c.h.b16 %v250
    %v1375 = vunpack.c.l.b16 %v251
    %v1376 = vunpack.c.h.b16 %v251
    %v1377 = vunpack.c.l.b16 %v252
    %v1378 = vunpack.c.h.b16 %v252
    %v1379 = vunpack.c.l.b16 %v253
    %v1380 = vunpack.c.h.b16 %v253
    %v1381 = vunpack.c.l.b16 %v254
    %v1382 = vunpack.c.h.b16 %v254
    %v1383 = vunpack.c.l.b16 %v255
    %v1384 = vunpack.c.h.b16 %v255
    %v1385 = vunpack.c.l.b16 %v256
    %v1386 = vunpack.c.h.b16 %v256
    %v1387 = vunpack.c.l.b16 %v257
    %v1388 = vunpack.c.h.b16 %v257
    %v1389 = vunpack.c.l.b16 %v258
    %v1390 = vunpack.c.h.b16 %v258
    %v1391 = vunpack.c.l.b16 %v259
    %v1392 = vunpack.c.h.b16 %v259
    %v1393 = vunpack.c.l.b16 %v260
    %v1394 = vunpack.c.h.b16 %v260
    %v1395 = vunpack.c.l.b16 %v261
    %v1396 = vunpack.c.h.b16 %v261
    %v1397 = vunpack.c.l.b16 %v262
    %v1398 = vunpack.c.h.b16 %v262
    %v1399 = vunpack.c.l.b16 %v263
    %v1400 = vunpack.c.h.b16 %v263
    %v1401 = vunpack.c.l.b16 %v264
    %v1402 = vunpack.c.h.b16 %v264
    %v1403 = vunpack.c.l.b16 %v265
    %v1404 = vunpack.c.h.b16 %v265
    %v1405 = vunpack.c.l.b16 %v266
    %v1406 = vunpack.c.h.b16 %v266
    %v1407 = vunpack.c.l.b16 %v267
    %v1408 = vunpack.c.h.b16 %v267
    %v1409 = vunpack.c.l.b16 %v268
    %v1410 = vunpack.c.h.b16 %v268
    %v1411 = vunpack.c.l.b16 %v269
    %v1412 = vunpack.c.h.b16 %v269
    %v1413 = vunpack.c.l.b16 %v270
    %v1414 = vunpack.c.h.b16 %v270
    %v1415 = vunpack.c.l.b16 %v271
    %v1416 = vunpack.c.h.b16 %v271
    %v1417 = vunpack.c.l.b16 %v272
    %v1418 = vunpack.c.h.b16 %v272
    %v1419 = vunpack.c.l.b16 %v273
    %v1420 = vunpack.c.h.b16 %v273
    %v1421 = vunpack.c.l.b16 %v274
    %v1422 = vunpack.c.h.b16 %v274
    %v1423 = vunpack.c.l.b16 %v275
    %v1424 = vunpack.c.h.b16 %v275
    %v1425 = vunpack.c.l.b16 %v276
    %v1426 = vunpack.c.h.b16 %v276
    %v1427 = vunpack.c.l.b16 %v277
    %v1428 = vunpack.c.h.b16 %v277
    %v1429 = vunpack.c.l.b16 %v278
    %v1430 = vunpack.c.h.b16 %v278
    %v1431 = vunpack.c.l.b16 %v279
    %v1432 = vunpack.c.h.b16 %v279
    %v1433 = vunpack.c.l.b16 %v280
    %v1434 = vunpack.c.h.b16 %v280
    %v1435 = vunpack.c.l.b16 %v281
    %v1436 = vunpack.c.h.b16 %v281
    %v1437 = vunpack.c.l.b16 %v282
    %v1438 = vunpack.c.h.b16 %v282
    %v1439 = vunpack.c.l.b16 %v283
    %v1440 = vunpack.c.h.b16 %v283
    %v1441 = vunpack.c.l.b16 %v284
    %v1442 = vunpack.c.h.b16 %v284
    %v1443 = vunpack.c.l.b16 %v285
    %v1444 = vunpack.c.h.b16 %v285
    %v1445 = vunpack.c.l.b16 %v286
    %v1446 = vunpack.c.h.b16 %v286
    %v1447 = vunpack.c.l.b16 %v287
    %v1448 = vunpack.c.h.b16 %v287
    %v1449 = vunpack.c.l.b16 %v288
    %v1450 = vunpack.c.h.b16 %v288
    %v1451 = vunpack.c.l.b16 %v289
    %v1452 = vunpack.c.h.b16 %v289
    %v1453 = vunpack.c.l.b16 %v290
    %v1454 = vunpack.c.h.b16 %v290
    %v1455 = vunpack.c.l.b16 %v291
    %v1456 = vunpack.c.h.b16 %v291
    %v1457 = vunpack.c.l.b16 %v292
    %v1458 = vunpack.c.h.b16 %v292
    %v1459 = vunpack.c.l.b16 %v293
    %v1460 = vunpack.c.h.b16 %v293
    %v1461 = vunpack.c.l.b16 %v294
    %v1462 = vunpack.c.h.b16 %v294
    %v1463 = vunpack.c.l.b16 %v295
    %v1464 = vunpack.c.h.b16 %v295
    %v1465 = vunpack.c.l.b16 %v296
    %v1466 = vunpack.c.h.b16 %v296
    %v1467 = vunpack.c.l.b16 %v297
    %v1468 = vunpack.c.h.b16 %v297
    %v1469 = vunpack.c.l.b16 %v298
    %v1470 = vunpack.c.h.b16 %v298
    %v1471 = vunpack.c.l.b16 %v299
    %v1472 = vunpack.c.h.b16 %v299
    %v1473 = vunpack.c.l.b16 %v300
    %v1474 = vunpack.c.h.b16 %v300
    %v1475 = vunpack.c.l.b16 %v301
    %v1476 = vunpack.c.h.b16 %v301
    %v1477 = vunpack.c.l.b16 %v302
    %v1478 = vunpack.c.h.b16 %v302
    %v1479 = vunpack.c.l.b16 %v303
    %v1480 = vunpack.c.h.b16 %v303
    %v1481 = vunpack.c.l.b16 %v304
    %v1482 = vunpack.c.h.b16 %v304
    %v1483 = vunpack.c.l.b16 %v305
    %v1484 = vunpack.c.h.b16 %v305
    %v1485 = vunpack.c.l.b16 %v306
    %v1486 = vunpack.c.h.b16 %v306
    %v1487 = vunpack.c.l.b16 %v307
    %v1488 = vunpack.c.h.b16 %v307
    %v1489 = vunpack.c.l.b16 %v308
    %v1490 = vunpack.c.h.b16 %v308
    %v1491 = vunpack.c.l.b16 %v309
    %v1492 = vunpack.c.h.b16 %v309
    %v1493 = vunpack.c.l.b16 %v310
    %v1494 = vunpack.c.h.b16 %v310
    %v1495 = vunpack.c.l.b16 %v311
    %v1496 = vunpack.c.h.b16 %v311
    %v1497 = vunpack.c.l.b16 %v312
    %v1498 = vunpack.c.h.b16 %v312
    %v1499 = vunpack.c.l.b16 %v313
    %v1500 = vunpack.c.h.b16 %v313
    %v1501 = vunpack.c.l.b16 %v314
    %v1502 = vunpack.c.h.b16 %v314
    %v1503 = vunpack.c.l.b16 %v315
    %v1504 = vunpack.c.h.b16 %v315
    %v1505 = vunpack.c.l.b16 %v316
    %v1506 = vunpack.c.h.b16 %v316
    %v1507 = vunpack.c.l.b16 %v317
    %v1508 = vunpack.c.h.b16 %v317
    %v1509 = vunpack.c.l.b16 %v318
    %v1510 = vunpack.c.h.b16 %v318
    %v1511 = vunpack.c.l.b16 %v319
    %v1512 = vunpack.c.h.b16 %v319
    %v1513 = vunpack.c.l.b16 %v320
    %v1514 = vunpack.c.h.b16 %v320
    %v1515 = vunpack.c.l.b16 %v321
    %v1516 = vunpack.c.h.b16 %v321
    %v1517 = vunpack.c.l.b16 %v322
    %v1518 = vunpack.c.h.b16 %v322
    %v1519 = vunpack.c.l.b16 %v323
    %v1520 = vunpack.c.h.b16 %v323
    %v1521 = vunpack.c.l.b16 %v324
    %v1522 = vunpack.c.h.b16 %v324
    %v1523 = vunpack.c.l.b16 %v325
    %v1524 = vunpack.c.h.b16 %v325
    %v1525 = vunpack.c.l.b16 %v326
    %v1526 = vunpack.c.h.b16 %v326
    %v1527 = vunpack.c.l.b16 %v327
    %v1528 = vunpack.c.h.b16 %v327
    %v1529 = vunpack.c.l.b16 %v328
    %v1530 = vunpack.c.h.b16 %v328
    %v1531 = vunpack.c.l.b16 %v329
    %v1532 = vunpack.c.h.b16 %v329
    %v1533 = vunpack.c.l.b16 %v330
    %v1534 = vunpack.c.h.b16 %v330
    %v1535 = vunpack.c.l.b16 %v331
    %v1536 = vunpack.c.h.b16 %v331
    %v1537 = vunpack.c.l.b16 %v332
    %v1538 = vunpack.c.h.b16 %v332
    %v1539 = vunpack.c.l.b16 %v333
    %v1540 = vunpack.c.h.b16 %v333
    %v1541 = vunpack.c.l.b16 %v334
    %v1542 = vunpack.c.h.b16 %v334
    %v1543 = vunpack.c.l.b16 %v335
    %v1544 = vunpack.c.h.b16 %v335
    %v1545 = vunpack.c.l.b16 %v336
    %v1546 = vunpack.c.h.b16 %v336
    %v1547 = vunpack.c.l.b16 %v337
    %v1548 = vunpack.c.h.b16 %v337
    %v1549 = vunpack.c.l.b16 %v338
    %v1550 = vunpack.c.h.b16 %v338
    %v1551 = vunpack.c.l.b16 %v339
    %v1552 = vunpack.c.h.b16 %v339
    %v1553 = vunpack.c.l.b16 %v340
    %v1554 = vunpack.c.h.b16 %v340
    %v1555 = vunpack.c.l.b16 %v341
    %v1556 = vunpack.c.h.b16 %v341
    %v1557 = vunpack.c.l.b16 %v342
    %v1558 = vunpack.c.h.b16 %v342
    %v1559 = vunpack.c.l.b16 %v343
    %v1560 = vunpack.c.h.b16 %v343
    %v1561 = vunpack.c.l.b16 %v344
    %v1562 = vunpack.c.h.b16 %v344
    %v1563 = vunpack.c.l.b16 %v345
    %v1564 = vunpack.c.h.b16 %v345
    %v1565 = vunpack.c.l.b16 %v346
    %v1566 = vunpack.c.h.b16 %v346
    %v1567 = vunpack.c.l.b16 %v347
    %v1568 = vunpack.c.h.b16 %v347
    %v1569 = vunpack.c.l.b16 %v348
    %v1570 = vunpack.c.h.b16 %v348
    %v1571 = vunpack.c.l.b16 %v349
    %v1572 = vunpack.c.h.b16 %v349
    %v1573 = vunpack.c.l.b16 %v350
    %v1574 = vunpack.c.h.b16 %v350
    %v1575 = vunpack.c.l.b16 %v351
    %v1576 = vunpack.c.h.b16 %v351
    %v1577 = vunpack.c.l.b16 %v352
    %v1578 = vunpack.c.h.b16 %v352
    %v1579 = vunpack.c.l.b16 %v353
    %v1580 = vunpack.c.h.b16 %v353
    %v1581 = vunpack.c.l.b16 %v354
    %v1582 = vunpack.c.h.b16 %v354
    %v1583 = vunpack.c.l.b16 %v355
    %v1584 = vunpack.c.h.b16 %v355
    %v1585 = vunpack.c.l.b16 %v356
    %v1586 = vunpack.c.h.b16 %v356
    %v1587 = vunpack.c.l.b16 %v357
    %v1588 = vunpack.c.h.b16 %v357
    %v1589 = vunpack.c.l.b16 %v358
    %v1590 = vunpack.c.h.b16 %v358
    %v1591 = vunpack.c.l.b16 %v359
    %v1592 = vunpack.c.h.b16 %v359
    %v1593 = vunpack.c.l.b16 %v360
    %v1594 = vunpack.c.h.b16 %v360
    %v1595 = vunpack.c.l.b16 %v361
    %v1596 = vunpack.c.h.b16 %v361
    %v1597 = vunpack.c.l.b16 %v362
    %v1598 = vunpack.c.h.b16 %v362
    %v1599 = vunpack.c.l.b16 %v363
    %v1600 = vunpack.c.h.b16 %v363
    %v1601 = vunpack.c.l.b16 %v364
    %v1602 = vunpack.c.h.b16 %v364
    %v1603 = vunpack.c.l.b16 %v365
    %v1604 = vunpack.c.h.b16 %v365
    %v1605 = vunpack.c.l.b16 %v366
    %v1606 = vunpack.c.h.b16 %v366
    %v1607 = vunpack.c.l.b16 %v367
    %v1608 = vunpack.c.h.b16 %v367
    %v1609 = vunpack.c.l.b16 %v368
    %v1610 = vunpack.c.h.b16 %v368
    %v1611 = vunpack.c.l.b16 %v369
    %v1612 = vunpack.c.h.b16 %v369
    %v1613 = vunpack.c.l.b16 %v370
    %v1614 = vunpack.c.h.b16 %v370
    %v1615 = vunpack.c.l.b16 %v371
    %v1616 = vunpack.c.h.b16 %v371
    %v1617 = vunpack.c.l.b16 %v372
    %v1618 = vunpack.c.h.b16 %v372
    %v1619 = vunpack.c.l.b16 %v373
    %v1620 = vunpack.c.h.b16 %v373
    %v1621 = vunpack.c.l.b16 %v374
    %v1622 = vunpack.c.h.b16 %v374
    %v1623 = vunpack.c.l.b16 %v375
    %v1624 = vunpack.c.h.b16 %v375
    %v1625 = vunpack.c.l.b16 %v376
    %v1626 = vunpack.c.h.b16 %v376
    %v1627 = vunpack.c.l.b16 %v377
    %v1628 = vunpack.c.h.b16 %v377
    %v1629 = vunpack.c.l.b16 %v378
    %v1630 = vunpack.c.h.b16 %v378
    %v1631 = vunpack.c.l.b16 %v379
    %v1632 = vunpack.c.h.b16 %v379
    %v1633 = vunpack.c.l.b16 %v380
    %v1634 = vunpack.c.h.b16 %v380
    %v1635 = vunpack.c.l.b16 %v381
    %v1636 = vunpack.c.h.b16 %v381
    %v1637 = vunpack.c.l.b16 %v382
    %v1638 = vunpack.c.h.b16 %v382
    %v1639 = vunpack.c.l.b16 %v383
    %v1640 = vunpack.c.h.b16 %v383
    %v1641 = vunpack.c.l.b16 %v384
    %v1642 = vunpack.c.h.b16 %v384
    %v1643 = vunpack.c.l.b16 %v385
    %v1644 = vunpack.c.h.b16 %v385
    %v1645 = vunpack.c.l.b16 %v386
    %v1646 = vunpack.c.h.b16 %v386
    %v1647 = vunpack.c.l.b16 %v387
    %v1648 = vunpack.c.h.b16 %v387
    %v1649 = vunpack.c.l.b16 %v388
    %v1650 = vunpack.c.h.b16 %v388
    %v1651 = vunpack.c.l.b16 %v389
    %v1652 = vunpack.c.h.b16 %v389
    %v1653 = vunpack.c.l.b16 %v390
    %v1654 = vunpack.c.h.b16 %v390
    %v1655 = vunpack.c.l.b16 %v391
    %v1656 = vunpack.c.h.b16 %v391
    %v1657 = vunpack.c.l.b16 %v392
    %v1658 = vunpack.c.h.b16 %v392
    %v1659 = vunpack.c.l.b16 %v393
    %v1660 = vunpack.c.h.b16 %v393
    %v1661 = vunpack.c.l.b16 %v394
    %v1662 = vunpack.c.h.b16 %v394
    %v1663 = vunpack.c.l.b16 %v395
    %v1664 = vunpack.c.h.b16 %v395
    %v1665 = vunpack.c.l.b16 %v396
    %v1666 = vunpack.c.h.b16 %v396
    %v1667 = vunpack.c.l.b16 %v397
    %v1668 = vunpack.c.h.b16 %v397
    %v1669 = vunpack.c.l.b16 %v398
    %v1670 = vunpack.c.h.b16 %v398
    %v1671 = vunpack.c.l.b16 %v399
    %v1672 = vunpack.c.h.b16 %v399
    %v1673 = vunpack.c.l.b16 %v400
    %v1674 = vunpack.c.h.b16 %v400
    %v1675 = vunpack.c.l.b16 %v401
    %v1676 = vunpack.c.h.b16 %v401
    %v1677 = vunpack.c.l.b16 %v402
    %v1678 = vunpack.c.h.b16 %v402
    %v1679 = vunpack.c.l.b16 %v403
    %v1680 = vunpack.c.h.b16 %v403
    %v1681 = vunpack.c.l.b16 %v404
    %v1682 = vunpack.c.h.b16 %v404
    %v1683 = vunpack.c.l.b16 %v405
    %v1684 = vunpack.c.h.b16 %v405
    %v1685 = vunpack.c.l.b16 %v406
    %v1686 = vunpack.c.h.b16 %v406
    %v1687 = vunpack.c.l.b16 %v407
    %v1688 = vunpack.c.h.b16 %v407
    %v1689 = vunpack.c.l.b16 %v408
    %v1690 = vunpack.c.h.b16 %v408
    %v1691 = vunpack.c.l.b16 %v409
    %v1692 = vunpack.c.h.b16 %v409
    %v1693 = vunpack.c.l.b16 %v410
    %v1694 = vunpack.c.h.b16 %v410
    %v1695 = vunpack.c.l.b16 %v411
    %v1696 = vunpack.c.h.b16 %v411
    %v1697 = vunpack.c.l.b16 %v412
    %v1698 = vunpack.c.h.b16 %v412
    %v1699 = vunpack.c.l.b16 %v413
    %v1700 = vunpack.c.h.b16 %v413
    %v1701 = vunpack.c.l.b16 %v414
    %v1702 = vunpack.c.h.b16 %v414
    %v1703 = vunpack.c.l.b16 %v415
    %v1704 = vunpack.c.h.b16 %v415
    %v1705 = vunpack.c.l.b16 %v416
    %v1706 = vunpack.c.h.b16 %v416
    %v1707 = vunpack.c.l.b16 %v417
    %v1708 = vunpack.c.h.b16 %v417
    %v1709 = vunpack.c.l.b16 %v418
    %v1710 = vunpack.c.h.b16 %v418
    %v1711 = vunpack.c.l.b16 %v419
    %v1712 = vunpack.c.h.b16 %v419
    %v1713 = vunpack.c.l.b16 %v420
    %v1714 = vunpack.c.h.b16 %v420
    %v1715 = vunpack.c.l.b16 %v421
    %v1716 = vunpack.c.h.b16 %v421
    %v1717 = vunpack.c.l.b16 %v422
    %v1718 = vunpack.c.h.b16 %v422
    %v1719 = vunpack.c.l.b16 %v423
    %v1720 = vunpack.c.h.b16 %v423
    %v1721 = vunpack.c.l.b16 %v424
    %v1722 = vunpack.c.h.b16 %v424
    %v1723 = vunpack.c.l.b16 %v425
    %v1724 = vunpack.c.h.b16 %v425
    %v1725 = vunpack.c.l.b16 %v426
    %v1726 = vunpack.c.h.b16 %v426
    %v1727 = vunpack.c.l.b16 %v427
    %v1728 = vunpack.c.h.b16 %v427
    %v1729 = vunpack.c.l.b16 %v428
    %v1730 = vunpack.c.h.b16 %v428
    %v1731 = vunpack.c.l.b16 %v429
    %v1732 = vunpack.c.h.b16 %v429
    %v1733 = vunpack.c.l.b16 %v430
    %v1734 = vunpack.c.h.b16 %v430
    %v1735 = vunpack.c.l.b16 %v431
    %v1736 = vunpack.c.h.b16 %v431
    %v1737 = vunpack.c.l.b16 %v432
    %v1738 = vunpack.c.h.b16 %v432
    %v1739 = vunpack.c.l.b16 %v433
    %v1740 = vunpack.c.h.b16 %v433
    %v1741 = vunpack.c.l.b16 %v434
    %v1742 = vunpack.c.h.b16 %v434
    %v1743 = vunpack.c.l.b16 %v435
    %v1744 = vunpack.c.h.b16 %v435
    %v1745 = vunpack.c.l.b16 %v436
    %v1746 = vunpack.c.h.b16 %v436
    %v1747 = vunpack.c.l.b16 %v437
    %v1748 = vunpack.c.h.b16 %v437
    %v1749 = vunpack.c.l.b16 %v438
    %v1750 = vunpack.c.h.b16 %v438
    %v1751 = vunpack.c.l.b16 %v439
    %v1752 = vunpack.c.h.b16 %v439
    %v1753 = vunpack.c.l.b16 %v440
    %v1754 = vunpack.c.h.b16 %v440
    %v1755 = vpack.c.b16 %v925, %v923
    %v1756 = vpack.c.b16 %v926, %v924
    %v1757 = vpack.c.b16 %v929, %v927
    %v1758 = vpack.c.b16 %v930, %v928
    %v1759 = vpack.c.b16 %v933, %v931
    %v1760 = vpack.c.b16 %v934, %v932
    %v1761 = vpack.c.b16 %v937, %v935
    %v1762 = vpack.c.b16 %v938, %v936
    %v1763 = vpack.c.b16 %v941, %v939
    %v1764 = vpack.c.b16 %v942, %v940
    %v1765 = vpack.c.b16 %v945, %v943
    %v1766 = vpack.c.b16 %v946, %v944
    %v1767 = vpack.c.b16 %v949, %v947
    %v1768 = vpack.c.b16 %v950, %v948
    %v1769 = vpack.c.b16 %v953, %v951
    %v1770 = vpack.c.b16 %v954, %v952
    %v1771 = vpack.c.b16 %v957, %v955
    %v1772 = vpack.c.b16 %v958, %v956
    %v1773 = vpack.c.b16 %v961, %v959
    %v1774 = vpack.c.b16 %v962, %v960
    %v1775 = vpack.c.b16 %v965, %v963
    %v1776 = vpack.c.b16 %v966, %v964
    %v1777 = vpack.c.b16 %v969, %v967
    %v1778 = vpack.c.b16 %v970, %v968
    %v1779 = vpack.c.b16 %v973, %v971
    %v1780 = vpack.c.b16 %v974, %v972
    %v1781 = vpack.c.b16 %v977, %v975
    %v1782 = vpack.c.b16 %v978, %v976
    %v1783 = vpack.c.b16 %v981, %v979
    %v1784 = vpack.c.b16 %v982, %v980
    %v1785 = vpack.c.b16 %v985, %v983
    %v1786 = vpack.c.b16 %v986, %v984
    %v1787 = vpack.c.b16 %v989, %v987
    %v1788 = vpack.c.b16 %v990, %v988
    %v1789 = vpack.c.b16 %v993, %v991
    %v1790 = vpack.c.b16 %v994, %v992
    %v1791 = vpack.c.b16 %v997, %v995
    %v1792 = vpack.c.b16 %v998, %v996
    %v1793 = vpack.c.b16 %v1001, %v999
    %v1794 = vpack.c.b16 %v1002, %v1000
    %v1795 = vpack.c.b16 %v1005, %v1003
    %v1796 = vpack.c.b16 %v1006, %v1004
    %v1797 = vpack.c.b16 %v1009, %v1007
    %v1798 = vpack.c.b16 %v1010, %v1008
    %v1799 = vpack.c.b16 %v1013, %v1011
    %v1800 = vpack.c.b16 %v1014, %v1012
    %v1801 = vpack.c.b16 %v1017, %v1015
    %v1802 = vpack.c.b16 %v1018, %v1016
    %v1803 = vpack.c.b16 %v1021, %v1019
    %v1804 = vpack.c.b16 %v1022, %v1020
    %v1805 = vpack.c.b16 %v1025, %v1023
    %v1806 = vpack.c.b16 %v1026, %v1024
    %v1807 = vpack.c.b16 %v1029, %v1027
    %v1808 = vpack.c.b16 %v1030, %v1028
    %v1809 = vpack.c.b16 %v1033, %v1031
    %v1810 = vpack.c.b16 %v1034, %v1032
    %v1811 = vpack.c.b16 %v1037, %v1035
    %v1812 = vpack.c.b16 %v1038, %v1036
    %v1813 = vpack.c.b16 %v1041, %v1039
    %v1814 = vpack.c.b16 %v1042, %v1040
    %v1815 = vpack.c.b16 %v1045, %v1043
    %v1816 = vpack.c.b16 %v1046, %v1044
    %v1817 = vpack.c.b16 %v1049, %v1047
    %v1818 = vpack.c.b16 %v1050, %v1048
    %v1819 = vpack.c.b16 %v1053, %v1051
    %v1820 = vpack.c.b16 %v1054, %v1052
    %v1821 = vpack.c.b16 %v1057, %v1055
    %v1822 = vpack.c.b16 %v1058, %v1056
    %v1823 = vpack.c.b16 %v1061, %v1059
    %v1824 = vpack.c.b16 %v1062, %v1060
    %v1825 = vpack.c.b16 %v1065, %v1063
    %v1826 = vpack.c.b16 %v1066, %v1064
    %v1827 = vpack.c.b16 %v1069, %v1067
    %v1828 = vpack.c.b16 %v1070, %v1068
    %v1829 = vpack.c.b16 %v1073, %v1071
    %v1830 = vpack.c.b16 %v1074, %v1072
    %v1831 = vpack.c.b16 %v1077, %v1075
    %v1832 = vpack.c.b16 %v1078, %v1076
    %v1833 = vpack.c.b16 %v1081, %v1079
    %v1834 = vpack.c.b16 %v1082, %v1080
    %v1835 = vpack.c.b16 %v1085, %v1083
    %v1836 = vpack.c.b16 %v1086, %v1084
    %v1837 = vpack.c.b16 %v1089, %v1087
    %v1838 = vpack.c.b16 %v1090, %v1088
    %v1839 = vpack.c.b16 %v1093, %v1091
    %v1840 = vpack.c.b16 %v1094, %v1092
    %v1841 = vpack.c.b16 %v1097, %v1095
    %v1842 = vpack.c.b16 %v1098, %v1096
    %v1843 = vpack.c.b16 %v1101, %v1099
    %v1844 = vpack.c.b16 %v1102, %v1100
    %v1845 = vpack.c.b16 %v1105, %v1103
    %v1846 = vpack.c.b16 %v1106, %v1104
    %v1847 = vpack.c.b16 %v1109, %v1107
    %v1848 = vpack.c.b16 %v1110, %v1108
    %v1849 = vpack.c.b16 %v1113, %v1111
    %v1850 = vpack.c.b16 %v1114, %v1112
    %v1851 = vpack.c.b16 %v1117, %v1115
    %v1852 = vpack.c.b16 %v1118, %v1116
    %v1853 = vpack.c.b16 %v1121, %v1119
    %v1854 = vpack.c.b16 %v1122, %v1120
    %v1855 = vpack.c.b16 %v1125, %v1123
    %v1856 = vpack.c.b16 %v1126, %v1124
    %v1857 = vpack.c.b16 %v1129, %v1127
    %v1858 = vpack.c.b16 %v1130, %v1128
    %v1859 = vpack.c.b16 %v1133, %v1131
    %v1860 = vpack.c.b16 %v1134, %v1132
    %v1861 = vpack.c.b16 %v1137, %v1135
    %v1862 = vpack.c.b16 %v1138, %v1136
    %v1863 = vpack.c.b16 %v1141, %v1139
    %v1864 = vpack.c.b16 %v1142, %v1140
    %v1865 = vpack.c.b16 %v1145, %v1143
    %v1866 = vpack.c.b16 %v1146, %v1144
    %v1867 = vpack.c.b16 %v1149, %v1147
    %v1868 = vpack.c.b16 %v1150, %v1148
    %v1869 = vpack.c.b16 %v1153, %v1151
    %v1870 = vpack.c.b16 %v1154, %v1152
    %v1871 = vpack.c.b16 %v1157, %v1155
    %v1872 = vpack.c.b16 %v1158, %v1156
    %v1873 = vpack.c.b16 %v1161, %v1159
    %v1874 = vpack.c.b16 %v1162, %v1160
    %v1875 = vpack.c.b16 %v1165, %v1163
    %v1876 = vpack.c.b16 %v1166, %v1164
    %v1877 = vpack.c.b16 %v1169, %v1167
    %v1878 = vpack.c.b16 %v1170, %v1168
    %v1879 = vpack.c.b16 %v1173, %v1171
    %v1880 = vpack.c.b16 %v1174, %v1172
    %v1881 = vpack.c.b16 %v1177, %v1175
    %v1882 = vpack.c.b16 %v1178, %v1176
    %v1883 = vpack.c.b16 %v1181, %v1179
    %v1884 = vpack.c.b16 %v1182, %v1180
    %v1885 = vpack.c.b16 %v1185, %v1183
    %v1886 = vpack.c.b16 %v1186, %v1184
    %v1887 = vpack.c.b16 %v1189, %v1187
    %v1888 = vpack.c.b16 %v1190, %v1188
    %v1889 = vpack.c.b16 %v1193, %v1191
    %v1890 = vpack.c.b16 %v1194, %v1192
    %v1891 = vpack.c.b16 %v1197, %v1195
    %v1892 = vpack.c.b16 %v1198, %v1196
    %v1893 = vpack.c.b16 %v1201, %v1199
    %v1894 = vpack.c.b16 %v1202, %v1200
    %v1895 = vpack.c.b16 %v1205, %v1203
    %v1896 = vpack.c.b16 %v1206, %v1204
    %v1897 = vpack.c.b16 %v1209, %v1207
    %v1898 = vpack.c.b16 %v1210, %v1208
    %v1899 = vpack.c.b16 %v1213, %v1211
    %v1900 = vpack.c.b16 %v1214, %v1212
    %v1901 = vpack.c.b16 %v1217, %v1215
    %v1902 = vpack.c.b16 %v1218, %v1216
    %v1903 = vpack.c.b16 %v1221, %v1219
    %v1904 = vpack.c.b16 %v1222, %v1220
    %v1905 = vpack.c.b16 %v1225, %v1223
    %v1906 = vpack.c.b16 %v1226, %v1224
    %v1907 = vpack.c.b16 %v1229, %v1227
    %v1908 = vpack.c.b16 %v1230, %v1228
    %v1909 = vpack.c.b16 %v1233, %v1231
    %v1910 = vpack.c.b16 %v1234, %v1232
    %v1911 = vpack.c.b16 %v1237, %v1235
    %v1912 = vpack.c.b16 %v1238, %v1236
    %v1913 = vpack.c.b16 %v1241, %v1239
    %v1914 = vpack.c.b16 %v1242, %v1240
    %v1915 = vpack.c.b16 %v1245, %v1243
    %v1916 = vpack.c.b16 %v1246, %v1244
    %v1917 = vpack.c.b16 %v1249, %v1247
    %v1918 = vpack.c.b16 %v1250, %v1248
    %v1919 = vpack.c.b16 %v1253, %v1251
    %v1920 = vpack.c.b16 %v1254, %v1252
    %v1921 = vpack.c.b16 %v1257, %v1255
    %v1922 = vpack.c.b16 %v1258, %v1256
    %v1923 = vpack.c.b16 %v1261, %v1259
    %v1924 = vpack.c.b16 %v1262, %v1260
    %v1925 = vpack.c.b16 %v1265, %v1263
    %v1926 = vpack.c.b16 %v1266, %v1264
    %v1927 = vpack.c.b16 %v1269, %v1267
    %v1928 = vpack.c.b16 %v1270, %v1268
    %v1929 = vpack.c.b16 %v1273, %v1271
    %v1930 = vpack.c.b16 %v1274, %v1272
    %v1931 = vpack.c.b16 %v1277, %v1275
    %v1932 = vpack.c.b16 %v1278, %v1276
    %v1933 = vpack.c.b16 %v1281, %v1279
    %v1934 = vpack.c.b16 %v1282, %v1280
    %v1935 = vpack.c.b16 %v1285, %v1283
    %v1936 = vpack.c.b16 %v1286, %v1284
    %v1937 = vpack.c.b16 %v1289, %v1287
    %v1938 = vpack.c.b16 %v1290, %v1288
    %v1939 = vpack.c.b16 %v1293, %v1291
    %v1940 = vpack.c.b16 %v1294, %v1292
    %v1941 = vpack.c.b16 %v1297, %v1295
    %v1942 = vpack.c.b16 %v1298, %v1296
    %v1943 = vpack.c.b16 %v1301, %v1299
    %v1944 = vpack.c.b16 %v1302, %v1300
    %v1945 = vpack.c.b16 %v1305, %v1303
    %v1946 = vpack.c.b16 %v1306, %v1304
    %v1947 = vpack.c.b16 %v1309, %v1307
    %v1948 = vpack.c.b16 %v1310, %v1308
    %v1949 = vpack.c.b16 %v1313, %v1311
    %v1950 = vpack.c.b16 %v1314, %v1312
    %v1951 = vpack.c.b16 %v1317, %v1315
    %v1952 = vpack.c.b16 %v1318, %v1316
    %v1953 = vpack.c.b16 %v1321, %v1319
    %v1954 = vpack.c.b16 %v1322, %v1320
    %v1955 = vpack.c.b16 %v1325, %v1323
    %v1956 = vpack.c.b16 %v1326, %v1324
    %v1957 = vpack.c.b16 %v1329, %v1327
    %v1958 = vpack.c.b16 %v1330, %v1328
    %v1959 = vpack.c.b16 %v1333, %v1331
    %v1960 = vpack.c.b16 %v1334, %v1332
    %v1961 = vpack.c.b16 %v1337, %v1335
    %v1962 = vpack.c.b16 %v1338, %v1336
    %v1963 = vpack.c.b16 %v1341, %v1339
    %v1964 = vpack.c.b16 %v1342, %v1340
    %v1965 = vpack.c.b16 %v1345, %v1343
    %v1966 = vpack.c.b16 %v1346, %v1344
    %v1967 = vpack.c.b16 %v1349, %v1347
    %v1968 = vpack.c.b16 %v1350, %v1348
    %v1969 = vpack.c.b16 %v1353, %v1351
    %v1970 = vpack.c.b16 %v1354, %v1352
    %v1971 = vpack.c.b16 %v1357, %v1355
    %v1972 = vpack.c.b16 %v1358, %v1356
    %v1973 = vpack.c.b16 %v1361, %v1359
    %v1974 = vpack.c.b16 %v1362, %v1360
    %v1975 = vpack.c.b16 %v1365, %v1363
    %v1976 = vpack.c.b16 %v1366, %v1364
    %v1977 = vpack.c.b16 %v1369, %v1367
    %v1978 = vpack.c.b16 %v1370, %v1368
    %v1979 = vpack.c.b16 %v1373, %v1371
    %v1980 = vpack.c.b16 %v1374, %v1372
    %v1981 = vpack.c.b16 %v1377, %v1375
    %v1982 = vpack.c.b16 %v1378, %v1376
    %v1983 = vpack.c.b16 %v1381, %v1379
    %v1984 = vpack.c.b16 %v1382, %v1380
    %v1985 = vpack.c.b16 %v1385, %v1383
    %v1986 = vpack.c.b16 %v1386, %v1384
    %v1987 = vpack.c.b16 %v1389, %v1387
    %v1988 = vpack.c.b16 %v1390, %v1388
    %v1989 = vpack.c.b16 %v1393, %v1391
    %v1990 = vpack.c.b16 %v1394, %v1392
    %v1991 = vpack.c.b16 %v1397, %v1395
    %v1992 = vpack.c.b16 %v1398, %v1396
    %v1993 = vpack.c.b16 %v1401, %v1399
    %v1994 = vpack.c.b16 %v1402, %v1400
    %v1995 = vpack.c.b16 %v1405, %v1403
    %v1996 = vpack.c.b16 %v1406, %v1404
    %v1997 = vpack.c.b16 %v1409, %v1407
    %v1998 = vpack.c.b16 %v1410, %v1408
    %v1999 = vpack.c.b16 %v1413, %v1411
    %v2000 = vpack.c.b16 %v1414, %v1412
    %v2001 = vpack.c.b16 %v1417, %v1415
    %v2002 = vpack.c.b16 %v1418, %v1416
    %v2003 = vpack.c.b16 %v1421, %v1419
    %v2004 = vpack.c.b16 %v1422, %v1420
    %v2005 = vpack.c.b16 %v1425, %v1423
    %v2006 = vpack.c.b16 %v1426, %v1424
    %v2007 = vpack.c.b16 %v1429, %v1427
    %v2008 = vpack.c.b16 %v1430, %v1428
    %v2009 = vpack.c.b16 %v1433, %v1431
    %v2010 = vpack.c.b16 %v1434, %v1432
    %v2011 = vpack.c.b16 %v1437, %v1435
    %v2012 = vpack.c.b16 %v1438, %v1436
    %v2013 = vpack.c.b16 %v1441, %v1439
    %v2014 = vpack.c.b16 %v1442, %v1440
    %v2015 = vpack.c.b16 %v1445, %v1443
    %v2016 = vpack.c.b16 %v1446, %v1444
    %v2017 = vpack.c.b16 %v1449, %v1447
    %v2018 = vpack.c.b16 %v1450, %v1448
    %v2019 = vpack.c.b16 %v1453, %v1451
    %v2020 = vpack.c.b16 %v1454, %v1452
    %v2021 = vpack.c.b16 %v1457, %v1455
    %v2022 = vpack.c.b16 %v1458, %v1456
    %v2023 = vpack.c.b16 %v1461, %v1459
    %v2024 = vpack.c.b16 %v1462, %v1460
    %v2025 = vpack.c.b16 %v1465, %v1463
    %v2026 = vpack.c.b16 %v1466, %v1464
    %v2027 = vpack.c.b16 %v1469, %v1467
    %v2028 = vpack.c.b16 %v1470, %v1468
    %v2029 = vpack.c.b16 %v1473, %v1471
    %v2030 = vpack.c.b16 %v1474, %v1472
    %v2031 = vpack.c.b16 %v1477, %v1475
    %v2032 = vpack.c.b16 %v1478, %v1476
    %v2033 = vpack.c.b16 %v1481, %v1479
    %v2034 = vpack.c.b16 %v1482, %v1480
    %v2035 = vpack.c.b16 %v1485, %v1483
    %v2036 = vpack.c.b16 %v1486, %v1484
    %v2037 = vpack.c.b16 %v1489, %v1487
    %v2038 = vpack.c.b16 %v1490, %v1488
    %v2039 = vpack.c.b16 %v1493, %v1491
    %v2040 = vpack.c.b16 %v1494, %v1492
    %v2041 = vpack.c.b16 %v1497, %v1495
    %v2042 = vpack.c.b16 %v1498, %v1496
    %v2043 = vpack.c.b16 %v1501, %v1499
    %v2044 = vpack.c.b16 %v1502, %v1500
    %v2045 = vpack.c.b16 %v1505, %v1503
    %v2046 = vpack.c.b16 %v1506, %v1504
    %v2047 = vpack.c.b16 %v1509, %v1507
    %v2048 = vpack.c.b16 %v1510, %v1508
    %v2049 = vpack.c.b16 %v1513, %v1511
    %v2050 = vpack.c.b16 %v1514, %v1512
    %v2051 = vpack.c.b16 %v1517, %v1515
    %v2052 = vpack.c.b16 %v1518, %v1516
    %v2053 = vpack.c.b16 %v1521, %v1519
    %v2054 = vpack.c.b16 %v1522, %v1520
    %v2055 = vpack.c.b16 %v1525, %v1523
    %v2056 = vpack.c.b16 %v1526, %v1524
    %v2057 = vpack.c.b16 %v1529, %v1527
    %v2058 = vpack.c.b16 %v1530, %v1528
    %v2059 = vpack.c.b16 %v1533, %v1531
    %v2060 = vpack.c.b16 %v1534, %v1532
    %v2061 = vpack.c.b16 %v1537, %v1535
    %v2062 = vpack.c.b16 %v1538, %v1536
    %v2063 = vpack.c.b16 %v1541, %v1539
    %v2064 = vpack.c.b16 %v1542, %v1540
    %v2065 = vpack.c.b16 %v1545, %v1543
    %v2066 = vpack.c.b16 %v1546, %v1544
    %v2067 = vpack.c.b16 %v1549, %v1547
    %v2068 = vpack.c.b16 %v1550, %v1548
    %v2069 = vpack.c.b16 %v1553, %v1551
    %v2070 = vpack.c.b16 %v1554, %v1552
    %v2071 = vpack.c.b16 %v1557, %v1555
    %v2072 = vpack.c.b16 %v1558, %v1556
    %v2073 = vpack.c.b16 %v1561, %v1559
    %v2074 = vpack.c.b16 %v1562, %v1560
    %v2075 = vpack.c.b16 %v1565, %v1563
    %v2076 = vpack.c.b16 %v1566, %v1564
    %v2077 = vpack.c.b16 %v1569, %v1567
    %v2078 = vpack.c.b16 %v1570, %v1568
    %v2079 = vpack.c.b16 %v1573, %v1571
    %v2080 = vpack.c.b16 %v1574, %v1572
    %v2081 = vpack.c.b16 %v1577, %v1575
    %v2082 = vpack.c.b16 %v1578, %v1576
    %v2083 = vpack.c.b16 %v1581, %v1579
    %v2084 = vpack.c.b16 %v1582, %v1580
    %v2085 = vpack.c.b16 %v1585, %v1583
    %v2086 = vpack.c.b16 %v1586, %v1584
    %v2087 = vpack.c.b16 %v1589, %v1587
    %v2088 = vpack.c.b16 %v1590, %v1588
    %v2089 = vpack.c.b16 %v1593, %v1591
    %v2090 = vpack.c.b16 %v1594, %v1592
    %v2091 = vpack.c.b16 %v1597, %v1595
    %v2092 = vpack.c.b16 %v1598, %v1596
    %v2093 = vpack.c.b16 %v1601, %v1599
    %v2094 = vpack.c.b16 %v1602, %v1600
    %v2095 = vpack.c.b16 %v1605, %v1603
    %v2096 = vpack.c.b16 %v1606, %v1604
    %v2097 = vpack.c.b16 %v1609, %v1607
    %v2098 = vpack.c.b16 %v1610, %v1608
    %v2099 = vpack.c.b16 %v1613, %v1611
    %v2100 = vpack.c.b16 %v1614, %v1612
    %v2101 = vpack.c.b16 %v1617, %v1615
    %v2102 = vpack.c.b16 %v1618, %v1616
    %v2103 = vpack.c.b16 %v1621, %v1619
    %v2104 = vpack.c.b16 %v1622, %v1620
    %v2105 = vpack.c.b16 %v1625, %v1623
    %v2106 = vpack.c.b16 %v1626, %v1624
    %v2107 = vpack.c.b16 %v1629, %v1627
    %v2108 = vpack.c.b16 %v1630, %v1628
    %v2109 = vpack.c.b16 %v1633, %v1631
    %v2110 = vpack.c.b16 %v1634, %v1632
    %v2111 = vpack.c.b16 %v1637, %v1635
    %v2112 = vpack.c.b16 %v1638, %v1636
    %v2113 = vpack.c.b16 %v1641, %v1639
    %v2114 = vpack.c.b16 %v1642, %v1640
    %v2115 = vpack.c.b16 %v1645, %v1643
    %v2116 = vpack.c.b16 %v1646, %v1644
    %v2117 = vpack.c.b16 %v1649, %v1647
    %v2118 = vpack.c.b16 %v1650, %v1648
    %v2119 = vpack.c.b16 %v1653, %v1651
    %v2120 = vpack.c.b16 %v1654, %v1652
    %v2121 = vpack.c.b16 %v1657, %v1655
    %v2122 = vpack.c.b16 %v1658, %v1656
    %v2123 = vpack.c.b16 %v1661, %v1659
    %v2124 = vpack.c.b16 %v1662, %v1660
    %v2125 = vpack.c.b16 %v1665, %v1663
    %v2126 = vpack.c.b16 %v1666, %v1664
    %v2127 = vpack.c.b16 %v1669, %v1667
    %v2128 = vpack.c.b16 %v1670, %v1668
    %v2129 = vpack.c.b16 %v1673, %v1671
    %v2130 = vpack.c.b16 %v1674, %v1672
    %v2131 = vpack.c.b16 %v1677, %v1675
    %v2132 = vpack.c.b16 %v1678, %v1676
    %v2133 = vpack.c.b16 %v1681, %v1679
    %v2134 = vpack.c.b16 %v1682, %v1680
    %v2135 = vpack.c.b16 %v1685, %v1683
    %v2136 = vpack.c.b16 %v1686, %v1684
    %v2137 = vpack.c.b16 %v1689, %v1687
    %v2138 = vpack.c.b16 %v1690, %v1688
    %v2139 = vpack.c.b16 %v1693, %v1691
    %v2140 = vpack.c.b16 %v1694, %v1692
    %v2141 = vpack.c.b16 %v1697, %v1695
    %v2142 = vpack.c.b16 %v1698, %v1696
    %v2143 = vpack.c.b16 %v1701, %v1699
    %v2144 = vpack.c.b16 %v1702, %v1700
    %v2145 = vpack.c.b16 %v1705, %v1703
    %v2146 = vpack.c.b16 %v1706, %v1704
    %v2147 = vpack.c.b16 %v1709, %v1707
    %v2148 = vpack.c.b16 %v1710, %v1708
    %v2149 = vpack.c.b16 %v1713, %v1711
    %v2150 = vpack.c.b16 %v1714, %v1712
    %v2151 = vpack.c.b16 %v1717, %v1715
    %v2152 = vpack.c.b16 %v1718, %v1716
    %v2153 = vpack.c.b16 %v1721, %v1719
    %v2154 = vpack.c.b16 %v1722, %v1720
    %v2155 = vpack.c.b16 %v1725, %v1723
    %v2156 = vpack.c.b16 %v1726, %v1724
    %v2157 = vpack.c.b16 %v1729, %v1727
    %v2158 = vpack.c.b16 %v1730, %v1728
    %v2159 = vpack.c.b16 %v1733, %v1731
    %v2160 = vpack.c.b16 %v1734, %v1732
    %v2161 = vpack.c.b16 %v1737, %v1735
    %v2162 = vpack.c.b16 %v1738, %v1736
    %v2163 = vpack.c.b16 %v1741, %v1739
    %v2164 = vpack.c.b16 %v1742, %v1740
    %v2165 = vpack.c.b16 %v1745, %v1743
    %v2166 = vpack.c.b16 %v1746, %v1744
    %v2167 = vpack.c.b16 %v1749, %v1747
    %v2168 = vpack.c.b16 %v1750, %v1748
    %v2169 = vpack.c.b16 %v1753, %v1751
    %v2170 = vpack.c.b16 %v1754, %v1752
    %2587 = vmatpush.bf16.msra.mxu0 %v1769
    %2588 = vmatpush.bf16.msra.mxu0 %v1767
    %2589 = vmatpush.bf16.msra.mxu0 %v1765
    %2590 = vmatpush.bf16.msra.mxu0 %v1763
    %2591 = vmatpush.bf16.msra.mxu0 %v1761
    %2592 = vmatpush.bf16.msra.mxu0 %v1759
    %2593 = vmatpush.bf16.msra.mxu0 %v1757
    %2594 = vmatpush.bf16.msra.mxu0 %v1755
    %2595 = vmatmul.bf16.gmra.mxu0 %v449
    %v2596 = vpop.f32.mrf.mxu0
    %v2597 = vadd.f32 %v443, %v2596
    %v2598 = vpop.f32.mrf.mxu0
    %2599 = vdwg.mxu0
    %2600 = vmatpush.bf16.msra.mxu0 %v1785
    %2601 = vmatpush.bf16.msra.mxu0 %v1783
    %2602 = vmatpush.bf16.msra.mxu0 %v1781
    %2603 = vmatpush.bf16.msra.mxu0 %v1779
    %2604 = vmatpush.bf16.msra.mxu0 %v1777
    %2605 = vmatpush.bf16.msra.mxu0 %v1775
    %2606 = vmatpush.bf16.msra.mxu0 %v1773
    %2607 = vmatpush.bf16.msra.mxu0 %v1771
    %2608 = vmatmul.bf16.gmra.mxu0 %v450
    %v2609 = vpop.f32.mrf.mxu0
    %v2610 = vadd.f32 %v2597, %v2609
    %v2611 = vpop.f32.mrf.mxu0
    %2612 = vdwg.mxu0
    %2613 = vmatpush.bf16.msra.mxu0 %v1801
    %2614 = vmatpush.bf16.msra.mxu0 %v1799
    %2615 = vmatpush.bf16.msra.mxu0 %v1797
    %2616 = vmatpush.bf16.msra.mxu0 %v1795
    %2617 = vmatpush.bf16.msra.mxu0 %v1793
    %2618 = vmatpush.bf16.msra.mxu0 %v1791
    %2619 = vmatpush.bf16.msra.mxu0 %v1789
    %2620 = vmatpush.bf16.msra.mxu0 %v1787
    %2621 = vmatmul.bf16.gmra.mxu0 %v451
    %v2622 = vpop.f32.mrf.mxu0
    %v2623 = vadd.f32 %v2610, %v2622
    %v2624 = vpop.f32.mrf.mxu0
    %2625 = vdwg.mxu0
    %2626 = vmatpush.bf16.msra.mxu0 %v1817
    %2627 = vmatpush.bf16.msra.mxu0 %v1815
    %2628 = vmatpush.bf16.msra.mxu0 %v1813
    %2629 = vmatpush.bf16.msra.mxu0 %v1811
    %2630 = vmatpush.bf16.msra.mxu0 %v1809
    %2631 = vmatpush.bf16.msra.mxu0 %v1807
    %2632 = vmatpush.bf16.msra.mxu0 %v1805
    %2633 = vmatpush.bf16.msra.mxu0 %v1803
    %2634 = vmatmul.bf16.gmra.mxu0 %v452
    %v2635 = vpop.f32.mrf.mxu0
    %v2636 = vadd.f32 %v2623, %v2635
    %v2637 = vpop.f32.mrf.mxu0
    %2638 = vdwg.mxu0
    %2639 = vmatpush.bf16.msra.mxu0 %v1833
    %2640 = vmatpush.bf16.msra.mxu0 %v1831
    %2641 = vmatpush.bf16.msra.mxu0 %v1829
    %2642 = vmatpush.bf16.msra.mxu0 %v1827
    %2643 = vmatpush.bf16.msra.mxu0 %v1825
    %2644 = vmatpush.bf16.msra.mxu0 %v1823
    %2645 = vmatpush.bf16.msra.mxu0 %v1821
    %2646 = vmatpush.bf16.msra.mxu0 %v1819
    %2647 = vmatmul.bf16.gmra.mxu0 %v453
    %v2648 = vpop.f32.mrf.mxu0
    %v2649 = vadd.f32 %v2636, %v2648
    %v2650 = vpop.f32.mrf.mxu0
    %2651 = vdwg.mxu0
    %2652 = vmatpush.bf16.msra.mxu0 %v1849
    %2653 = vmatpush.bf16.msra.mxu0 %v1847
    %2654 = vmatpush.bf16.msra.mxu0 %v1845
    %2655 = vmatpush.bf16.msra.mxu0 %v1843
    %2656 = vmatpush.bf16.msra.mxu0 %v1841
    %2657 = vmatpush.bf16.msra.mxu0 %v1839
    %2658 = vmatpush.bf16.msra.mxu0 %v1837
    %2659 = vmatpush.bf16.msra.mxu0 %v1835
    %2660 = vmatmul.bf16.gmra.mxu0 %v454
    %v2661 = vpop.f32.mrf.mxu0
    %v2662 = vadd.f32 %v2649, %v2661
    %v2663 = vpop.f32.mrf.mxu0
    %2664 = vdwg.mxu0
    %2665 = vmatpush.bf16.msra.mxu0 %v1865
    %2666 = vmatpush.bf16.msra.mxu0 %v1863
    %2667 = vmatpush.bf16.msra.mxu0 %v1861
    %2668 = vmatpush.bf16.msra.mxu0 %v1859
    %2669 = vmatpush.bf16.msra.mxu0 %v1857
    %2670 = vmatpush.bf16.msra.mxu0 %v1855
    %2671 = vmatpush.bf16.msra.mxu0 %v1853
    %2672 = vmatpush.bf16.msra.mxu0 %v1851
    %2673 = vmatmul.bf16.gmra.mxu0 %v455
    %v2674 = vpop.f32.mrf.mxu0
    %v2675 = vadd.f32 %v2662, %v2674
    %v2676 = vpop.f32.mrf.mxu0
    %2677 = vdwg.mxu0
    %2678 = vmatpush.bf16.msra.mxu0 %v1881
    %2679 = vmatpush.bf16.msra.mxu0 %v1879
    %2680 = vmatpush.bf16.msra.mxu0 %v1877
    %2681 = vmatpush.bf16.msra.mxu0 %v1875
    %2682 = vmatpush.bf16.msra.mxu0 %v1873
    %2683 = vmatpush.bf16.msra.mxu0 %v1871
    %2684 = vmatpush.bf16.msra.mxu0 %v1869
    %2685 = vmatpush.bf16.msra.mxu0 %v1867
    %2686 = vmatmul.bf16.gmra.mxu0 %v456
    %v2687 = vpop.f32.mrf.mxu0
    %v2688 = vadd.f32 %v2675, %v2687
    %v2689 = vpop.f32.mrf.mxu0
    %2690 = vdwg.mxu0
    %2691 = vmatpush.bf16.msra.mxu0 %v1897
    %2692 = vmatpush.bf16.msra.mxu0 %v1895
    %2693 = vmatpush.bf16.msra.mxu0 %v1893
    %2694 = vmatpush.bf16.msra.mxu0 %v1891
    %2695 = vmatpush.bf16.msra.mxu0 %v1889
    %2696 = vmatpush.bf16.msra.mxu0 %v1887
    %2697 = vmatpush.bf16.msra.mxu0 %v1885
    %2698 = vmatpush.bf16.msra.mxu0 %v1883
    %2699 = vmatmul.bf16.gmra.mxu0 %v459
    %v2700 = vpop.f32.mrf.mxu0
    %v2701 = vadd.f32 %v2688, %v2700
    %v2702 = vpop.f32.mrf.mxu0
    %2703 = vdwg.mxu0
    %2704 = vmatpush.bf16.msra.mxu0 %v1913
    %2705 = vmatpush.bf16.msra.mxu0 %v1911
    %2706 = vmatpush.bf16.msra.mxu0 %v1909
    %2707 = vmatpush.bf16.msra.mxu0 %v1907
    %2708 = vmatpush.bf16.msra.mxu0 %v1905
    %2709 = vmatpush.bf16.msra.mxu0 %v1903
    %2710 = vmatpush.bf16.msra.mxu0 %v1901
    %2711 = vmatpush.bf16.msra.mxu0 %v1899
    %2712 = vmatmul.bf16.gmra.mxu0 %v460
    %v2713 = vpop.f32.mrf.mxu0
    %v2714 = vadd.f32 %v2701, %v2713
    %v2715 = vpop.f32.mrf.mxu0
    %2716 = vdwg.mxu0
    %2717 = vmatpush.bf16.msra.mxu0 %v1929
    %2718 = vmatpush.bf16.msra.mxu0 %v1927
    %2719 = vmatpush.bf16.msra.mxu0 %v1925
    %2720 = vmatpush.bf16.msra.mxu0 %v1923
    %2721 = vmatpush.bf16.msra.mxu0 %v1921
    %2722 = vmatpush.bf16.msra.mxu0 %v1919
    %2723 = vmatpush.bf16.msra.mxu0 %v1917
    %2724 = vmatpush.bf16.msra.mxu0 %v1915
    %2725 = vmatmul.bf16.gmra.mxu0 %v461
    %v2726 = vpop.f32.mrf.mxu0
    %v2727 = vadd.f32 %v2714, %v2726
    %v2728 = vpop.f32.mrf.mxu0
    %2729 = vdwg.mxu0
    %2730 = vmatpush.bf16.msra.mxu0 %v1945
    %2731 = vmatpush.bf16.msra.mxu0 %v1943
    %2732 = vmatpush.bf16.msra.mxu0 %v1941
    %2733 = vmatpush.bf16.msra.mxu0 %v1939
    %2734 = vmatpush.bf16.msra.mxu0 %v1937
    %2735 = vmatpush.bf16.msra.mxu0 %v1935
    %2736 = vmatpush.bf16.msra.mxu0 %v1933
    %2737 = vmatpush.bf16.msra.mxu0 %v1931
    %2738 = vmatmul.bf16.gmra.mxu0 %v462
    %v2739 = vpop.f32.mrf.mxu0
    %v2740 = vadd.f32 %v2727, %v2739
    %v2741 = vpop.f32.mrf.mxu0
    %2742 = vdwg.mxu0
    %2743 = vmatpush.bf16.msra.mxu0 %v1961
    %2744 = vmatpush.bf16.msra.mxu0 %v1959
    %2745 = vmatpush.bf16.msra.mxu0 %v1957
    %2746 = vmatpush.bf16.msra.mxu0 %v1955
    %2747 = vmatpush.bf16.msra.mxu0 %v1953
    %2748 = vmatpush.bf16.msra.mxu0 %v1951
    %2749 = vmatpush.bf16.msra.mxu0 %v1949
    %2750 = vmatpush.bf16.msra.mxu0 %v1947
    %2751 = vmatmul.bf16.gmra.mxu0 %v463
    %v2752 = vpop.f32.mrf.mxu0
    %v2753 = vadd.f32 %v2740, %v2752
    %v2754 = vpop.f32.mrf.mxu0
    %2755 = vdwg.mxu0
    %2756 = vmatpush.bf16.msra.mxu0 %v1977
    %2757 = vmatpush.bf16.msra.mxu0 %v1975
    %2758 = vmatpush.bf16.msra.mxu0 %v1973
    %2759 = vmatpush.bf16.msra.mxu0 %v1971
    %2760 = vmatpush.bf16.msra.mxu0 %v1969
    %2761 = vmatpush.bf16.msra.mxu0 %v1967
    %2762 = vmatpush.bf16.msra.mxu0 %v1965
    %2763 = vmatpush.bf16.msra.mxu0 %v1963
    %2764 = vmatmul.bf16.gmra.mxu0 %v464
    %v2765 = vpop.f32.mrf.mxu0
    %v2766 = vadd.f32 %v2753, %v2765
    %v2767 = vpop.f32.mrf.mxu0
    %2768 = vdwg.mxu0
    %2769 = vmatpush.bf16.msra.mxu0 %v1993
    %2770 = vmatpush.bf16.msra.mxu0 %v1991
    %2771 = vmatpush.bf16.msra.mxu0 %v1989
    %2772 = vmatpush.bf16.msra.mxu0 %v1987
    %2773 = vmatpush.bf16.msra.mxu0 %v1985
    %2774 = vmatpush.bf16.msra.mxu0 %v1983
    %2775 = vmatpush.bf16.msra.mxu0 %v1981
    %2776 = vmatpush.bf16.msra.mxu0 %v1979
    %2777 = vmatmul.bf16.gmra.mxu0 %v465
    %v2778 = vpop.f32.mrf.mxu0
    %v2779 = vadd.f32 %v2766, %v2778
    %v2780 = vpop.f32.mrf.mxu0
    %2781 = vdwg.mxu0
    %2782 = vmatpush.bf16.msra.mxu0 %v2009
    %2783 = vmatpush.bf16.msra.mxu0 %v2007
    %2784 = vmatpush.bf16.msra.mxu0 %v2005
    %2785 = vmatpush.bf16.msra.mxu0 %v2003
    %2786 = vmatpush.bf16.msra.mxu0 %v2001
    %2787 = vmatpush.bf16.msra.mxu0 %v1999
    %2788 = vmatpush.bf16.msra.mxu0 %v1997
    %2789 = vmatpush.bf16.msra.mxu0 %v1995
    %2790 = vmatmul.bf16.gmra.mxu0 %v466
    %v2791 = vpop.f32.mrf.mxu0
    %v2792 = vadd.f32 %v2779, %v2791
    %v2793 = vpop.f32.mrf.mxu0
    %2794 = vdwg.mxu0
    %2795 = vmatpush.bf16.msra.mxu0 %v2025
    %2796 = vmatpush.bf16.msra.mxu0 %v2023
    %2797 = vmatpush.bf16.msra.mxu0 %v2021
    %2798 = vmatpush.bf16.msra.mxu0 %v2019
    %2799 = vmatpush.bf16.msra.mxu0 %v2017
    %2800 = vmatpush.bf16.msra.mxu0 %v2015
    %2801 = vmatpush.bf16.msra.mxu0 %v2013
    %2802 = vmatpush.bf16.msra.mxu0 %v2011
    %2803 = vmatmul.bf16.gmra.mxu0 %v469
    %v2804 = vpop.f32.mrf.mxu0
    %v2805 = vadd.f32 %v2792, %v2804
    %v2806 = vpop.f32.mrf.mxu0
    %2807 = vdwg.mxu0
    %2808 = vmatpush.bf16.msra.mxu0 %v2041
    %2809 = vmatpush.bf16.msra.mxu0 %v2039
    %2810 = vmatpush.bf16.msra.mxu0 %v2037
    %2811 = vmatpush.bf16.msra.mxu0 %v2035
    %2812 = vmatpush.bf16.msra.mxu0 %v2033
    %2813 = vmatpush.bf16.msra.mxu0 %v2031
    %2814 = vmatpush.bf16.msra.mxu0 %v2029
    %2815 = vmatpush.bf16.msra.mxu0 %v2027
    %2816 = vmatmul.bf16.gmra.mxu0 %v470
    %v2817 = vpop.f32.mrf.mxu0
    %v2818 = vadd.f32 %v2805, %v2817
    %v2819 = vpop.f32.mrf.mxu0
    %2820 = vdwg.mxu0
    %2821 = vmatpush.bf16.msra.mxu0 %v2057
    %2822 = vmatpush.bf16.msra.mxu0 %v2055
    %2823 = vmatpush.bf16.msra.mxu0 %v2053
    %2824 = vmatpush.bf16.msra.mxu0 %v2051
    %2825 = vmatpush.bf16.msra.mxu0 %v2049
    %2826 = vmatpush.bf16.msra.mxu0 %v2047
    %2827 = vmatpush.bf16.msra.mxu0 %v2045
    %2828 = vmatpush.bf16.msra.mxu0 %v2043
    %2829 = vmatmul.bf16.gmra.mxu0 %v471
    %v2830 = vpop.f32.mrf.mxu0
    %v2831 = vadd.f32 %v2818, %v2830
    %v2832 = vpop.f32.mrf.mxu0
    %2833 = vdwg.mxu0
    %2834 = vmatpush.bf16.msra.mxu0 %v2073
    %2835 = vmatpush.bf16.msra.mxu0 %v2071
    %2836 = vmatpush.bf16.msra.mxu0 %v2069
    %2837 = vmatpush.bf16.msra.mxu0 %v2067
    %2838 = vmatpush.bf16.msra.mxu0 %v2065
    %2839 = vmatpush.bf16.msra.mxu0 %v2063
    %2840 = vmatpush.bf16.msra.mxu0 %v2061
    %2841 = vmatpush.bf16.msra.mxu0 %v2059
    %2842 = vmatmul.bf16.gmra.mxu0 %v472
    %v2843 = vpop.f32.mrf.mxu0
    %v2844 = vadd.f32 %v2831, %v2843
    %v2845 = vpop.f32.mrf.mxu0
    %2846 = vdwg.mxu0
    %2847 = vmatpush.bf16.msra.mxu0 %v2089
    %2848 = vmatpush.bf16.msra.mxu0 %v2087
    %2849 = vmatpush.bf16.msra.mxu0 %v2085
    %2850 = vmatpush.bf16.msra.mxu0 %v2083
    %2851 = vmatpush.bf16.msra.mxu0 %v2081
    %2852 = vmatpush.bf16.msra.mxu0 %v2079
    %2853 = vmatpush.bf16.msra.mxu0 %v2077
    %2854 = vmatpush.bf16.msra.mxu0 %v2075
    %2855 = vmatmul.bf16.gmra.mxu0 %v473
    %v2856 = vpop.f32.mrf.mxu0
    %v2857 = vadd.f32 %v2844, %v2856
    %v2858 = vpop.f32.mrf.mxu0
    %2859 = vdwg.mxu0
    %2860 = vmatpush.bf16.msra.mxu0 %v2105
    %2861 = vmatpush.bf16.msra.mxu0 %v2103
    %2862 = vmatpush.bf16.msra.mxu0 %v2101
    %2863 = vmatpush.bf16.msra.mxu0 %v2099
    %2864 = vmatpush.bf16.msra.mxu0 %v2097
    %2865 = vmatpush.bf16.msra.mxu0 %v2095
    %2866 = vmatpush.bf16.msra.mxu0 %v2093
    %2867 = vmatpush.bf16.msra.mxu0 %v2091
    %2868 = vmatmul.bf16.gmra.mxu0 %v474
    %v2869 = vpop.f32.mrf.mxu0
    %v2870 = vadd.f32 %v2857, %v2869
    %v2871 = vpop.f32.mrf.mxu0
    %2872 = vdwg.mxu0
    %2873 = vmatpush.bf16.msra.mxu0 %v2121
    %2874 = vmatpush.bf16.msra.mxu0 %v2119
    %2875 = vmatpush.bf16.msra.mxu0 %v2117
    %2876 = vmatpush.bf16.msra.mxu0 %v2115
    %2877 = vmatpush.bf16.msra.mxu0 %v2113
    %2878 = vmatpush.bf16.msra.mxu0 %v2111
    %2879 = vmatpush.bf16.msra.mxu0 %v2109
    %2880 = vmatpush.bf16.msra.mxu0 %v2107
    %2881 = vmatmul.bf16.gmra.mxu0 %v475
    %v2882 = vpop.f32.mrf.mxu0
    %v2883 = vadd.f32 %v2870, %v2882
    %v2884 = vpop.f32.mrf.mxu0
    %2885 = vdwg.mxu0
    %2886 = vmatpush.bf16.msra.mxu0 %v2137
    %2887 = vmatpush.bf16.msra.mxu0 %v2135
    %2888 = vmatpush.bf16.msra.mxu0 %v2133
    %2889 = vmatpush.bf16.msra.mxu0 %v2131
    %2890 = vmatpush.bf16.msra.mxu0 %v2129
    %2891 = vmatpush.bf16.msra.mxu0 %v2127
    %2892 = vmatpush.bf16.msra.mxu0 %v2125
    %2893 = vmatpush.bf16.msra.mxu0 %v2123
    %2894 = vmatmul.bf16.gmra.mxu0 %v476
    %v2895 = vpop.f32.mrf.mxu0
    %v2896 = vadd.f32 %v2883, %v2895
    %v2897 = vpop.f32.mrf.mxu0
    %2898 = vdwg.mxu0
    %2899 = vmatpush.bf16.msra.mxu0 %v2153
    %2900 = vmatpush.bf16.msra.mxu0 %v2151
    %2901 = vmatpush.bf16.msra.mxu0 %v2149
    %2902 = vmatpush.bf16.msra.mxu0 %v2147
    %2903 = vmatpush.bf16.msra.mxu0 %v2145
    %2904 = vmatpush.bf16.msra.mxu0 %v2143
    %2905 = vmatpush.bf16.msra.mxu0 %v2141
    %2906 = vmatpush.bf16.msra.mxu0 %v2139
    %2907 = vmatmul.bf16.gmra.mxu0 %v479
    %v2908 = vpop.f32.mrf.mxu0
    %v2909 = vadd.f32 %v2896, %v2908
    %v2910 = vpop.f32.mrf.mxu0
    %2911 = vdwg.mxu0
    %2912 = vmatpush.bf16.msra.mxu0 %v2169
    %2913 = vmatpush.bf16.msra.mxu0 %v2167
    %2914 = vmatpush.bf16.msra.mxu0 %v2165
    %2915 = vmatpush.bf16.msra.mxu0 %v2163
    %2916 = vmatpush.bf16.msra.mxu0 %v2161
    %2917 = vmatpush.bf16.msra.mxu0 %v2159
    %2918 = vmatpush.bf16.msra.mxu0 %v2157
    %2919 = vmatpush.bf16.msra.mxu0 %v2155
    %2920 = vmatmul.bf16.gmra.mxu0 %v480
    %v2921 = vpop.f32.mrf.mxu0
    %v2922 = vadd.f32 %v2909, %v2921
    %v2923 = vpop.f32.mrf.mxu0
    %2924 = vdwg.mxu0
    %2925 = vmatpush.bf16.msra.mxu0 %v1770
    %2926 = vmatpush.bf16.msra.mxu0 %v1768
    %2927 = vmatpush.bf16.msra.mxu0 %v1766
    %2928 = vmatpush.bf16.msra.mxu0 %v1764
    %2929 = vmatpush.bf16.msra.mxu0 %v1762
    %2930 = vmatpush.bf16.msra.mxu0 %v1760
    %2931 = vmatpush.bf16.msra.mxu0 %v1758
    %2932 = vmatpush.bf16.msra.mxu0 %v1756
    %2933 = vmatmul.bf16.gmra.mxu0 %v449
    %v2934 = vpop.f32.mrf.mxu0
    %v2935 = vadd.f32 %v444, %v2934
    %v2936 = vpop.f32.mrf.mxu0
    %2937 = vdwg.mxu0
    %2938 = vmatpush.bf16.msra.mxu0 %v1786
    %2939 = vmatpush.bf16.msra.mxu0 %v1784
    %2940 = vmatpush.bf16.msra.mxu0 %v1782
    %2941 = vmatpush.bf16.msra.mxu0 %v1780
    %2942 = vmatpush.bf16.msra.mxu0 %v1778
    %2943 = vmatpush.bf16.msra.mxu0 %v1776
    %2944 = vmatpush.bf16.msra.mxu0 %v1774
    %2945 = vmatpush.bf16.msra.mxu0 %v1772
    %2946 = vmatmul.bf16.gmra.mxu0 %v450
    %v2947 = vpop.f32.mrf.mxu0
    %v2948 = vadd.f32 %v2935, %v2947
    %v2949 = vpop.f32.mrf.mxu0
    %2950 = vdwg.mxu0
    %2951 = vmatpush.bf16.msra.mxu0 %v1802
    %2952 = vmatpush.bf16.msra.mxu0 %v1800
    %2953 = vmatpush.bf16.msra.mxu0 %v1798
    %2954 = vmatpush.bf16.msra.mxu0 %v1796
    %2955 = vmatpush.bf16.msra.mxu0 %v1794
    %2956 = vmatpush.bf16.msra.mxu0 %v1792
    %2957 = vmatpush.bf16.msra.mxu0 %v1790
    %2958 = vmatpush.bf16.msra.mxu0 %v1788
    %2959 = vmatmul.bf16.gmra.mxu0 %v451
    %v2960 = vpop.f32.mrf.mxu0
    %v2961 = vadd.f32 %v2948, %v2960
    %v2962 = vpop.f32.mrf.mxu0
    %2963 = vdwg.mxu0
    %2964 = vmatpush.bf16.msra.mxu0 %v1818
    %2965 = vmatpush.bf16.msra.mxu0 %v1816
    %2966 = vmatpush.bf16.msra.mxu0 %v1814
    %2967 = vmatpush.bf16.msra.mxu0 %v1812
    %2968 = vmatpush.bf16.msra.mxu0 %v1810
    %2969 = vmatpush.bf16.msra.mxu0 %v1808
    %2970 = vmatpush.bf16.msra.mxu0 %v1806
    %2971 = vmatpush.bf16.msra.mxu0 %v1804
    %2972 = vmatmul.bf16.gmra.mxu0 %v452
    %v2973 = vpop.f32.mrf.mxu0
    %v2974 = vadd.f32 %v2961, %v2973
    %v2975 = vpop.f32.mrf.mxu0
    %2976 = vdwg.mxu0
    %2977 = vmatpush.bf16.msra.mxu0 %v1834
    %2978 = vmatpush.bf16.msra.mxu0 %v1832
    %2979 = vmatpush.bf16.msra.mxu0 %v1830
    %2980 = vmatpush.bf16.msra.mxu0 %v1828
    %2981 = vmatpush.bf16.msra.mxu0 %v1826
    %2982 = vmatpush.bf16.msra.mxu0 %v1824
    %2983 = vmatpush.bf16.msra.mxu0 %v1822
    %2984 = vmatpush.bf16.msra.mxu0 %v1820
    %2985 = vmatmul.bf16.gmra.mxu0 %v453
    %v2986 = vpop.f32.mrf.mxu0
    %v2987 = vadd.f32 %v2974, %v2986
    %v2988 = vpop.f32.mrf.mxu0
    %2989 = vdwg.mxu0
    %2990 = vmatpush.bf16.msra.mxu0 %v1850
    %2991 = vmatpush.bf16.msra.mxu0 %v1848
    %2992 = vmatpush.bf16.msra.mxu0 %v1846
    %2993 = vmatpush.bf16.msra.mxu0 %v1844
    %2994 = vmatpush.bf16.msra.mxu0 %v1842
    %2995 = vmatpush.bf16.msra.mxu0 %v1840
    %2996 = vmatpush.bf16.msra.mxu0 %v1838
    %2997 = vmatpush.bf16.msra.mxu0 %v1836
    %2998 = vmatmul.bf16.gmra.mxu0 %v454
    %v2999 = vpop.f32.mrf.mxu0
    %v3000 = vadd.f32 %v2987, %v2999
    %v3001 = vpop.f32.mrf.mxu0
    %3002 = vdwg.mxu0
    %3003 = vmatpush.bf16.msra.mxu0 %v1866
    %3004 = vmatpush.bf16.msra.mxu0 %v1864
    %3005 = vmatpush.bf16.msra.mxu0 %v1862
    %3006 = vmatpush.bf16.msra.mxu0 %v1860
    %3007 = vmatpush.bf16.msra.mxu0 %v1858
    %3008 = vmatpush.bf16.msra.mxu0 %v1856
    %3009 = vmatpush.bf16.msra.mxu0 %v1854
    %3010 = vmatpush.bf16.msra.mxu0 %v1852
    %3011 = vmatmul.bf16.gmra.mxu0 %v455
    %v3012 = vpop.f32.mrf.mxu0
    %v3013 = vadd.f32 %v3000, %v3012
    %v3014 = vpop.f32.mrf.mxu0
    %3015 = vdwg.mxu0
    %3016 = vmatpush.bf16.msra.mxu0 %v1882
    %3017 = vmatpush.bf16.msra.mxu0 %v1880
    %3018 = vmatpush.bf16.msra.mxu0 %v1878
    %3019 = vmatpush.bf16.msra.mxu0 %v1876
    %3020 = vmatpush.bf16.msra.mxu0 %v1874
    %3021 = vmatpush.bf16.msra.mxu0 %v1872
    %3022 = vmatpush.bf16.msra.mxu0 %v1870
    %3023 = vmatpush.bf16.msra.mxu0 %v1868
    %3024 = vmatmul.bf16.gmra.mxu0 %v456
    %v3025 = vpop.f32.mrf.mxu0
    %v3026 = vadd.f32 %v3013, %v3025
    %v3027 = vpop.f32.mrf.mxu0
    %3028 = vdwg.mxu0
    %3029 = vmatpush.bf16.msra.mxu0 %v1898
    %3030 = vmatpush.bf16.msra.mxu0 %v1896
    %3031 = vmatpush.bf16.msra.mxu0 %v1894
    %3032 = vmatpush.bf16.msra.mxu0 %v1892
    %3033 = vmatpush.bf16.msra.mxu0 %v1890
    %3034 = vmatpush.bf16.msra.mxu0 %v1888
    %3035 = vmatpush.bf16.msra.mxu0 %v1886
    %3036 = vmatpush.bf16.msra.mxu0 %v1884
    %3037 = vmatmul.bf16.gmra.mxu0 %v459
    %v3038 = vpop.f32.mrf.mxu0
    %v3039 = vadd.f32 %v3026, %v3038
    %v3040 = vpop.f32.mrf.mxu0
    %3041 = vdwg.mxu0
    %3042 = vmatpush.bf16.msra.mxu0 %v1914
    %3043 = vmatpush.bf16.msra.mxu0 %v1912
    %3044 = vmatpush.bf16.msra.mxu0 %v1910
    %3045 = vmatpush.bf16.msra.mxu0 %v1908
    %3046 = vmatpush.bf16.msra.mxu0 %v1906
    %3047 = vmatpush.bf16.msra.mxu0 %v1904
    %3048 = vmatpush.bf16.msra.mxu0 %v1902
    %3049 = vmatpush.bf16.msra.mxu0 %v1900
    %3050 = vmatmul.bf16.gmra.mxu0 %v460
    %v3051 = vpop.f32.mrf.mxu0
    %v3052 = vadd.f32 %v3039, %v3051
    %v3053 = vpop.f32.mrf.mxu0
    %3054 = vdwg.mxu0
    %3055 = vmatpush.bf16.msra.mxu0 %v1930
    %3056 = vmatpush.bf16.msra.mxu0 %v1928
    %3057 = vmatpush.bf16.msra.mxu0 %v1926
    %3058 = vmatpush.bf16.msra.mxu0 %v1924
    %3059 = vmatpush.bf16.msra.mxu0 %v1922
    %3060 = vmatpush.bf16.msra.mxu0 %v1920
    %3061 = vmatpush.bf16.msra.mxu0 %v1918
    %3062 = vmatpush.bf16.msra.mxu0 %v1916
    %3063 = vmatmul.bf16.gmra.mxu0 %v461
    %v3064 = vpop.f32.mrf.mxu0
    %v3065 = vadd.f32 %v3052, %v3064
    %v3066 = vpop.f32.mrf.mxu0
    %3067 = vdwg.mxu0
    %3068 = vmatpush.bf16.msra.mxu0 %v1946
    %3069 = vmatpush.bf16.msra.mxu0 %v1944
    %3070 = vmatpush.bf16.msra.mxu0 %v1942
    %3071 = vmatpush.bf16.msra.mxu0 %v1940
    %3072 = vmatpush.bf16.msra.mxu0 %v1938
    %3073 = vmatpush.bf16.msra.mxu0 %v1936
    %3074 = vmatpush.bf16.msra.mxu0 %v1934
    %3075 = vmatpush.bf16.msra.mxu0 %v1932
    %3076 = vmatmul.bf16.gmra.mxu0 %v462
    %v3077 = vpop.f32.mrf.mxu0
    %v3078 = vadd.f32 %v3065, %v3077
    %v3079 = vpop.f32.mrf.mxu0
    %3080 = vdwg.mxu0
    %3081 = vmatpush.bf16.msra.mxu0 %v1962
    %3082 = vmatpush.bf16.msra.mxu0 %v1960
    %3083 = vmatpush.bf16.msra.mxu0 %v1958
    %3084 = vmatpush.bf16.msra.mxu0 %v1956
    %3085 = vmatpush.bf16.msra.mxu0 %v1954
    %3086 = vmatpush.bf16.msra.mxu0 %v1952
    %3087 = vmatpush.bf16.msra.mxu0 %v1950
    %3088 = vmatpush.bf16.msra.mxu0 %v1948
    %3089 = vmatmul.bf16.gmra.mxu0 %v463
    %v3090 = vpop.f32.mrf.mxu0
    %v3091 = vadd.f32 %v3078, %v3090
    %v3092 = vpop.f32.mrf.mxu0
    %3093 = vdwg.mxu0
    %3094 = vmatpush.bf16.msra.mxu0 %v1978
    %3095 = vmatpush.bf16.msra.mxu0 %v1976
    %3096 = vmatpush.bf16.msra.mxu0 %v1974
    %3097 = vmatpush.bf16.msra.mxu0 %v1972
    %3098 = vmatpush.bf16.msra.mxu0 %v1970
    %3099 = vmatpush.bf16.msra.mxu0 %v1968
    %3100 = vmatpush.bf16.msra.mxu0 %v1966
    %3101 = vmatpush.bf16.msra.mxu0 %v1964
    %3102 = vmatmul.bf16.gmra.mxu0 %v464
    %v3103 = vpop.f32.mrf.mxu0
    %v3104 = vadd.f32 %v3091, %v3103
    %v3105 = vpop.f32.mrf.mxu0
    %3106 = vdwg.mxu0
    %3107 = vmatpush.bf16.msra.mxu0 %v1994
    %3108 = vmatpush.bf16.msra.mxu0 %v1992
    %3109 = vmatpush.bf16.msra.mxu0 %v1990
    %3110 = vmatpush.bf16.msra.mxu0 %v1988
    %3111 = vmatpush.bf16.msra.mxu0 %v1986
    %3112 = vmatpush.bf16.msra.mxu0 %v1984
    %3113 = vmatpush.bf16.msra.mxu0 %v1982
    %3114 = vmatpush.bf16.msra.mxu0 %v1980
    %3115 = vmatmul.bf16.gmra.mxu0 %v465
    %v3116 = vpop.f32.mrf.mxu0
    %v3117 = vadd.f32 %v3104, %v3116
    %v3118 = vpop.f32.mrf.mxu0
    %3119 = vdwg.mxu0
    %3120 = vmatpush.bf16.msra.mxu0 %v2010
    %3121 = vmatpush.bf16.msra.mxu0 %v2008
    %3122 = vmatpush.bf16.msra.mxu0 %v2006
    %3123 = vmatpush.bf16.msra.mxu0 %v2004
    %3124 = vmatpush.bf16.msra.mxu0 %v2002
    %3125 = vmatpush.bf16.msra.mxu0 %v2000
    %3126 = vmatpush.bf16.msra.mxu0 %v1998
    %3127 = vmatpush.bf16.msra.mxu0 %v1996
    %3128 = vmatmul.bf16.gmra.mxu0 %v466
    %v3129 = vpop.f32.mrf.mxu0
    %v3130 = vadd.f32 %v3117, %v3129
    %v3131 = vpop.f32.mrf.mxu0
    %3132 = vdwg.mxu0
    %3133 = vmatpush.bf16.msra.mxu0 %v2026
    %3134 = vmatpush.bf16.msra.mxu0 %v2024
    %3135 = vmatpush.bf16.msra.mxu0 %v2022
    %3136 = vmatpush.bf16.msra.mxu0 %v2020
    %3137 = vmatpush.bf16.msra.mxu0 %v2018
    %3138 = vmatpush.bf16.msra.mxu0 %v2016
    %3139 = vmatpush.bf16.msra.mxu0 %v2014
    %3140 = vmatpush.bf16.msra.mxu0 %v2012
    %3141 = vmatmul.bf16.gmra.mxu0 %v469
    %v3142 = vpop.f32.mrf.mxu0
    %v3143 = vadd.f32 %v3130, %v3142
    %v3144 = vpop.f32.mrf.mxu0
    %3145 = vdwg.mxu0
    %3146 = vmatpush.bf16.msra.mxu0 %v2042
    %3147 = vmatpush.bf16.msra.mxu0 %v2040
    %3148 = vmatpush.bf16.msra.mxu0 %v2038
    %3149 = vmatpush.bf16.msra.mxu0 %v2036
    %3150 = vmatpush.bf16.msra.mxu0 %v2034
    %3151 = vmatpush.bf16.msra.mxu0 %v2032
    %3152 = vmatpush.bf16.msra.mxu0 %v2030
    %3153 = vmatpush.bf16.msra.mxu0 %v2028
    %3154 = vmatmul.bf16.gmra.mxu0 %v470
    %v3155 = vpop.f32.mrf.mxu0
    %v3156 = vadd.f32 %v3143, %v3155
    %v3157 = vpop.f32.mrf.mxu0
    %3158 = vdwg.mxu0
    %3159 = vmatpush.bf16.msra.mxu0 %v2058
    %3160 = vmatpush.bf16.msra.mxu0 %v2056
    %3161 = vmatpush.bf16.msra.mxu0 %v2054
    %3162 = vmatpush.bf16.msra.mxu0 %v2052
    %3163 = vmatpush.bf16.msra.mxu0 %v2050
    %3164 = vmatpush.bf16.msra.mxu0 %v2048
    %3165 = vmatpush.bf16.msra.mxu0 %v2046
    %3166 = vmatpush.bf16.msra.mxu0 %v2044
    %3167 = vmatmul.bf16.gmra.mxu0 %v471
    %v3168 = vpop.f32.mrf.mxu0
    %v3169 = vadd.f32 %v3156, %v3168
    %v3170 = vpop.f32.mrf.mxu0
    %3171 = vdwg.mxu0
    %3172 = vmatpush.bf16.msra.mxu0 %v2074
    %3173 = vmatpush.bf16.msra.mxu0 %v2072
    %3174 = vmatpush.bf16.msra.mxu0 %v2070
    %3175 = vmatpush.bf16.msra.mxu0 %v2068
    %3176 = vmatpush.bf16.msra.mxu0 %v2066
    %3177 = vmatpush.bf16.msra.mxu0 %v2064
    %3178 = vmatpush.bf16.msra.mxu0 %v2062
    %3179 = vmatpush.bf16.msra.mxu0 %v2060
    %3180 = vmatmul.bf16.gmra.mxu0 %v472
    %v3181 = vpop.f32.mrf.mxu0
    %v3182 = vadd.f32 %v3169, %v3181
    %v3183 = vpop.f32.mrf.mxu0
    %3184 = vdwg.mxu0
    %3185 = vmatpush.bf16.msra.mxu0 %v2090
    %3186 = vmatpush.bf16.msra.mxu0 %v2088
    %3187 = vmatpush.bf16.msra.mxu0 %v2086
    %3188 = vmatpush.bf16.msra.mxu0 %v2084
    %3189 = vmatpush.bf16.msra.mxu0 %v2082
    %3190 = vmatpush.bf16.msra.mxu0 %v2080
    %3191 = vmatpush.bf16.msra.mxu0 %v2078
    %3192 = vmatpush.bf16.msra.mxu0 %v2076
    %3193 = vmatmul.bf16.gmra.mxu0 %v473
    %v3194 = vpop.f32.mrf.mxu0
    %v3195 = vadd.f32 %v3182, %v3194
    %v3196 = vpop.f32.mrf.mxu0
    %3197 = vdwg.mxu0
    %3198 = vmatpush.bf16.msra.mxu0 %v2106
    %3199 = vmatpush.bf16.msra.mxu0 %v2104
    %3200 = vmatpush.bf16.msra.mxu0 %v2102
    %3201 = vmatpush.bf16.msra.mxu0 %v2100
    %3202 = vmatpush.bf16.msra.mxu0 %v2098
    %3203 = vmatpush.bf16.msra.mxu0 %v2096
    %3204 = vmatpush.bf16.msra.mxu0 %v2094
    %3205 = vmatpush.bf16.msra.mxu0 %v2092
    %3206 = vmatmul.bf16.gmra.mxu0 %v474
    %v3207 = vpop.f32.mrf.mxu0
    %v3208 = vadd.f32 %v3195, %v3207
    %v3209 = vpop.f32.mrf.mxu0
    %3210 = vdwg.mxu0
    %3211 = vmatpush.bf16.msra.mxu0 %v2122
    %3212 = vmatpush.bf16.msra.mxu0 %v2120
    %3213 = vmatpush.bf16.msra.mxu0 %v2118
    %3214 = vmatpush.bf16.msra.mxu0 %v2116
    %3215 = vmatpush.bf16.msra.mxu0 %v2114
    %3216 = vmatpush.bf16.msra.mxu0 %v2112
    %3217 = vmatpush.bf16.msra.mxu0 %v2110
    %3218 = vmatpush.bf16.msra.mxu0 %v2108
    %3219 = vmatmul.bf16.gmra.mxu0 %v475
    %v3220 = vpop.f32.mrf.mxu0
    %v3221 = vadd.f32 %v3208, %v3220
    %v3222 = vpop.f32.mrf.mxu0
    %3223 = vdwg.mxu0
    %3224 = vmatpush.bf16.msra.mxu0 %v2138
    %3225 = vmatpush.bf16.msra.mxu0 %v2136
    %3226 = vmatpush.bf16.msra.mxu0 %v2134
    %3227 = vmatpush.bf16.msra.mxu0 %v2132
    %3228 = vmatpush.bf16.msra.mxu0 %v2130
    %3229 = vmatpush.bf16.msra.mxu0 %v2128
    %3230 = vmatpush.bf16.msra.mxu0 %v2126
    %3231 = vmatpush.bf16.msra.mxu0 %v2124
    %3232 = vmatmul.bf16.gmra.mxu0 %v476
    %v3233 = vpop.f32.mrf.mxu0
    %v3234 = vadd.f32 %v3221, %v3233
    %v3235 = vpop.f32.mrf.mxu0
    %3236 = vdwg.mxu0
    %3237 = vmatpush.bf16.msra.mxu0 %v2154
    %3238 = vmatpush.bf16.msra.mxu0 %v2152
    %3239 = vmatpush.bf16.msra.mxu0 %v2150
    %3240 = vmatpush.bf16.msra.mxu0 %v2148
    %3241 = vmatpush.bf16.msra.mxu0 %v2146
    %3242 = vmatpush.bf16.msra.mxu0 %v2144
    %3243 = vmatpush.bf16.msra.mxu0 %v2142
    %3244 = vmatpush.bf16.msra.mxu0 %v2140
    %3245 = vmatmul.bf16.gmra.mxu0 %v479
    %v3246 = vpop.f32.mrf.mxu0
    %v3247 = vadd.f32 %v3234, %v3246
    %v3248 = vpop.f32.mrf.mxu0
    %3249 = vdwg.mxu0
    %3250 = vmatpush.bf16.msra.mxu0 %v2170
    %3251 = vmatpush.bf16.msra.mxu0 %v2168
    %3252 = vmatpush.bf16.msra.mxu0 %v2166
    %3253 = vmatpush.bf16.msra.mxu0 %v2164
    %3254 = vmatpush.bf16.msra.mxu0 %v2162
    %3255 = vmatpush.bf16.msra.mxu0 %v2160
    %3256 = vmatpush.bf16.msra.mxu0 %v2158
    %3257 = vmatpush.bf16.msra.mxu0 %v2156
    %3258 = vmatmul.bf16.gmra.mxu0 %v480
    %v3259 = vpop.f32.mrf.mxu0
    %v3260 = vadd.f32 %v3247, %v3259
    %v3261 = vpop.f32.mrf.mxu0
    %3262 = vdwg.mxu0
    %v3263 = vmax.f32 %v2922, 0.0
    %v3264 = vmax.f32 %v3260, 0.0
    %v3265 = vpack.c.bf16 %v3263, %v3263
    %v3266 = vpack.c.bf16 %v3264, %v3264
    %v3267 = vld [vmem:[%s3] sm:$0xf]
    %v3268 = vld [vmem:[%s3 + $0x4] sm:$0xf]
    %v3269 = vld [vmem:[%s3 + $0x8] sm:$0xf]
    %v3270 = vld [vmem:[%s3 + $0xc] sm:$0xf]
    %v3271 = vld [vmem:[%s3 + $0x10] sm:$0xf]
    %v3272 = vld [vmem:[%s3 + $0x14] sm:$0xf]
    %v3273 = vld [vmem:[%s3 + $0x18] sm:$0xf]
    %v3274 = vld [vmem:[%s3 + $0x1c] sm:$0xf]
    %v3275 = vld [vmem:[%s3 + $0x20] sm:$0xf]
    %v3276 = vld [vmem:[%s3 + $0x24] sm:$0xf]
    %v3277 = vld [vmem:[%s3 + $0x28] sm:$0xf]
    %v3278 = vld [vmem:[%s3 + $0x2c] sm:$0xf]
    %v3279 = vld [vmem:[%s3 + $0x30] sm:$0xf]
    %v3280 = vld [vmem:[%s3 + $0x34] sm:$0xf]
    %v3281 = vld [vmem:[%s3 + $0x38] sm:$0xf]
    %v3282 = vld [vmem:[%s3 + $0x3c] sm:$0xf]
    %v3283 = vld [vmem:[%s3 + $0x40] sm:$0xf]
    %v3284 = vld [vmem:[%s3 + $0x44] sm:$0xf]
    %v3285 = vld [vmem:[%s3 + $0x48] sm:$0xf]
    %v3286 = vld [vmem:[%s3 + $0x4c] sm:$0xf]
    %v3287 = vld [vmem:[%s3 + $0x50] sm:$0xf]
    %v3288 = vld [vmem:[%s3 + $0x54] sm:$0xf]
    %v3289 = vld [vmem:[%s3 + $0x58] sm:$0xf]
    %v3290 = vld [vmem:[%s3 + $0x5c] sm:$0xf]
    %v3291 = vld [vmem:[%s3 + $0x60] sm:$0xf]
    %v3292 = vld [vmem:[%s3 + $0x64] sm:$0xf]
    %v3293 = vld [vmem:[%s3 + $0x68] sm:$0xf]
    %v3294 = vld [vmem:[%s3 + $0x6c] sm:$0xf]
    %v3295 = vld [vmem:[%s3 + $0x70] sm:$0xf]
    %v3296 = vld [vmem:[%s3 + $0x74] sm:$0xf]
    %v3297 = vld [vmem:[%s3 + $0x78] sm:$0xf]
    %v3298 = vld [vmem:[%s3 + $0x7c] sm:$0xf]
    %v3299 = vld [vmem:[%s4] sm:$0x1]
    %v3301 = vperm.slane %v3299, 0
    %v3335 = vunpack.c.l.b16 %v3267
    %v3336 = vunpack.c.l.b16 %v3268
    %v3337 = vunpack.c.l.b16 %v3269
    %v3338 = vunpack.c.l.b16 %v3270
    %v3339 = vunpack.c.l.b16 %v3271
    %v3340 = vunpack.c.l.b16 %v3272
    %v3341 = vunpack.c.l.b16 %v3273
    %v3342 = vunpack.c.l.b16 %v3274
    %v3343 = vunpack.c.l.b16 %v3275
    %v3344 = vunpack.c.l.b16 %v3276
    %v3345 = vunpack.c.l.b16 %v3277
    %v3346 = vunpack.c.l.b16 %v3278
    %v3347 = vunpack.c.l.b16 %v3279
    %v3348 = vunpack.c.l.b16 %v3280
    %v3349 = vunpack.c.l.b16 %v3281
    %v3350 = vunpack.c.l.b16 %v3282
    %v3351 = vunpack.c.l.b16 %v3283
    %v3352 = vunpack.c.l.b16 %v3284
    %v3353 = vunpack.c.l.b16 %v3285
    %v3354 = vunpack.c.l.b16 %v3286
    %v3355 = vunpack.c.l.b16 %v3287
    %v3356 = vunpack.c.l.b16 %v3288
    %v3357 = vunpack.c.l.b16 %v3289
    %v3358 = vunpack.c.l.b16 %v3290
    %v3359 = vunpack.c.l.b16 %v3291
    %v3360 = vunpack.c.l.b16 %v3292
    %v3361 = vunpack.c.l.b16 %v3293
    %v3362 = vunpack.c.l.b16 %v3294
    %v3363 = vunpack.c.l.b16 %v3295
    %v3364 = vunpack.c.l.b16 %v3296
    %v3365 = vunpack.c.l.b16 %v3297
    %v3366 = vunpack.c.l.b16 %v3298
    %v3367 = vpack.c.b16 %v3336, %v3335
    %v3368 = vpack.c.b16 %v3338, %v3337
    %v3369 = vpack.c.b16 %v3340, %v3339
    %v3370 = vpack.c.b16 %v3342, %v3341
    %v3371 = vpack.c.b16 %v3344, %v3343
    %v3372 = vpack.c.b16 %v3346, %v3345
    %v3373 = vpack.c.b16 %v3348, %v3347
    %v3374 = vpack.c.b16 %v3350, %v3349
    %v3375 = vpack.c.b16 %v3352, %v3351
    %v3376 = vpack.c.b16 %v3354, %v3353
    %v3377 = vpack.c.b16 %v3356, %v3355
    %v3378 = vpack.c.b16 %v3358, %v3357
    %v3379 = vpack.c.b16 %v3360, %v3359
    %v3380 = vpack.c.b16 %v3362, %v3361
    %v3381 = vpack.c.b16 %v3364, %v3363
    %v3382 = vpack.c.b16 %v3366, %v3365
    %3399 = vmatpush.bf16.msra.mxu0 %v3374
    %3400 = vmatpush.bf16.msra.mxu0 %v3373
    %3401 = vmatpush.bf16.msra.mxu0 %v3372
    %3402 = vmatpush.bf16.msra.mxu0 %v3371
    %3403 = vmatpush.bf16.msra.mxu0 %v3370
    %3404 = vmatpush.bf16.msra.mxu0 %v3369
    %3405 = vmatpush.bf16.msra.mxu0 %v3368
    %3406 = vmatpush.bf16.msra.mxu0 %v3367
    %3407 = vmatmul.bf16.gmra.mxu0 %v3265
    %v3408 = vpop.f32.mrf.mxu0
    %v3409 = vadd.f32 %v3301, %v3408
    %v3410 = vpop.f32.mrf.mxu0
    %3411 = vdwg.mxu0
    %3412 = vmatpush.bf16.msra.mxu0 %v3382
    %3413 = vmatpush.bf16.msra.mxu0 %v3381
    %3414 = vmatpush.bf16.msra.mxu0 %v3380
    %3415 = vmatpush.bf16.msra.mxu0 %v3379
    %3416 = vmatpush.bf16.msra.mxu0 %v3378
    %3417 = vmatpush.bf16.msra.mxu0 %v3377
    %3418 = vmatpush.bf16.msra.mxu0 %v3376
    %3419 = vmatpush.bf16.msra.mxu0 %v3375
    %3420 = vmatmul.bf16.gmra.mxu0 %v3266
    %v3421 = vpop.f32.mrf.mxu0
    %v3422 = vadd.f32 %v3409, %v3421
    %v3423 = vpop.f32.mrf.mxu0
    %3424 = vdwg.mxu0
    %vm3425 = vcmask 41984
    %3426 = vst.msk [vmem:[#allocation2] sm:$0x3] %vm3425, %v3422
    // Predicated region
    $region22: #{dqn_forward.5} parent=1 // pred_check
      _
    $region23: #{dqn_forward.5} parent=1 // pred_check_branch
      %3428 = sbr.rel (0) target = $region25
    $region24: #{dqn_forward.5} parent=1 // pred_region
      %3430 = vsyncadd [#allocation3], 0
      %s3432 = sshll.u32 [#allocation2], 4
      %s3433 = int_to_ptr.vmem [resolvable:$true] %s3432
      %s3434 = sshll.u32 %s5, 4
      %s3435 = int_to_ptr.hbm [resolvable:$true] %s3434
      %3437 = dma.vmem_to_hbm [thread:$0]  %s3433, 32, %s3435, [#allocation3]
    $region25: #{dqn_forward.5} parent=1 // pred_fallthru
      _
    // Predicated region
    $region26: #{dqn_forward.5} parent=1 // pred_check
      _
    $region27: #{dqn_forward.5} parent=1 // pred_check_branch
      %3439 = sbr.rel (0) target = $region29
    $region28: #{dqn_forward.5} parent=1 // pred_region
      %3441 = dma.done [#allocation3], 32
    $region29: #{dqn_forward.5} parent=1 // pred_fallthru
      _
    %3442 = vsyncpa [#allocation3], 1

</llo_original>
